<compile_context>
chip_gen: v5e
topology: v5e:2x2
jax: 0.10.0
libtpu: 0.0.40
codegen_flags: <defaults>
</compile_context>

<pallas_src>
import functools

import jax
import jax.numpy as jnp
from jax.experimental import pallas as pl
from jax.experimental.pallas import tpu as pltpu


def _round_up(n, m):
    return ((n + m - 1) // m) * m


def _aae_kernel(x_ref,
                we1_ref, be1_ref, we2_ref, be2_ref, we3_ref, be3_ref,
                wd1_ref, bd1_ref, wd2_ref, bd2_ref, wd3_ref, bd3_ref,
                recon_ref, latent_ref):
    bf16 = jnp.bfloat16
    f32 = jnp.float32

    x = x_ref[...]                                            # bf16 (tile_b, D_pad)

    # ---------------- Encoder ----------------
    h = jnp.dot(x, we1_ref[...], preferred_element_type=f32) + be1_ref[...]
    h = jnp.maximum(h, 0.0).astype(bf16)                      # ReLU (Dropout = id at eval)
    h = jnp.dot(h, we2_ref[...], preferred_element_type=f32) + be2_ref[...]
    h = jnp.maximum(h, 0.0).astype(bf16)                      # ReLU
    z = jnp.dot(h, we3_ref[...], preferred_element_type=f32) + be3_ref[...]
    latent_ref[...] = z                                       # f32, lane-padded to 128

    # ---------------- Decoder ----------------
    d = jnp.dot(z.astype(bf16), wd1_ref[...], preferred_element_type=f32) + bd1_ref[...]
    d = jnp.tanh(d).astype(bf16)                              # Tanh (EUP slot)
    d = jnp.dot(d, wd2_ref[...], preferred_element_type=f32) + bd2_ref[...]
    d = jnp.maximum(d, 0.0).astype(bf16)                      # ReLU
    r = jnp.dot(d, wd3_ref[...], preferred_element_type=f32) + bd3_ref[...]
    recon_ref[...] = jnp.maximum(r, 0.0)                      # final ReLU, f32


def prepare_params(params):
    """Pad all feature dims to multiples of 128 and cast weights to bf16.

    Called ONCE (outside the hot forward path). Zero padding is exact: padded
    weight rows/cols and biases are 0, and relu(0) = tanh(0) = 0, so padded
    channels stay identically zero through the whole network.

    Returns (weights_tuple, (D, L)) where D/L are the original input/latent dims.
    """
    D, H1 = params["we1"].shape
    H2 = params["we2"].shape[1]
    L = params["we3"].shape[1]

    D_pad = _round_up(D, 128)
    H1_pad = _round_up(H1, 128)
    H2_pad = _round_up(H2, 128)
    L_pad = _round_up(L, 128)

    def pad_w(w, din, dout):  # zero-pad + cast weights to bf16
        return jnp.pad(w, ((0, din - w.shape[0]), (0, dout - w.shape[1]))
                       ).astype(jnp.bfloat16)

    def pad_b(b, dout):       # keep biases in f32 (added to f32 accumulator)
        return jnp.pad(b, ((0, 0), (0, dout - b.shape[1]))).astype(jnp.float32)

    weights = (
        pad_w(params["we1"], D_pad, H1_pad),  pad_b(params["be1"], H1_pad),
        pad_w(params["we2"], H1_pad, H2_pad), pad_b(params["be2"], H2_pad),
        pad_w(params["we3"], H2_pad, L_pad),  pad_b(params["be3"], L_pad),
        pad_w(params["wd1"], L_pad, H2_pad),  pad_b(params["bd1"], H2_pad),
        pad_w(params["wd2"], H2_pad, H1_pad), pad_b(params["bd2"], H1_pad),
        pad_w(params["wd3"], H1_pad, D_pad),  pad_b(params["bd3"], D_pad),
    )
    return weights, (D, L)


@functools.partial(jax.jit, static_argnums=(2, 3))
def _forward_impl(x, weights, D, L):
    B = x.shape[0]
    D_pad = weights[0].shape[0]
    L_pad = weights[4].shape[1]
    H1_pad = weights[0].shape[1]
    H2_pad = weights[2].shape[1]

    # Batch tile: one grid step for small batches (removes ~0.35us/step pipeline
    # overhead; multiple of 16 for bf16 sublane packing). 256 rows for large B
    # to match the 256x256 MXU tile on v6e/v7x.
    tile_b = 256 if B > 256 else _round_up(max(B, 1), 16)
    B_pad = _round_up(B, tile_b)

    x_pad = jnp.pad(x, ((0, B_pad - B), (0, D_pad - D))).astype(jnp.bfloat16)

    # Batch tiled across the grid; weights/biases are full arrays with constant
    # index_maps (resident in VMEM, no re-DMA across grid steps).
    in_specs = [pl.BlockSpec((tile_b, D_pad), lambda i: (i, 0))]
    in_specs += [pl.BlockSpec(w.shape, lambda i: (0, 0)) for w in weights]
    out_specs = [
        pl.BlockSpec((tile_b, D_pad), lambda i: (i, 0)),
        pl.BlockSpec((tile_b, L_pad), lambda i: (i, 0)),
    ]
    out_shape = (
        jax.ShapeDtypeStruct((B_pad, D_pad), jnp.float32),
        jax.ShapeDtypeStruct((B_pad, L_pad), jnp.float32),
    )

    # Advisory cost estimate for XLA's scheduler.
    layer_dims = [(D_pad, H1_pad), (H1_pad, H2_pad), (H2_pad, L_pad),
                  (L_pad, H2_pad), (H2_pad, H1_pad), (H1_pad, D_pad)]
    flops = 2 * B_pad * sum(a * b for a, b in layer_dims)
    weight_bytes = sum(int(w.size) * w.dtype.itemsize for w in weights)
    bytes_accessed = int(weight_bytes
                         + x_pad.size * x_pad.dtype.itemsize
                         + B_pad * D_pad * 4 + B_pad * L_pad * 4)

    # Small batches are weight-bandwidth-bound: keep the grid on one TensorCore
    # ('arbitrary') so the v7x megacore does not duplicate the weight DMA. Large
    # batches are compute-dominated: shard the batch axis ('parallel').
    semantics = ("parallel",) if B_pad > 256 else ("arbitrary",)

    recon, latent = pl.pallas_call(
        _aae_kernel,
        out_shape=out_shape,
        grid_spec=pltpu.PrefetchScalarGridSpec(
            num_scalar_prefetch=0,
            grid=(B_pad // tile_b,),
            in_specs=in_specs,
            out_specs=out_specs,
        ),
        compiler_params=pltpu.CompilerParams(
            dimension_semantics=semantics,
            vmem_limit_bytes=48 << 20,   # <= 64 MiB physical on v7x, plenty here
        ),
        cost_estimate=pl.CostEstimate(
            flops=flops,
            transcendentals=B_pad * H2_pad,   # tanh on the (B, 512) tile
            bytes_accessed=bytes_accessed,
        ),
    )(x_pad, *weights)

    return recon[:B, :D], latent[:B, :L]


def autoencoder_forward(x, prepared):
    """Full autoencoder forward in one fused Pallas kernel.

    x: (B, D) float32. prepared: output of prepare_params(params).
    Returns (reconstructed (B, D) f32, latent (B, latent_dim) f32).
    """
    weights, (D, L) = prepared
    return _forward_impl(x, weights, D, L)


def init_params(key, input_dim, hidden_dims, latent_dim):
    """Deterministic synthetic parameter init (shapes from the module __init__)."""
    dims_enc = [input_dim, hidden_dims[0], hidden_dims[1], latent_dim]
    # Decoder (after the in-place reverse in the original code): 100 -> 512 -> 1024 -> D
    dims_dec = [latent_dim, hidden_dims[1], hidden_dims[0], input_dim]

    params = {}
    names_enc = ["we1", "we2", "we3"]
    names_dec = ["wd1", "wd2", "wd3"]
    keys = jax.random.split(key, 12)
    ki = 0
    for names, dims in ((names_enc, dims_enc), (names_dec, dims_dec)):
        for n, din, dout in zip(names, dims[:-1], dims[1:]):
            scale = 1.0 / jnp.sqrt(jnp.float32(din))
            params[n] = jax.random.uniform(
                keys[ki], (din, dout), jnp.float32, minval=-scale, maxval=scale)
            params["b" + n[1:]] = jax.random.uniform(
                keys[ki + 1], (1, dout), jnp.float32, minval=-scale, maxval=scale)
            ki += 2
    return params


def reference_forward_f32(x, p):
    """Pure-f32 JAX reference."""
    h = jnp.maximum(x @ p["we1"] + p["be1"], 0.0)
    h = jnp.maximum(h @ p["we2"] + p["be2"], 0.0)
    z = h @ p["we3"] + p["be3"]
    d = jnp.tanh(z @ p["wd1"] + p["bd1"])
    d = jnp.maximum(d @ p["wd2"] + p["bd2"], 0.0)
    r = jnp.maximum(d @ p["wd3"] + p["bd3"], 0.0)
    return r, z


def reference_forward_mixed(x, p):
    """JAX reference with the same bf16 weight/activation casts as the kernel."""
    bf16 = jnp.bfloat16

    def lin(a, w, b):
        return jnp.dot(a.astype(bf16), w.astype(bf16),
                       preferred_element_type=jnp.float32) + b

    h = jnp.maximum(lin(x, p["we1"], p["be1"]), 0.0)
    h = jnp.maximum(lin(h, p["we2"], p["be2"]), 0.0)
    z = lin(h, p["we3"], p["be3"])
    d = jnp.tanh(lin(z, p["wd1"], p["bd1"]))
    d = jnp.maximum(lin(d, p["wd2"], p["bd2"]), 0.0)
    r = jnp.maximum(lin(d, p["wd3"], p["bd3"]), 0.0)
    return r, z


if __name__ == "__main__":
    # Small but module-consistent shapes: MLP autoencoder on (batch, input_dim).
    batch = 16
    input_dim = 256
    hidden_dims = [1024, 512]
    latent_dim = 100

    key = jax.random.PRNGKey(0)
    kx, kp = jax.random.split(key)
    x = jax.random.normal(kx, (batch, input_dim), jnp.float32)
    params = init_params(kp, input_dim, hidden_dims, latent_dim)

    prepared = prepare_params(params)   # one-time weight pad/cast (off hot path)

    recon, latent = autoencoder_forward(x, prepared)
    recon = jax.block_until_ready(recon)
    latent = jax.block_until_ready(latent)

    assert recon.shape == (batch, input_dim)
    assert latent.shape == (batch, latent_dim)

    # Exact-semantics check vs a JAX reference with identical bf16 casts.
    recon_mx, latent_mx = reference_forward_mixed(x, params)
    assert jnp.allclose(recon, recon_mx, atol=2e-3, rtol=2e-3)
    assert jnp.allclose(latent, latent_mx, atol=2e-3, rtol=2e-3)

    # Loose check vs the pure-f32 reference (expected bf16 precision tradeoff).
    recon_f32, latent_f32 = reference_forward_f32(x, params)
    assert jnp.allclose(recon, recon_f32, atol=5e-2, rtol=5e-2)
    assert jnp.allclose(latent, latent_f32, atol=5e-2, rtol=5e-2)

    print("KERNEL_OK")
</pallas_src>

<mosaic_0001>
module attributes {stable_mosaic.version = 11 : i64} {
  func.func @_aae_kernel(%arg0: i32, %arg1: memref<16x256xbf16, #tpu.memory_space<vmem>>, %arg2: memref<256x1024xbf16, #tpu.memory_space<vmem>>, %arg3: memref<1x1024xf32, #tpu.memory_space<vmem>>, %arg4: memref<1024x512xbf16, #tpu.memory_space<vmem>>, %arg5: memref<1x512xf32, #tpu.memory_space<vmem>>, %arg6: memref<512x128xbf16, #tpu.memory_space<vmem>>, %arg7: memref<1x128xf32, #tpu.memory_space<vmem>>, %arg8: memref<128x512xbf16, #tpu.memory_space<vmem>>, %arg9: memref<1x512xf32, #tpu.memory_space<vmem>>, %arg10: memref<512x1024xbf16, #tpu.memory_space<vmem>>, %arg11: memref<1x1024xf32, #tpu.memory_space<vmem>>, %arg12: memref<1024x256xbf16, #tpu.memory_space<vmem>>, %arg13: memref<1x256xf32, #tpu.memory_space<vmem>>, %arg14: memref<16x256xf32, #tpu.memory_space<vmem>>, %arg15: memref<16x128xf32, #tpu.memory_space<vmem>>) attributes {dimension_semantics = [#tpu.dimension_semantics<arbitrary>], iteration_bounds = array<i64: 1>, scalar_prefetch = 0 : i64, scratch_operands = 0 : i64, tpu.core_type = #tpu.core_type<tc>, window_params = [{transform_indices = @transform_0, window_bounds = array<i64: 16, 256>}, {pipeline_mode = #tpu.pipeline_mode<synchronous>, transform_indices = @transform_1, window_bounds = array<i64: 256, 1024>}, {pipeline_mode = #tpu.pipeline_mode<synchronous>, transform_indices = @transform_2, window_bounds = array<i64: 1, 1024>}, {pipeline_mode = #tpu.pipeline_mode<synchronous>, transform_indices = @transform_3, window_bounds = array<i64: 1024, 512>}, {pipeline_mode = #tpu.pipeline_mode<synchronous>, transform_indices = @transform_4, window_bounds = array<i64: 1, 512>}, {pipeline_mode = #tpu.pipeline_mode<synchronous>, transform_indices = @transform_5, window_bounds = array<i64: 512, 128>}, {pipeline_mode = #tpu.pipeline_mode<synchronous>, transform_indices = @transform_6, window_bounds = array<i64: 1, 128>}, {pipeline_mode = #tpu.pipeline_mode<synchronous>, transform_indices = @transform_7, window_bounds = array<i64: 128, 512>}, {pipeline_mode = #tpu.pipeline_mode<synchronous>, transform_indices = @transform_8, window_bounds = array<i64: 1, 512>}, {pipeline_mode = #tpu.pipeline_mode<synchronous>, transform_indices = @transform_9, window_bounds = array<i64: 512, 1024>}, {pipeline_mode = #tpu.pipeline_mode<synchronous>, transform_indices = @transform_10, window_bounds = array<i64: 1, 1024>}, {pipeline_mode = #tpu.pipeline_mode<synchronous>, transform_indices = @transform_11, window_bounds = array<i64: 1024, 256>}, {pipeline_mode = #tpu.pipeline_mode<synchronous>, transform_indices = @transform_12, window_bounds = array<i64: 1, 256>}, {transform_indices = @transform_13, window_bounds = array<i64: 16, 256>}, {transform_indices = @transform_14, window_bounds = array<i64: 16, 128>}]} {
    %c0 = arith.constant 0 : index
    %c0_0 = arith.constant 0 : index
    %0 = vector.load %arg1[%c0, %c0_0] : memref<16x256xbf16, #tpu.memory_space<vmem>>, vector<16x256xbf16>
    %c0_1 = arith.constant 0 : index
    %c0_2 = arith.constant 0 : index
    %1 = vector.load %arg2[%c0_1, %c0_2] : memref<256x1024xbf16, #tpu.memory_space<vmem>>, vector<256x1024xbf16>
    %cst = arith.constant dense<0.000000e+00> : vector<16x1024xf32>
    %2 = tpu.matmul %0, %1, %cst {dimension_numbers = #tpu.dot_dimension_numbers<[1], [0], [0], [1], [0, 0, 1, 1], [], []>} : vector<16x256xbf16>, vector<256x1024xbf16>, vector<16x1024xf32> -> vector<16x1024xf32>
    %c0_3 = arith.constant 0 : index
    %c0_4 = arith.constant 0 : index
    %3 = vector.load %arg3[%c0_3, %c0_4] : memref<1x1024xf32, #tpu.memory_space<vmem>>, vector<1x1024xf32>
    %4 = vector.broadcast %3 : vector<1x1024xf32> to vector<16x1024xf32>
    %5 = arith.addf %2, %4 : vector<16x1024xf32>
    %cst_5 = arith.constant 0.000000e+00 : f32
    %6 = vector.broadcast %cst_5 : f32 to vector<16x1024xf32>
    %7 = arith.maximumf %5, %6 : vector<16x1024xf32>
    %8 = arith.truncf %7 : vector<16x1024xf32> to vector<16x1024xbf16>
    %c0_6 = arith.constant 0 : index
    %c0_7 = arith.constant 0 : index
    %9 = vector.load %arg4[%c0_6, %c0_7] : memref<1024x512xbf16, #tpu.memory_space<vmem>>, vector<1024x512xbf16>
    %cst_8 = arith.constant dense<0.000000e+00> : vector<16x512xf32>
    %10 = tpu.matmul %8, %9, %cst_8 {dimension_numbers = #tpu.dot_dimension_numbers<[1], [0], [0], [1], [0, 0, 1, 1], [], []>} : vector<16x1024xbf16>, vector<1024x512xbf16>, vector<16x512xf32> -> vector<16x512xf32>
    %c0_9 = arith.constant 0 : index
    %c0_10 = arith.constant 0 : index
    %11 = vector.load %arg5[%c0_9, %c0_10] : memref<1x512xf32, #tpu.memory_space<vmem>>, vector<1x512xf32>
    %12 = vector.broadcast %11 : vector<1x512xf32> to vector<16x512xf32>
    %13 = arith.addf %10, %12 : vector<16x512xf32>
    %cst_11 = arith.constant 0.000000e+00 : f32
    %14 = vector.broadcast %cst_11 : f32 to vector<16x512xf32>
    %15 = arith.maximumf %13, %14 : vector<16x512xf32>
    %16 = arith.truncf %15 : vector<16x512xf32> to vector<16x512xbf16>
    %c0_12 = arith.constant 0 : index
    %c0_13 = arith.constant 0 : index
    %17 = vector.load %arg6[%c0_12, %c0_13] : memref<512x128xbf16, #tpu.memory_space<vmem>>, vector<512x128xbf16>
    %cst_14 = arith.constant dense<0.000000e+00> : vector<16x128xf32>
    %18 = tpu.matmul %16, %17, %cst_14 {dimension_numbers = #tpu.dot_dimension_numbers<[1], [0], [0], [1], [0, 0, 1, 1], [], []>} : vector<16x512xbf16>, vector<512x128xbf16>, vector<16x128xf32> -> vector<16x128xf32>
    %c0_15 = arith.constant 0 : index
    %c0_16 = arith.constant 0 : index
    %19 = vector.load %arg7[%c0_15, %c0_16] : memref<1x128xf32, #tpu.memory_space<vmem>>, vector<1x128xf32>
    %20 = vector.broadcast %19 : vector<1x128xf32> to vector<16x128xf32>
    %21 = arith.addf %18, %20 : vector<16x128xf32>
    %c0_17 = arith.constant 0 : index
    %c0_18 = arith.constant 0 : index
    %22 = vector.load %arg15[%c0_17, %c0_18] : memref<16x128xf32, #tpu.memory_space<vmem>>, vector<16x128xf32>
    tpu.vector_store %arg15[%c0_17, %c0_18], %21 {strides = array<i32>} : memref<16x128xf32, #tpu.memory_space<vmem>>, vector<16x128xf32>,
    %23 = arith.truncf %21 : vector<16x128xf32> to vector<16x128xbf16>
    %c0_19 = arith.constant 0 : index
    %c0_20 = arith.constant 0 : index
    %24 = vector.load %arg8[%c0_19, %c0_20] : memref<128x512xbf16, #tpu.memory_space<vmem>>, vector<128x512xbf16>
    %cst_21 = arith.constant dense<0.000000e+00> : vector<16x512xf32>
    %25 = tpu.matmul %23, %24, %cst_21 {dimension_numbers = #tpu.dot_dimension_numbers<[1], [0], [0], [1], [0, 0, 1, 1], [], []>} : vector<16x128xbf16>, vector<128x512xbf16>, vector<16x512xf32> -> vector<16x512xf32>
    %c0_22 = arith.constant 0 : index
    %c0_23 = arith.constant 0 : index
    %26 = vector.load %arg9[%c0_22, %c0_23] : memref<1x512xf32, #tpu.memory_space<vmem>>, vector<1x512xf32>
    %27 = vector.broadcast %26 : vector<1x512xf32> to vector<16x512xf32>
    %28 = arith.addf %25, %27 : vector<16x512xf32>
    %29 = math.tanh %28 : vector<16x512xf32>
    %30 = arith.truncf %29 : vector<16x512xf32> to vector<16x512xbf16>
    %c0_24 = arith.constant 0 : index
    %c0_25 = arith.constant 0 : index
    %31 = vector.load %arg10[%c0_24, %c0_25] : memref<512x1024xbf16, #tpu.memory_space<vmem>>, vector<512x1024xbf16>
    %cst_26 = arith.constant dense<0.000000e+00> : vector<16x1024xf32>
    %32 = tpu.matmul %30, %31, %cst_26 {dimension_numbers = #tpu.dot_dimension_numbers<[1], [0], [0], [1], [0, 0, 1, 1], [], []>} : vector<16x512xbf16>, vector<512x1024xbf16>, vector<16x1024xf32> -> vector<16x1024xf32>
    %c0_27 = arith.constant 0 : index
    %c0_28 = arith.constant 0 : index
    %33 = vector.load %arg11[%c0_27, %c0_28] : memref<1x1024xf32, #tpu.memory_space<vmem>>, vector<1x1024xf32>
    %34 = vector.broadcast %33 : vector<1x1024xf32> to vector<16x1024xf32>
    %35 = arith.addf %32, %34 : vector<16x1024xf32>
    %cst_29 = arith.constant 0.000000e+00 : f32
    %36 = vector.broadcast %cst_29 : f32 to vector<16x1024xf32>
    %37 = arith.maximumf %35, %36 : vector<16x1024xf32>
    %38 = arith.truncf %37 : vector<16x1024xf32> to vector<16x1024xbf16>
    %c0_30 = arith.constant 0 : index
    %c0_31 = arith.constant 0 : index
    %39 = vector.load %arg12[%c0_30, %c0_31] : memref<1024x256xbf16, #tpu.memory_space<vmem>>, vector<1024x256xbf16>
    %cst_32 = arith.constant dense<0.000000e+00> : vector<16x256xf32>
    %40 = tpu.matmul %38, %39, %cst_32 {dimension_numbers = #tpu.dot_dimension_numbers<[1], [0], [0], [1], [0, 0, 1, 1], [], []>} : vector<16x1024xbf16>, vector<1024x256xbf16>, vector<16x256xf32> -> vector<16x256xf32>
    %c0_33 = arith.constant 0 : index
    %c0_34 = arith.constant 0 : index
    %41 = vector.load %arg13[%c0_33, %c0_34] : memref<1x256xf32, #tpu.memory_space<vmem>>, vector<1x256xf32>
    %42 = vector.broadcast %41 : vector<1x256xf32> to vector<16x256xf32>
    %43 = arith.addf %40, %42 : vector<16x256xf32>
    %cst_35 = arith.constant 0.000000e+00 : f32
    %44 = vector.broadcast %cst_35 : f32 to vector<16x256xf32>
    %45 = arith.maximumf %43, %44 : vector<16x256xf32>
    %c0_36 = arith.constant 0 : index
    %c0_37 = arith.constant 0 : index
    %46 = vector.load %arg14[%c0_36, %c0_37] : memref<16x256xf32, #tpu.memory_space<vmem>>, vector<16x256xf32>
    tpu.vector_store %arg14[%c0_36, %c0_37], %45 {strides = array<i32>} : memref<16x256xf32, #tpu.memory_space<vmem>>, vector<16x256xf32>,
    return
  }
  func.func @transform_0(%arg0: i32) -> (i32, i32) {
    %c0_i32 = arith.constant 0 : i32
    %c0_i32_0 = arith.constant 0 : i32
    return %arg0, %c0_i32 : i32, i32
  }
  func.func @transform_1(%arg0: i32) -> (i32, i32) {
    %c0_i32 = arith.constant 0 : i32
    %c0_i32_0 = arith.constant 0 : i32
    %c0_i32_1 = arith.constant 0 : i32
    return %c0_i32, %c0_i32_0 : i32, i32
  }
  func.func @transform_2(%arg0: i32) -> (i32, i32) {
    %c0_i32 = arith.constant 0 : i32
    %c0_i32_0 = arith.constant 0 : i32
    %c0_i32_1 = arith.constant 0 : i32
    return %c0_i32, %c0_i32_0 : i32, i32
  }
  func.func @transform_3(%arg0: i32) -> (i32, i32) {
    %c0_i32 = arith.constant 0 : i32
    %c0_i32_0 = arith.constant 0 : i32
    %c0_i32_1 = arith.constant 0 : i32
    return %c0_i32, %c0_i32_0 : i32, i32
  }
  func.func @transform_4(%arg0: i32) -> (i32, i32) {
    %c0_i32 = arith.constant 0 : i32
    %c0_i32_0 = arith.constant 0 : i32
    %c0_i32_1 = arith.constant 0 : i32
    return %c0_i32, %c0_i32_0 : i32, i32
  }
  func.func @transform_5(%arg0: i32) -> (i32, i32) {
    %c0_i32 = arith.constant 0 : i32
    %c0_i32_0 = arith.constant 0 : i32
    %c0_i32_1 = arith.constant 0 : i32
    return %c0_i32, %c0_i32_0 : i32, i32
  }
  func.func @transform_6(%arg0: i32) -> (i32, i32) {
    %c0_i32 = arith.constant 0 : i32
    %c0_i32_0 = arith.constant 0 : i32
    %c0_i32_1 = arith.constant 0 : i32
    return %c0_i32, %c0_i32_0 : i32, i32
  }
  func.func @transform_7(%arg0: i32) -> (i32, i32) {
    %c0_i32 = arith.constant 0 : i32
    %c0_i32_0 = arith.constant 0 : i32
    %c0_i32_1 = arith.constant 0 : i32
    return %c0_i32, %c0_i32_0 : i32, i32
  }
  func.func @transform_8(%arg0: i32) -> (i32, i32) {
    %c0_i32 = arith.constant 0 : i32
    %c0_i32_0 = arith.constant 0 : i32
    %c0_i32_1 = arith.constant 0 : i32
    return %c0_i32, %c0_i32_0 : i32, i32
  }
  func.func @transform_9(%arg0: i32) -> (i32, i32) {
    %c0_i32 = arith.constant 0 : i32
    %c0_i32_0 = arith.constant 0 : i32
    %c0_i32_1 = arith.constant 0 : i32
    return %c0_i32, %c0_i32_0 : i32, i32
  }
  func.func @transform_10(%arg0: i32) -> (i32, i32) {
    %c0_i32 = arith.constant 0 : i32
    %c0_i32_0 = arith.constant 0 : i32
    %c0_i32_1 = arith.constant 0 : i32
    return %c0_i32, %c0_i32_0 : i32, i32
  }
  func.func @transform_11(%arg0: i32) -> (i32, i32) {
    %c0_i32 = arith.constant 0 : i32
    %c0_i32_0 = arith.constant 0 : i32
    %c0_i32_1 = arith.constant 0 : i32
    return %c0_i32, %c0_i32_0 : i32, i32
  }
  func.func @transform_12(%arg0: i32) -> (i32, i32) {
    %c0_i32 = arith.constant 0 : i32
    %c0_i32_0 = arith.constant 0 : i32
    %c0_i32_1 = arith.constant 0 : i32
    return %c0_i32, %c0_i32_0 : i32, i32
  }
  func.func @transform_13(%arg0: i32) -> (i32, i32) {
    %c0_i32 = arith.constant 0 : i32
    %c0_i32_0 = arith.constant 0 : i32
    return %arg0, %c0_i32 : i32, i32
  }
  func.func @transform_14(%arg0: i32) -> (i32, i32) {
    %c0_i32 = arith.constant 0 : i32
    %c0_i32_0 = arith.constant 0 : i32
    return %arg0, %c0_i32 : i32, i32
  }
}

</mosaic_0001>

<llo_original>
// kernel: _forward_impl.1
$region0: #{_forward_impl.1}
  #allocation0 [shape = 'u32[]', space=smem, size = 0x4, offset = 0x4, fixed_abs, tag = 'smem constant byte address 0x4 - core index']
  #allocation1 [shape = 'u32[72,128]{1,0:T(1,128)}', space=vmem, size = 0x9000, scoped, tag = 'internal scratch']
  %s0 = inlined_call_operand.vmem [shape: bf16[16,256], index: 0, kind: input, shape index: {}]
  %s1 = inlined_call_operand.hbm [shape: bf16[256,1024], index: 1, kind: input, shape index: {}]
  %s2 = inlined_call_operand.vmem [shape: f32[1,1024], index: 2, kind: input, shape index: {}]
  %s3 = inlined_call_operand.hbm [shape: bf16[1024,512], index: 3, kind: input, shape index: {}]
  %s4 = inlined_call_operand.vmem [shape: f32[1,512], index: 4, kind: input, shape index: {}]
  %s5 = inlined_call_operand.hbm [shape: bf16[512,128], index: 5, kind: input, shape index: {}]
  %s6 = inlined_call_operand.vmem [shape: f32[1,128], index: 6, kind: input, shape index: {}]
  %s7 = inlined_call_operand.hbm [shape: bf16[128,512], index: 7, kind: input, shape index: {}]
  %s8 = inlined_call_operand.vmem [shape: f32[1,512], index: 8, kind: input, shape index: {}]
  %s9 = inlined_call_operand.hbm [shape: bf16[512,1024], index: 9, kind: input, shape index: {}]
  %s10 = inlined_call_operand.vmem [shape: f32[1,1024], index: 10, kind: input, shape index: {}]
  %s11 = inlined_call_operand.hbm [shape: bf16[1024,256], index: 11, kind: input, shape index: {}]
  %s12 = inlined_call_operand.vmem [shape: f32[1,256], index: 12, kind: input, shape index: {}]
  %s13 = inlined_call_operand.hbm [shape: f32[16,256], index: 13, kind: output, shape index: {0}]
  %s14 = inlined_call_operand.hbm [shape: f32[16,128], index: 14, kind: output, shape index: {1}]
  %15 = xla_tuple %s13, %s14
  %s16 = sld [smem:[#allocation0]]
  $region94: #{_forward_impl.1} parent=0
    _
  %s18 = ssub.s32 1, %s16
  %s19 = scalar_select 0, %s18, %s16
  $region1: #{_forward_impl.1} parent=0
    #allocation2 [shape = 'u8[524288]{0}', space=vmem, size = 0x80000, scoped, tag = 'input window, operand 1, single buffered']
    #allocation3 [shape = 's32[1]{0}', space=sflag, size = 0x4, scoped, tag = 'scoped memory for _forward_impl.1']
    #allocation4 [shape = 's32[1]{0}', space=sflag, size = 0x4, scoped, tag = 'scoped memory for _forward_impl.1']
    #allocation5 [shape = 'u8[1048576]{0}', space=vmem, size = 0x100000, scoped, tag = 'input window, operand 3, single buffered']
    #allocation6 [shape = 's32[1]{0}', space=sflag, size = 0x4, scoped, tag = 'scoped memory for _forward_impl.1']
    #allocation7 [shape = 'u8[131072]{0}', space=vmem, size = 0x20000, scoped, tag = 'input window, operand 5, single buffered']
    #allocation8 [shape = 'u8[131072]{0}', space=vmem, size = 0x20000, scoped, tag = 'input window, operand 7, single buffered']
    #allocation9 [shape = 's32[1]{0}', space=sflag, size = 0x4, scoped, tag = 'scoped memory for _forward_impl.1']
    #allocation10 [shape = 'u8[1048576]{0}', space=vmem, size = 0x100000, scoped, tag = 'input window, operand 9, single buffered']
    #allocation11 [shape = 'u8[524288]{0}', space=vmem, size = 0x80000, scoped, tag = 'input window, operand 11, single buffered']
    #allocation12 [shape = 's32[1]{0}', space=sflag, size = 0x4, scoped, tag = 'scoped memory for _forward_impl.1']
    #allocation13 [shape = 'u8[16384]{0}', space=vmem, size = 0x4000, scoped, tag = 'output window, operand 0, single buffered']
    #allocation14 [shape = 'u8[8192]{0}', space=vmem, size = 0x2000, scoped, tag = 'output window, operand 1, single buffered']
    #allocation15 [shape = 's32[1]{0}', space=sflag, size = 0x4, scoped, tag = 'scoped memory for _forward_impl.1']
    %20 = vsyncpa [#allocation3], 0
    %21 = vsyncpa [#allocation6], 0
    %22 = vsyncpa [#allocation9], 0
    %23 = vsyncpa [#allocation12], 0
    %24 = vsyncpa [#allocation4], 0
    %25 = vsyncpa [#allocation15], 0
    // Predicated region
    $region2: #{_forward_impl.1} parent=1 // pred_check
      _
    $region3: #{_forward_impl.1} parent=1 // pred_check_branch
      %27 = sbr.rel (0) target = $region5
    $region4: #{_forward_impl.1} parent=1 // pred_region
      _
    $region5: #{_forward_impl.1} parent=1 // pred_fallthru
      _
    // Predicated region
    $region6: #{_forward_impl.1} parent=1 // pred_check
      _
    $region7: #{_forward_impl.1} parent=1 // pred_check_branch
      %29 = sbr.rel (0) target = $region9
    $region8: #{_forward_impl.1} parent=1 // pred_region
      %31 = vsyncadd [#allocation3], 0
      %s32 = sshll.u32 %s1, 4
      %s33 = int_to_ptr.hbm [resolvable:$true] %s32
      %s34 = sshll.u32 [#allocation2], 4
      %s35 = int_to_ptr.vmem [resolvable:$true] %s34
      %40 = dma.hbm_to_vmem [thread:$0]  %s33, 16384, %s35, [#allocation3], 512, 512, 32
    $region9: #{_forward_impl.1} parent=1 // pred_fallthru
      _
    // Predicated region
    $region10: #{_forward_impl.1} parent=1 // pred_check
      _
    $region11: #{_forward_impl.1} parent=1 // pred_check_branch
      %42 = sbr.rel (0) target = $region13
    $region12: #{_forward_impl.1} parent=1 // pred_region
      _
    $region13: #{_forward_impl.1} parent=1 // pred_fallthru
      _
    // Predicated region
    $region14: #{_forward_impl.1} parent=1 // pred_check
      _
    $region15: #{_forward_impl.1} parent=1 // pred_check_branch
      %44 = sbr.rel (0) target = $region17
    $region16: #{_forward_impl.1} parent=1 // pred_region
      %46 = vsyncadd [#allocation6], 0
      %s47 = sshll.u32 %s3, 4
      %s48 = int_to_ptr.hbm [resolvable:$true] %s47
      %s49 = sshll.u32 [#allocation5], 4
      %s50 = int_to_ptr.vmem [resolvable:$true] %s49
      %55 = dma.hbm_to_vmem [thread:$0]  %s48, 32768, %s50, [#allocation6], 256, 256, 16
    $region17: #{_forward_impl.1} parent=1 // pred_fallthru
      _
    // Predicated region
    $region18: #{_forward_impl.1} parent=1 // pred_check
      _
    $region19: #{_forward_impl.1} parent=1 // pred_check_branch
      %57 = sbr.rel (0) target = $region21
    $region20: #{_forward_impl.1} parent=1 // pred_region
      _
    $region21: #{_forward_impl.1} parent=1 // pred_fallthru
      _
    // Predicated region
    $region22: #{_forward_impl.1} parent=1 // pred_check
      _
    $region23: #{_forward_impl.1} parent=1 // pred_check_branch
      %59 = sbr.rel (0) target = $region25
    $region24: #{_forward_impl.1} parent=1 // pred_region
      %61 = vsyncadd [#allocation6], 0
      %s62 = sshll.u32 %s5, 4
      %s63 = int_to_ptr.hbm [resolvable:$true] %s62
      %s64 = sshll.u32 [#allocation7], 4
      %s65 = int_to_ptr.vmem [resolvable:$true] %s64
      %70 = dma.hbm_to_vmem [thread:$0]  %s63, 4096, %s65, [#allocation6], 64, 64, 4
    $region25: #{_forward_impl.1} parent=1 // pred_fallthru
      _
    // Predicated region
    $region26: #{_forward_impl.1} parent=1 // pred_check
      _
    $region27: #{_forward_impl.1} parent=1 // pred_check_branch
      %72 = sbr.rel (0) target = $region29
    $region28: #{_forward_impl.1} parent=1 // pred_region
      _
    $region29: #{_forward_impl.1} parent=1 // pred_fallthru
      _
    // Predicated region
    $region30: #{_forward_impl.1} parent=1 // pred_check
      _
    $region31: #{_forward_impl.1} parent=1 // pred_check_branch
      %74 = sbr.rel (0) target = $region33
    $region32: #{_forward_impl.1} parent=1 // pred_region
      %76 = vsyncadd [#allocation9], 0
      %s77 = sshll.u32 %s7, 4
      %s78 = int_to_ptr.hbm [resolvable:$true] %s77
      %s79 = sshll.u32 [#allocation8], 4
      %s80 = int_to_ptr.vmem [resolvable:$true] %s79
      %85 = dma.hbm_to_vmem [thread:$0]  %s78, 4096, %s80, [#allocation9], 256, 256, 16
    $region33: #{_forward_impl.1} parent=1 // pred_fallthru
      _
    // Predicated region
    $region34: #{_forward_impl.1} parent=1 // pred_check
      _
    $region35: #{_forward_impl.1} parent=1 // pred_check_branch
      %87 = sbr.rel (0) target = $region37
    $region36: #{_forward_impl.1} parent=1 // pred_region
      _
    $region37: #{_forward_impl.1} parent=1 // pred_fallthru
      _
    // Predicated region
    $region38: #{_forward_impl.1} parent=1 // pred_check
      _
    $region39: #{_forward_impl.1} parent=1 // pred_check_branch
      %89 = sbr.rel (0) target = $region41
    $region40: #{_forward_impl.1} parent=1 // pred_region
      %91 = vsyncadd [#allocation9], 0
      %s92 = sshll.u32 %s9, 4
      %s93 = int_to_ptr.hbm [resolvable:$true] %s92
      %s94 = sshll.u32 [#allocation10], 4
      %s95 = int_to_ptr.vmem [resolvable:$true] %s94
      %100 = dma.hbm_to_vmem [thread:$0]  %s93, 32768, %s95, [#allocation9], 512, 512, 32
    $region41: #{_forward_impl.1} parent=1 // pred_fallthru
      _
    // Predicated region
    $region42: #{_forward_impl.1} parent=1 // pred_check
      _
    $region43: #{_forward_impl.1} parent=1 // pred_check_branch
      %102 = sbr.rel (0) target = $region45
    $region44: #{_forward_impl.1} parent=1 // pred_region
      _
    $region45: #{_forward_impl.1} parent=1 // pred_fallthru
      _
    // Predicated region
    $region46: #{_forward_impl.1} parent=1 // pred_check
      _
    $region47: #{_forward_impl.1} parent=1 // pred_check_branch
      %104 = sbr.rel (0) target = $region49
    $region48: #{_forward_impl.1} parent=1 // pred_region
      %106 = vsyncadd [#allocation12], 0
      %s107 = sshll.u32 %s11, 4
      %s108 = int_to_ptr.hbm [resolvable:$true] %s107
      %s109 = sshll.u32 [#allocation11], 4
      %s110 = int_to_ptr.vmem [resolvable:$true] %s109
      %115 = dma.hbm_to_vmem [thread:$0]  %s108, 16384, %s110, [#allocation12], 128, 128, 8
    $region49: #{_forward_impl.1} parent=1 // pred_fallthru
      _
    // Predicated region
    $region50: #{_forward_impl.1} parent=1 // pred_check
      _
    $region51: #{_forward_impl.1} parent=1 // pred_check_branch
      %117 = sbr.rel (0) target = $region53
    $region52: #{_forward_impl.1} parent=1 // pred_region
      _
    $region53: #{_forward_impl.1} parent=1 // pred_fallthru
      _
    // Predicated region
    $region54: #{_forward_impl.1} parent=1 // pred_check
      _
    $region55: #{_forward_impl.1} parent=1 // pred_check_branch
      %119 = sbr.rel (0) target = $region57
    $region56: #{_forward_impl.1} parent=1 // pred_region
      %121 = dma.done [#allocation3], 16384
    $region57: #{_forward_impl.1} parent=1 // pred_fallthru
      _
    // Predicated region
    $region58: #{_forward_impl.1} parent=1 // pred_check
      _
    $region59: #{_forward_impl.1} parent=1 // pred_check_branch
      %123 = sbr.rel (0) target = $region61
    $region60: #{_forward_impl.1} parent=1 // pred_region
      %125 = dma.done [#allocation6], 32768
    $region61: #{_forward_impl.1} parent=1 // pred_fallthru
      _
    // Predicated region
    $region62: #{_forward_impl.1} parent=1 // pred_check
      _
    $region63: #{_forward_impl.1} parent=1 // pred_check_branch
      %127 = sbr.rel (0) target = $region65
    $region64: #{_forward_impl.1} parent=1 // pred_region
      %129 = dma.done [#allocation6], 4096
    $region65: #{_forward_impl.1} parent=1 // pred_fallthru
      _
    // Predicated region
    $region66: #{_forward_impl.1} parent=1 // pred_check
      _
    $region67: #{_forward_impl.1} parent=1 // pred_check_branch
      %131 = sbr.rel (0) target = $region69
    $region68: #{_forward_impl.1} parent=1 // pred_region
      %133 = dma.done [#allocation9], 4096
    $region69: #{_forward_impl.1} parent=1 // pred_fallthru
      _
    // Predicated region
    $region70: #{_forward_impl.1} parent=1 // pred_check
      _
    $region71: #{_forward_impl.1} parent=1 // pred_check_branch
      %135 = sbr.rel (0) target = $region73
    $region72: #{_forward_impl.1} parent=1 // pred_region
      %137 = dma.done [#allocation9], 32768
    $region73: #{_forward_impl.1} parent=1 // pred_fallthru
      _
    // Predicated region
    $region74: #{_forward_impl.1} parent=1 // pred_check
      _
    $region75: #{_forward_impl.1} parent=1 // pred_check_branch
      %139 = sbr.rel (0) target = $region77
    $region76: #{_forward_impl.1} parent=1 // pred_region
      %141 = dma.done [#allocation12], 16384
    $region77: #{_forward_impl.1} parent=1 // pred_fallthru
      _
    %v142 = vld [vmem:[%s0] sm:$0xff]
    %v143 = vld [vmem:[%s0 + $0x8] sm:$0xff]
    %v144 = vld [vmem:[#allocation2] sm:$0xff]
    %v145 = vld [vmem:[#allocation2 + $0x8] sm:$0xff]
    %v146 = vld [vmem:[#allocation2 + $0x10] sm:$0xff]
    %v147 = vld [vmem:[#allocation2 + $0x18] sm:$0xff]
    %v148 = vld [vmem:[#allocation2 + $0x20] sm:$0xff]
    %v149 = vld [vmem:[#allocation2 + $0x28] sm:$0xff]
    %v150 = vld [vmem:[#allocation2 + $0x30] sm:$0xff]
    %v151 = vld [vmem:[#allocation2 + $0x38] sm:$0xff]
    %v152 = vld [vmem:[#allocation2 + $0x40] sm:$0xff]
    %v153 = vld [vmem:[#allocation2 + $0x48] sm:$0xff]
    %v154 = vld [vmem:[#allocation2 + $0x50] sm:$0xff]
    %v155 = vld [vmem:[#allocation2 + $0x58] sm:$0xff]
    %v156 = vld [vmem:[#allocation2 + $0x60] sm:$0xff]
    %v157 = vld [vmem:[#allocation2 + $0x68] sm:$0xff]
    %v158 = vld [vmem:[#allocation2 + $0x70] sm:$0xff]
    %v159 = vld [vmem:[#allocation2 + $0x78] sm:$0xff]
    %v160 = vld [vmem:[#allocation2 + $0x80] sm:$0xff]
    %v161 = vld [vmem:[#allocation2 + $0x88] sm:$0xff]
    %v162 = vld [vmem:[#allocation2 + $0x90] sm:$0xff]
    %v163 = vld [vmem:[#allocation2 + $0x98] sm:$0xff]
    %v164 = vld [vmem:[#allocation2 + $0xa0] sm:$0xff]
    %v165 = vld [vmem:[#allocation2 + $0xa8] sm:$0xff]
    %v166 = vld [vmem:[#allocation2 + $0xb0] sm:$0xff]
    %v167 = vld [vmem:[#allocation2 + $0xb8] sm:$0xff]
    %v168 = vld [vmem:[#allocation2 + $0xc0] sm:$0xff]
    %v169 = vld [vmem:[#allocation2 + $0xc8] sm:$0xff]
    %v170 = vld [vmem:[#allocation2 + $0xd0] sm:$0xff]
    %v171 = vld [vmem:[#allocation2 + $0xd8] sm:$0xff]
    %v172 = vld [vmem:[#allocation2 + $0xe0] sm:$0xff]
    %v173 = vld [vmem:[#allocation2 + $0xe8] sm:$0xff]
    %v174 = vld [vmem:[#allocation2 + $0xf0] sm:$0xff]
    %v175 = vld [vmem:[#allocation2 + $0xf8] sm:$0xff]
    %v176 = vld [vmem:[#allocation2 + $0x100] sm:$0xff]
    %v177 = vld [vmem:[#allocation2 + $0x108] sm:$0xff]
    %v178 = vld [vmem:[#allocation2 + $0x110] sm:$0xff]
    %v179 = vld [vmem:[#allocation2 + $0x118] sm:$0xff]
    %v180 = vld [vmem:[#allocation2 + $0x120] sm:$0xff]
    %v181 = vld [vmem:[#allocation2 + $0x128] sm:$0xff]
    %v182 = vld [vmem:[#allocation2 + $0x130] sm:$0xff]
    %v183 = vld [vmem:[#allocation2 + $0x138] sm:$0xff]
    %v184 = vld [vmem:[#allocation2 + $0x140] sm:$0xff]
    %v185 = vld [vmem:[#allocation2 + $0x148] sm:$0xff]
    %v186 = vld [vmem:[#allocation2 + $0x150] sm:$0xff]
    %v187 = vld [vmem:[#allocation2 + $0x158] sm:$0xff]
    %v188 = vld [vmem:[#allocation2 + $0x160] sm:$0xff]
    %v189 = vld [vmem:[#allocation2 + $0x168] sm:$0xff]
    %v190 = vld [vmem:[#allocation2 + $0x170] sm:$0xff]
    %v191 = vld [vmem:[#allocation2 + $0x178] sm:$0xff]
    %v192 = vld [vmem:[#allocation2 + $0x180] sm:$0xff]
    %v193 = vld [vmem:[#allocation2 + $0x188] sm:$0xff]
    %v194 = vld [vmem:[#allocation2 + $0x190] sm:$0xff]
    %v195 = vld [vmem:[#allocation2 + $0x198] sm:$0xff]
    %v196 = vld [vmem:[#allocation2 + $0x1a0] sm:$0xff]
    %v197 = vld [vmem:[#allocation2 + $0x1a8] sm:$0xff]
    %v198 = vld [vmem:[#allocation2 + $0x1b0] sm:$0xff]
    %v199 = vld [vmem:[#allocation2 + $0x1b8] sm:$0xff]
    %v200 = vld [vmem:[#allocation2 + $0x1c0] sm:$0xff]
    %v201 = vld [vmem:[#allocation2 + $0x1c8] sm:$0xff]
    %v202 = vld [vmem:[#allocation2 + $0x1d0] sm:$0xff]
    %v203 = vld [vmem:[#allocation2 + $0x1d8] sm:$0xff]
    %v204 = vld [vmem:[#allocation2 + $0x1e0] sm:$0xff]
    %v205 = vld [vmem:[#allocation2 + $0x1e8] sm:$0xff]
    %v206 = vld [vmem:[#allocation2 + $0x1f0] sm:$0xff]
    %v207 = vld [vmem:[#allocation2 + $0x1f8] sm:$0xff]
    %v208 = vld [vmem:[#allocation2 + $0x200] sm:$0xff]
    %v209 = vld [vmem:[#allocation2 + $0x208] sm:$0xff]
    %v210 = vld [vmem:[#allocation2 + $0x210] sm:$0xff]
    %v211 = vld [vmem:[#allocation2 + $0x218] sm:$0xff]
    %v212 = vld [vmem:[#allocation2 + $0x220] sm:$0xff]
    %v213 = vld [vmem:[#allocation2 + $0x228] sm:$0xff]
    %v214 = vld [vmem:[#allocation2 + $0x230] sm:$0xff]
    %v215 = vld [vmem:[#allocation2 + $0x238] sm:$0xff]
    %v216 = vld [vmem:[#allocation2 + $0x240] sm:$0xff]
    %v217 = vld [vmem:[#allocation2 + $0x248] sm:$0xff]
    %v218 = vld [vmem:[#allocation2 + $0x250] sm:$0xff]
    %v219 = vld [vmem:[#allocation2 + $0x258] sm:$0xff]
    %v220 = vld [vmem:[#allocation2 + $0x260] sm:$0xff]
    %v221 = vld [vmem:[#allocation2 + $0x268] sm:$0xff]
    %v222 = vld [vmem:[#allocation2 + $0x270] sm:$0xff]
    %v223 = vld [vmem:[#allocation2 + $0x278] sm:$0xff]
    %v224 = vld [vmem:[#allocation2 + $0x280] sm:$0xff]
    %v225 = vld [vmem:[#allocation2 + $0x288] sm:$0xff]
    %v226 = vld [vmem:[#allocation2 + $0x290] sm:$0xff]
    %v227 = vld [vmem:[#allocation2 + $0x298] sm:$0xff]
    %v228 = vld [vmem:[#allocation2 + $0x2a0] sm:$0xff]
    %v229 = vld [vmem:[#allocation2 + $0x2a8] sm:$0xff]
    %v230 = vld [vmem:[#allocation2 + $0x2b0] sm:$0xff]
    %v231 = vld [vmem:[#allocation2 + $0x2b8] sm:$0xff]
    %v232 = vld [vmem:[#allocation2 + $0x2c0] sm:$0xff]
    %v233 = vld [vmem:[#allocation2 + $0x2c8] sm:$0xff]
    %v234 = vld [vmem:[#allocation2 + $0x2d0] sm:$0xff]
    %v235 = vld [vmem:[#allocation2 + $0x2d8] sm:$0xff]
    %v236 = vld [vmem:[#allocation2 + $0x2e0] sm:$0xff]
    %v237 = vld [vmem:[#allocation2 + $0x2e8] sm:$0xff]
    %v238 = vld [vmem:[#allocation2 + $0x2f0] sm:$0xff]
    %v239 = vld [vmem:[#allocation2 + $0x2f8] sm:$0xff]
    %v240 = vld [vmem:[#allocation2 + $0x300] sm:$0xff]
    %v241 = vld [vmem:[#allocation2 + $0x308] sm:$0xff]
    %v242 = vld [vmem:[#allocation2 + $0x310] sm:$0xff]
    %v243 = vld [vmem:[#allocation2 + $0x318] sm:$0xff]
    %v244 = vld [vmem:[#allocation2 + $0x320] sm:$0xff]
    %v245 = vld [vmem:[#allocation2 + $0x328] sm:$0xff]
    %v246 = vld [vmem:[#allocation2 + $0x330] sm:$0xff]
    %v247 = vld [vmem:[#allocation2 + $0x338] sm:$0xff]
    %v248 = vld [vmem:[#allocation2 + $0x340] sm:$0xff]
    %v249 = vld [vmem:[#allocation2 + $0x348] sm:$0xff]
    %v250 = vld [vmem:[#allocation2 + $0x350] sm:$0xff]
    %v251 = vld [vmem:[#allocation2 + $0x358] sm:$0xff]
    %v252 = vld [vmem:[#allocation2 + $0x360] sm:$0xff]
    %v253 = vld [vmem:[#allocation2 + $0x368] sm:$0xff]
    %v254 = vld [vmem:[#allocation2 + $0x370] sm:$0xff]
    %v255 = vld [vmem:[#allocation2 + $0x378] sm:$0xff]
    %v256 = vld [vmem:[#allocation2 + $0x380] sm:$0xff]
    %v257 = vld [vmem:[#allocation2 + $0x388] sm:$0xff]
    %v258 = vld [vmem:[#allocation2 + $0x390] sm:$0xff]
    %v259 = vld [vmem:[#allocation2 + $0x398] sm:$0xff]
    %v260 = vld [vmem:[#allocation2 + $0x3a0] sm:$0xff]
    %v261 = vld [vmem:[#allocation2 + $0x3a8] sm:$0xff]
    %v262 = vld [vmem:[#allocation2 + $0x3b0] sm:$0xff]
    %v263 = vld [vmem:[#allocation2 + $0x3b8] sm:$0xff]
    %v264 = vld [vmem:[#allocation2 + $0x3c0] sm:$0xff]
    %v265 = vld [vmem:[#allocation2 + $0x3c8] sm:$0xff]
    %v266 = vld [vmem:[#allocation2 + $0x3d0] sm:$0xff]
    %v267 = vld [vmem:[#allocation2 + $0x3d8] sm:$0xff]
    %v268 = vld [vmem:[#allocation2 + $0x3e0] sm:$0xff]
    %v269 = vld [vmem:[#allocation2 + $0x3e8] sm:$0xff]
    %v270 = vld [vmem:[#allocation2 + $0x3f0] sm:$0xff]
    %v271 = vld [vmem:[#allocation2 + $0x3f8] sm:$0xff]
    %v272 = vld [vmem:[%s2] sm:$0xff]
    %v274 = vperm.slane %v272, 0
    %v275 = vperm.slane %v272, 1
    %v276 = vperm.slane %v272, 2
    %v277 = vperm.slane %v272, 3
    %v278 = vperm.slane %v272, 4
    %v279 = vperm.slane %v272, 5
    %v280 = vperm.slane %v272, 6
    %v281 = vperm.slane %v272, 7
    %v292 = vunpack.c.l.b16 %v142
    %v293 = vunpack.c.h.b16 %v142
    %v294 = vunpack.c.l.b16 %v143
    %v295 = vunpack.c.h.b16 %v143
    %v296 = vpack.c.b16 %v294, %v292
    %v297 = vpack.c.b16 %v295, %v293
    %v428 = vunpack.c.l.b16 %v144
    %v429 = vunpack.c.h.b16 %v144
    %v430 = vunpack.c.l.b16 %v145
    %v431 = vunpack.c.h.b16 %v145
    %v432 = vunpack.c.l.b16 %v146
    %v433 = vunpack.c.h.b16 %v146
    %v434 = vunpack.c.l.b16 %v147
    %v435 = vunpack.c.h.b16 %v147
    %v436 = vunpack.c.l.b16 %v148
    %v437 = vunpack.c.h.b16 %v148
    %v438 = vunpack.c.l.b16 %v149
    %v439 = vunpack.c.h.b16 %v149
    %v440 = vunpack.c.l.b16 %v150
    %v441 = vunpack.c.h.b16 %v150
    %v442 = vunpack.c.l.b16 %v151
    %v443 = vunpack.c.h.b16 %v151
    %v444 = vunpack.c.l.b16 %v152
    %v445 = vunpack.c.h.b16 %v152
    %v446 = vunpack.c.l.b16 %v153
    %v447 = vunpack.c.h.b16 %v153
    %v448 = vunpack.c.l.b16 %v154
    %v449 = vunpack.c.h.b16 %v154
    %v450 = vunpack.c.l.b16 %v155
    %v451 = vunpack.c.h.b16 %v155
    %v452 = vunpack.c.l.b16 %v156
    %v453 = vunpack.c.h.b16 %v156
    %v454 = vunpack.c.l.b16 %v157
    %v455 = vunpack.c.h.b16 %v157
    %v456 = vunpack.c.l.b16 %v158
    %v457 = vunpack.c.h.b16 %v158
    %v458 = vunpack.c.l.b16 %v159
    %v459 = vunpack.c.h.b16 %v159
    %v460 = vunpack.c.l.b16 %v160
    %v461 = vunpack.c.h.b16 %v160
    %v462 = vunpack.c.l.b16 %v161
    %v463 = vunpack.c.h.b16 %v161
    %v464 = vunpack.c.l.b16 %v162
    %v465 = vunpack.c.h.b16 %v162
    %v466 = vunpack.c.l.b16 %v163
    %v467 = vunpack.c.h.b16 %v163
    %v468 = vunpack.c.l.b16 %v164
    %v469 = vunpack.c.h.b16 %v164
    %v470 = vunpack.c.l.b16 %v165
    %v471 = vunpack.c.h.b16 %v165
    %v472 = vunpack.c.l.b16 %v166
    %v473 = vunpack.c.h.b16 %v166
    %v474 = vunpack.c.l.b16 %v167
    %v475 = vunpack.c.h.b16 %v167
    %v476 = vunpack.c.l.b16 %v168
    %v477 = vunpack.c.h.b16 %v168
    %v478 = vunpack.c.l.b16 %v169
    %v479 = vunpack.c.h.b16 %v169
    %v480 = vunpack.c.l.b16 %v170
    %v481 = vunpack.c.h.b16 %v170
    %v482 = vunpack.c.l.b16 %v171
    %v483 = vunpack.c.h.b16 %v171
    %v484 = vunpack.c.l.b16 %v172
    %v485 = vunpack.c.h.b16 %v172
    %v486 = vunpack.c.l.b16 %v173
    %v487 = vunpack.c.h.b16 %v173
    %v488 = vunpack.c.l.b16 %v174
    %v489 = vunpack.c.h.b16 %v174
    %v490 = vunpack.c.l.b16 %v175
    %v491 = vunpack.c.h.b16 %v175
    %v492 = vunpack.c.l.b16 %v176
    %v493 = vunpack.c.h.b16 %v176
    %v494 = vunpack.c.l.b16 %v177
    %v495 = vunpack.c.h.b16 %v177
    %v496 = vunpack.c.l.b16 %v178
    %v497 = vunpack.c.h.b16 %v178
    %v498 = vunpack.c.l.b16 %v179
    %v499 = vunpack.c.h.b16 %v179
    %v500 = vunpack.c.l.b16 %v180
    %v501 = vunpack.c.h.b16 %v180
    %v502 = vunpack.c.l.b16 %v181
    %v503 = vunpack.c.h.b16 %v181
    %v504 = vunpack.c.l.b16 %v182
    %v505 = vunpack.c.h.b16 %v182
    %v506 = vunpack.c.l.b16 %v183
    %v507 = vunpack.c.h.b16 %v183
    %v508 = vunpack.c.l.b16 %v184
    %v509 = vunpack.c.h.b16 %v184
    %v510 = vunpack.c.l.b16 %v185
    %v511 = vunpack.c.h.b16 %v185
    %v512 = vunpack.c.l.b16 %v186
    %v513 = vunpack.c.h.b16 %v186
    %v514 = vunpack.c.l.b16 %v187
    %v515 = vunpack.c.h.b16 %v187
    %v516 = vunpack.c.l.b16 %v188
    %v517 = vunpack.c.h.b16 %v188
    %v518 = vunpack.c.l.b16 %v189
    %v519 = vunpack.c.h.b16 %v189
    %v520 = vunpack.c.l.b16 %v190
    %v521 = vunpack.c.h.b16 %v190
    %v522 = vunpack.c.l.b16 %v191
    %v523 = vunpack.c.h.b16 %v191
    %v524 = vunpack.c.l.b16 %v192
    %v525 = vunpack.c.h.b16 %v192
    %v526 = vunpack.c.l.b16 %v193
    %v527 = vunpack.c.h.b16 %v193
    %v528 = vunpack.c.l.b16 %v194
    %v529 = vunpack.c.h.b16 %v194
    %v530 = vunpack.c.l.b16 %v195
    %v531 = vunpack.c.h.b16 %v195
    %v532 = vunpack.c.l.b16 %v196
    %v533 = vunpack.c.h.b16 %v196
    %v534 = vunpack.c.l.b16 %v197
    %v535 = vunpack.c.h.b16 %v197
    %v536 = vunpack.c.l.b16 %v198
    %v537 = vunpack.c.h.b16 %v198
    %v538 = vunpack.c.l.b16 %v199
    %v539 = vunpack.c.h.b16 %v199
    %v540 = vunpack.c.l.b16 %v200
    %v541 = vunpack.c.h.b16 %v200
    %v542 = vunpack.c.l.b16 %v201
    %v543 = vunpack.c.h.b16 %v201
    %v544 = vunpack.c.l.b16 %v202
    %v545 = vunpack.c.h.b16 %v202
    %v546 = vunpack.c.l.b16 %v203
    %v547 = vunpack.c.h.b16 %v203
    %v548 = vunpack.c.l.b16 %v204
    %v549 = vunpack.c.h.b16 %v204
    %v550 = vunpack.c.l.b16 %v205
    %v551 = vunpack.c.h.b16 %v205
    %v552 = vunpack.c.l.b16 %v206
    %v553 = vunpack.c.h.b16 %v206
    %v554 = vunpack.c.l.b16 %v207
    %v555 = vunpack.c.h.b16 %v207
    %v556 = vunpack.c.l.b16 %v208
    %v557 = vunpack.c.h.b16 %v208
    %v558 = vunpack.c.l.b16 %v209
    %v559 = vunpack.c.h.b16 %v209
    %v560 = vunpack.c.l.b16 %v210
    %v561 = vunpack.c.h.b16 %v210
    %v562 = vunpack.c.l.b16 %v211
    %v563 = vunpack.c.h.b16 %v211
    %v564 = vunpack.c.l.b16 %v212
    %v565 = vunpack.c.h.b16 %v212
    %v566 = vunpack.c.l.b16 %v213
    %v567 = vunpack.c.h.b16 %v213
    %v568 = vunpack.c.l.b16 %v214
    %v569 = vunpack.c.h.b16 %v214
    %v570 = vunpack.c.l.b16 %v215
    %v571 = vunpack.c.h.b16 %v215
    %v572 = vunpack.c.l.b16 %v216
    %v573 = vunpack.c.h.b16 %v216
    %v574 = vunpack.c.l.b16 %v217
    %v575 = vunpack.c.h.b16 %v217
    %v576 = vunpack.c.l.b16 %v218
    %v577 = vunpack.c.h.b16 %v218
    %v578 = vunpack.c.l.b16 %v219
    %v579 = vunpack.c.h.b16 %v219
    %v580 = vunpack.c.l.b16 %v220
    %v581 = vunpack.c.h.b16 %v220
    %v582 = vunpack.c.l.b16 %v221
    %v583 = vunpack.c.h.b16 %v221
    %v584 = vunpack.c.l.b16 %v222
    %v585 = vunpack.c.h.b16 %v222
    %v586 = vunpack.c.l.b16 %v223
    %v587 = vunpack.c.h.b16 %v223
    %v588 = vunpack.c.l.b16 %v224
    %v589 = vunpack.c.h.b16 %v224
    %v590 = vunpack.c.l.b16 %v225
    %v591 = vunpack.c.h.b16 %v225
    %v592 = vunpack.c.l.b16 %v226
    %v593 = vunpack.c.h.b16 %v226
    %v594 = vunpack.c.l.b16 %v227
    %v595 = vunpack.c.h.b16 %v227
    %v596 = vunpack.c.l.b16 %v228
    %v597 = vunpack.c.h.b16 %v228
    %v598 = vunpack.c.l.b16 %v229
    %v599 = vunpack.c.h.b16 %v229
    %v600 = vunpack.c.l.b16 %v230
    %v601 = vunpack.c.h.b16 %v230
    %v602 = vunpack.c.l.b16 %v231
    %v603 = vunpack.c.h.b16 %v231
    %v604 = vunpack.c.l.b16 %v232
    %v605 = vunpack.c.h.b16 %v232
    %v606 = vunpack.c.l.b16 %v233
    %v607 = vunpack.c.h.b16 %v233
    %v608 = vunpack.c.l.b16 %v234
    %v609 = vunpack.c.h.b16 %v234
    %v610 = vunpack.c.l.b16 %v235
    %v611 = vunpack.c.h.b16 %v235
    %v612 = vunpack.c.l.b16 %v236
    %v613 = vunpack.c.h.b16 %v236
    %v614 = vunpack.c.l.b16 %v237
    %v615 = vunpack.c.h.b16 %v237
    %v616 = vunpack.c.l.b16 %v238
    %v617 = vunpack.c.h.b16 %v238
    %v618 = vunpack.c.l.b16 %v239
    %v619 = vunpack.c.h.b16 %v239
    %v620 = vunpack.c.l.b16 %v240
    %v621 = vunpack.c.h.b16 %v240
    %v622 = vunpack.c.l.b16 %v241
    %v623 = vunpack.c.h.b16 %v241
    %v624 = vunpack.c.l.b16 %v242
    %v625 = vunpack.c.h.b16 %v242
    %v626 = vunpack.c.l.b16 %v243
    %v627 = vunpack.c.h.b16 %v243
    %v628 = vunpack.c.l.b16 %v244
    %v629 = vunpack.c.h.b16 %v244
    %v630 = vunpack.c.l.b16 %v245
    %v631 = vunpack.c.h.b16 %v245
    %v632 = vunpack.c.l.b16 %v246
    %v633 = vunpack.c.h.b16 %v246
    %v634 = vunpack.c.l.b16 %v247
    %v635 = vunpack.c.h.b16 %v247
    %v636 = vunpack.c.l.b16 %v248
    %v637 = vunpack.c.h.b16 %v248
    %v638 = vunpack.c.l.b16 %v249
    %v639 = vunpack.c.h.b16 %v249
    %v640 = vunpack.c.l.b16 %v250
    %v641 = vunpack.c.h.b16 %v250
    %v642 = vunpack.c.l.b16 %v251
    %v643 = vunpack.c.h.b16 %v251
    %v644 = vunpack.c.l.b16 %v252
    %v645 = vunpack.c.h.b16 %v252
    %v646 = vunpack.c.l.b16 %v253
    %v647 = vunpack.c.h.b16 %v253
    %v648 = vunpack.c.l.b16 %v254
    %v649 = vunpack.c.h.b16 %v254
    %v650 = vunpack.c.l.b16 %v255
    %v651 = vunpack.c.h.b16 %v255
    %v652 = vunpack.c.l.b16 %v256
    %v653 = vunpack.c.h.b16 %v256
    %v654 = vunpack.c.l.b16 %v257
    %v655 = vunpack.c.h.b16 %v257
    %v656 = vunpack.c.l.b16 %v258
    %v657 = vunpack.c.h.b16 %v258
    %v658 = vunpack.c.l.b16 %v259
    %v659 = vunpack.c.h.b16 %v259
    %v660 = vunpack.c.l.b16 %v260
    %v661 = vunpack.c.h.b16 %v260
    %v662 = vunpack.c.l.b16 %v261
    %v663 = vunpack.c.h.b16 %v261
    %v664 = vunpack.c.l.b16 %v262
    %v665 = vunpack.c.h.b16 %v262
    %v666 = vunpack.c.l.b16 %v263
    %v667 = vunpack.c.h.b16 %v263
    %v668 = vunpack.c.l.b16 %v264
    %v669 = vunpack.c.h.b16 %v264
    %v670 = vunpack.c.l.b16 %v265
    %v671 = vunpack.c.h.b16 %v265
    %v672 = vunpack.c.l.b16 %v266
    %v673 = vunpack.c.h.b16 %v266
    %v674 = vunpack.c.l.b16 %v267
    %v675 = vunpack.c.h.b16 %v267
    %v676 = vunpack.c.l.b16 %v268
    %v677 = vunpack.c.h.b16 %v268
    %v678 = vunpack.c.l.b16 %v269
    %v679 = vunpack.c.h.b16 %v269
    %v680 = vunpack.c.l.b16 %v270
    %v681 = vunpack.c.h.b16 %v270
    %v682 = vunpack.c.l.b16 %v271
    %v683 = vunpack.c.h.b16 %v271
    %v684 = vpack.c.b16 %v436, %v428
    %v685 = vpack.c.b16 %v437, %v429
    %v686 = vpack.c.b16 %v438, %v430
    %v687 = vpack.c.b16 %v439, %v431
    %v688 = vpack.c.b16 %v440, %v432
    %v689 = vpack.c.b16 %v441, %v433
    %v690 = vpack.c.b16 %v442, %v434
    %v691 = vpack.c.b16 %v443, %v435
    %v692 = vpack.c.b16 %v452, %v444
    %v693 = vpack.c.b16 %v453, %v445
    %v694 = vpack.c.b16 %v454, %v446
    %v695 = vpack.c.b16 %v455, %v447
    %v696 = vpack.c.b16 %v456, %v448
    %v697 = vpack.c.b16 %v457, %v449
    %v698 = vpack.c.b16 %v458, %v450
    %v699 = vpack.c.b16 %v459, %v451
    %v700 = vpack.c.b16 %v468, %v460
    %v701 = vpack.c.b16 %v469, %v461
    %v702 = vpack.c.b16 %v470, %v462
    %v703 = vpack.c.b16 %v471, %v463
    %v704 = vpack.c.b16 %v472, %v464
    %v705 = vpack.c.b16 %v473, %v465
    %v706 = vpack.c.b16 %v474, %v466
    %v707 = vpack.c.b16 %v475, %v467
    %v708 = vpack.c.b16 %v484, %v476
    %v709 = vpack.c.b16 %v485, %v477
    %v710 = vpack.c.b16 %v486, %v478
    %v711 = vpack.c.b16 %v487, %v479
    %v712 = vpack.c.b16 %v488, %v480
    %v713 = vpack.c.b16 %v489, %v481
    %v714 = vpack.c.b16 %v490, %v482
    %v715 = vpack.c.b16 %v491, %v483
    %v716 = vpack.c.b16 %v500, %v492
    %v717 = vpack.c.b16 %v501, %v493
    %v718 = vpack.c.b16 %v502, %v494
    %v719 = vpack.c.b16 %v503, %v495
    %v720 = vpack.c.b16 %v504, %v496
    %v721 = vpack.c.b16 %v505, %v497
    %v722 = vpack.c.b16 %v506, %v498
    %v723 = vpack.c.b16 %v507, %v499
    %v724 = vpack.c.b16 %v516, %v508
    %v725 = vpack.c.b16 %v517, %v509
    %v726 = vpack.c.b16 %v518, %v510
    %v727 = vpack.c.b16 %v519, %v511
    %v728 = vpack.c.b16 %v520, %v512
    %v729 = vpack.c.b16 %v521, %v513
    %v730 = vpack.c.b16 %v522, %v514
    %v731 = vpack.c.b16 %v523, %v515
    %v732 = vpack.c.b16 %v532, %v524
    %v733 = vpack.c.b16 %v533, %v525
    %v734 = vpack.c.b16 %v534, %v526
    %v735 = vpack.c.b16 %v535, %v527
    %v736 = vpack.c.b16 %v536, %v528
    %v737 = vpack.c.b16 %v537, %v529
    %v738 = vpack.c.b16 %v538, %v530
    %v739 = vpack.c.b16 %v539, %v531
    %v740 = vpack.c.b16 %v548, %v540
    %v741 = vpack.c.b16 %v549, %v541
    %v742 = vpack.c.b16 %v550, %v542
    %v743 = vpack.c.b16 %v551, %v543
    %v744 = vpack.c.b16 %v552, %v544
    %v745 = vpack.c.b16 %v553, %v545
    %v746 = vpack.c.b16 %v554, %v546
    %v747 = vpack.c.b16 %v555, %v547
    %v748 = vpack.c.b16 %v564, %v556
    %v749 = vpack.c.b16 %v565, %v557
    %v750 = vpack.c.b16 %v566, %v558
    %v751 = vpack.c.b16 %v567, %v559
    %v752 = vpack.c.b16 %v568, %v560
    %v753 = vpack.c.b16 %v569, %v561
    %v754 = vpack.c.b16 %v570, %v562
    %v755 = vpack.c.b16 %v571, %v563
    %v756 = vpack.c.b16 %v580, %v572
    %v757 = vpack.c.b16 %v581, %v573
    %v758 = vpack.c.b16 %v582, %v574
    %v759 = vpack.c.b16 %v583, %v575
    %v760 = vpack.c.b16 %v584, %v576
    %v761 = vpack.c.b16 %v585, %v577
    %v762 = vpack.c.b16 %v586, %v578
    %v763 = vpack.c.b16 %v587, %v579
    %v764 = vpack.c.b16 %v596, %v588
    %v765 = vpack.c.b16 %v597, %v589
    %v766 = vpack.c.b16 %v598, %v590
    %v767 = vpack.c.b16 %v599, %v591
    %v768 = vpack.c.b16 %v600, %v592
    %v769 = vpack.c.b16 %v601, %v593
    %v770 = vpack.c.b16 %v602, %v594
    %v771 = vpack.c.b16 %v603, %v595
    %v772 = vpack.c.b16 %v612, %v604
    %v773 = vpack.c.b16 %v613, %v605
    %v774 = vpack.c.b16 %v614, %v606
    %v775 = vpack.c.b16 %v615, %v607
    %v776 = vpack.c.b16 %v616, %v608
    %v777 = vpack.c.b16 %v617, %v609
    %v778 = vpack.c.b16 %v618, %v610
    %v779 = vpack.c.b16 %v619, %v611
    %v780 = vpack.c.b16 %v628, %v620
    %v781 = vpack.c.b16 %v629, %v621
    %v782 = vpack.c.b16 %v630, %v622
    %v783 = vpack.c.b16 %v631, %v623
    %v784 = vpack.c.b16 %v632, %v624
    %v785 = vpack.c.b16 %v633, %v625
    %v786 = vpack.c.b16 %v634, %v626
    %v787 = vpack.c.b16 %v635, %v627
    %v788 = vpack.c.b16 %v644, %v636
    %v789 = vpack.c.b16 %v645, %v637
    %v790 = vpack.c.b16 %v646, %v638
    %v791 = vpack.c.b16 %v647, %v639
    %v792 = vpack.c.b16 %v648, %v640
    %v793 = vpack.c.b16 %v649, %v641
    %v794 = vpack.c.b16 %v650, %v642
    %v795 = vpack.c.b16 %v651, %v643
    %v796 = vpack.c.b16 %v660, %v652
    %v797 = vpack.c.b16 %v661, %v653
    %v798 = vpack.c.b16 %v662, %v654
    %v799 = vpack.c.b16 %v663, %v655
    %v800 = vpack.c.b16 %v664, %v656
    %v801 = vpack.c.b16 %v665, %v657
    %v802 = vpack.c.b16 %v666, %v658
    %v803 = vpack.c.b16 %v667, %v659
    %v804 = vpack.c.b16 %v676, %v668
    %v805 = vpack.c.b16 %v677, %v669
    %v806 = vpack.c.b16 %v678, %v670
    %v807 = vpack.c.b16 %v679, %v671
    %v808 = vpack.c.b16 %v680, %v672
    %v809 = vpack.c.b16 %v681, %v673
    %v810 = vpack.c.b16 %v682, %v674
    %v811 = vpack.c.b16 %v683, %v675
    %940 = vmatpush.bf16.msra.mxu0 %v740
    %941 = vmatpush.bf16.msra.mxu0 %v732
    %942 = vmatpush.bf16.msra.mxu0 %v724
    %943 = vmatpush.bf16.msra.mxu0 %v716
    %944 = vmatpush.bf16.msra.mxu0 %v708
    %945 = vmatpush.bf16.msra.mxu0 %v700
    %946 = vmatpush.bf16.msra.mxu0 %v692
    %947 = vmatpush.bf16.msra.mxu0 %v684
    %948 = vmatmul.bf16.gmra.mxu0 %v296
    %v949 = vpop.f32.mrf.mxu0
    %v950 = vadd.f32 %v274, %v949
    %v951 = vpop.f32.mrf.mxu0
    %v952 = vadd.f32 %v274, %v951
    %953 = vdwg.mxu0
    %954 = vmatpush.bf16.msra.mxu0 %v804
    %955 = vmatpush.bf16.msra.mxu0 %v796
    %956 = vmatpush.bf16.msra.mxu0 %v788
    %957 = vmatpush.bf16.msra.mxu0 %v780
    %958 = vmatpush.bf16.msra.mxu0 %v772
    %959 = vmatpush.bf16.msra.mxu0 %v764
    %960 = vmatpush.bf16.msra.mxu0 %v756
    %961 = vmatpush.bf16.msra.mxu0 %v748
    %962 = vmatmul.bf16.gmra.mxu0 %v297
    %v963 = vpop.f32.mrf.mxu0
    %v964 = vadd.f32 %v950, %v963
    %v965 = vpop.f32.mrf.mxu0
    %v966 = vadd.f32 %v952, %v965
    %967 = vdwg.mxu0
    %968 = vmatpush.bf16.msra.mxu0 %v741
    %969 = vmatpush.bf16.msra.mxu0 %v733
    %970 = vmatpush.bf16.msra.mxu0 %v725
    %971 = vmatpush.bf16.msra.mxu0 %v717
    %972 = vmatpush.bf16.msra.mxu0 %v709
    %973 = vmatpush.bf16.msra.mxu0 %v701
    %974 = vmatpush.bf16.msra.mxu0 %v693
    %975 = vmatpush.bf16.msra.mxu0 %v685
    %976 = vmatmul.bf16.gmra.mxu0 %v296
    %v977 = vpop.f32.mrf.mxu0
    %v978 = vadd.f32 %v275, %v977
    %v979 = vpop.f32.mrf.mxu0
    %v980 = vadd.f32 %v275, %v979
    %981 = vdwg.mxu0
    %982 = vmatpush.bf16.msra.mxu0 %v805
    %983 = vmatpush.bf16.msra.mxu0 %v797
    %984 = vmatpush.bf16.msra.mxu0 %v789
    %985 = vmatpush.bf16.msra.mxu0 %v781
    %986 = vmatpush.bf16.msra.mxu0 %v773
    %987 = vmatpush.bf16.msra.mxu0 %v765
    %988 = vmatpush.bf16.msra.mxu0 %v757
    %989 = vmatpush.bf16.msra.mxu0 %v749
    %990 = vmatmul.bf16.gmra.mxu0 %v297
    %v991 = vpop.f32.mrf.mxu0
    %v992 = vadd.f32 %v978, %v991
    %v993 = vpop.f32.mrf.mxu0
    %v994 = vadd.f32 %v980, %v993
    %995 = vdwg.mxu0
    %996 = vmatpush.bf16.msra.mxu0 %v742
    %997 = vmatpush.bf16.msra.mxu0 %v734
    %998 = vmatpush.bf16.msra.mxu0 %v726
    %999 = vmatpush.bf16.msra.mxu0 %v718
    %1000 = vmatpush.bf16.msra.mxu0 %v710
    %1001 = vmatpush.bf16.msra.mxu0 %v702
    %1002 = vmatpush.bf16.msra.mxu0 %v694
    %1003 = vmatpush.bf16.msra.mxu0 %v686
    %1004 = vmatmul.bf16.gmra.mxu0 %v296
    %v1005 = vpop.f32.mrf.mxu0
    %v1006 = vadd.f32 %v276, %v1005
    %v1007 = vpop.f32.mrf.mxu0
    %v1008 = vadd.f32 %v276, %v1007
    %1009 = vdwg.mxu0
    %1010 = vmatpush.bf16.msra.mxu0 %v806
    %1011 = vmatpush.bf16.msra.mxu0 %v798
    %1012 = vmatpush.bf16.msra.mxu0 %v790
    %1013 = vmatpush.bf16.msra.mxu0 %v782
    %1014 = vmatpush.bf16.msra.mxu0 %v774
    %1015 = vmatpush.bf16.msra.mxu0 %v766
    %1016 = vmatpush.bf16.msra.mxu0 %v758
    %1017 = vmatpush.bf16.msra.mxu0 %v750
    %1018 = vmatmul.bf16.gmra.mxu0 %v297
    %v1019 = vpop.f32.mrf.mxu0
    %v1020 = vadd.f32 %v1006, %v1019
    %v1021 = vpop.f32.mrf.mxu0
    %v1022 = vadd.f32 %v1008, %v1021
    %1023 = vdwg.mxu0
    %1024 = vmatpush.bf16.msra.mxu0 %v743
    %1025 = vmatpush.bf16.msra.mxu0 %v735
    %1026 = vmatpush.bf16.msra.mxu0 %v727
    %1027 = vmatpush.bf16.msra.mxu0 %v719
    %1028 = vmatpush.bf16.msra.mxu0 %v711
    %1029 = vmatpush.bf16.msra.mxu0 %v703
    %1030 = vmatpush.bf16.msra.mxu0 %v695
    %1031 = vmatpush.bf16.msra.mxu0 %v687
    %1032 = vmatmul.bf16.gmra.mxu0 %v296
    %v1033 = vpop.f32.mrf.mxu0
    %v1034 = vadd.f32 %v277, %v1033
    %v1035 = vpop.f32.mrf.mxu0
    %v1036 = vadd.f32 %v277, %v1035
    %1037 = vdwg.mxu0
    %1038 = vmatpush.bf16.msra.mxu0 %v807
    %1039 = vmatpush.bf16.msra.mxu0 %v799
    %1040 = vmatpush.bf16.msra.mxu0 %v791
    %1041 = vmatpush.bf16.msra.mxu0 %v783
    %1042 = vmatpush.bf16.msra.mxu0 %v775
    %1043 = vmatpush.bf16.msra.mxu0 %v767
    %1044 = vmatpush.bf16.msra.mxu0 %v759
    %1045 = vmatpush.bf16.msra.mxu0 %v751
    %1046 = vmatmul.bf16.gmra.mxu0 %v297
    %v1047 = vpop.f32.mrf.mxu0
    %v1048 = vadd.f32 %v1034, %v1047
    %v1049 = vpop.f32.mrf.mxu0
    %v1050 = vadd.f32 %v1036, %v1049
    %1051 = vdwg.mxu0
    %1052 = vmatpush.bf16.msra.mxu0 %v744
    %1053 = vmatpush.bf16.msra.mxu0 %v736
    %1054 = vmatpush.bf16.msra.mxu0 %v728
    %1055 = vmatpush.bf16.msra.mxu0 %v720
    %1056 = vmatpush.bf16.msra.mxu0 %v712
    %1057 = vmatpush.bf16.msra.mxu0 %v704
    %1058 = vmatpush.bf16.msra.mxu0 %v696
    %1059 = vmatpush.bf16.msra.mxu0 %v688
    %1060 = vmatmul.bf16.gmra.mxu0 %v296
    %v1061 = vpop.f32.mrf.mxu0
    %v1062 = vadd.f32 %v278, %v1061
    %v1063 = vpop.f32.mrf.mxu0
    %v1064 = vadd.f32 %v278, %v1063
    %1065 = vdwg.mxu0
    %1066 = vmatpush.bf16.msra.mxu0 %v808
    %1067 = vmatpush.bf16.msra.mxu0 %v800
    %1068 = vmatpush.bf16.msra.mxu0 %v792
    %1069 = vmatpush.bf16.msra.mxu0 %v784
    %1070 = vmatpush.bf16.msra.mxu0 %v776
    %1071 = vmatpush.bf16.msra.mxu0 %v768
    %1072 = vmatpush.bf16.msra.mxu0 %v760
    %1073 = vmatpush.bf16.msra.mxu0 %v752
    %1074 = vmatmul.bf16.gmra.mxu0 %v297
    %v1075 = vpop.f32.mrf.mxu0
    %v1076 = vadd.f32 %v1062, %v1075
    %v1077 = vpop.f32.mrf.mxu0
    %v1078 = vadd.f32 %v1064, %v1077
    %1079 = vdwg.mxu0
    %1080 = vmatpush.bf16.msra.mxu0 %v745
    %1081 = vmatpush.bf16.msra.mxu0 %v737
    %1082 = vmatpush.bf16.msra.mxu0 %v729
    %1083 = vmatpush.bf16.msra.mxu0 %v721
    %1084 = vmatpush.bf16.msra.mxu0 %v713
    %1085 = vmatpush.bf16.msra.mxu0 %v705
    %1086 = vmatpush.bf16.msra.mxu0 %v697
    %1087 = vmatpush.bf16.msra.mxu0 %v689
    %1088 = vmatmul.bf16.gmra.mxu0 %v296
    %v1089 = vpop.f32.mrf.mxu0
    %v1090 = vadd.f32 %v279, %v1089
    %v1091 = vpop.f32.mrf.mxu0
    %v1092 = vadd.f32 %v279, %v1091
    %1093 = vdwg.mxu0
    %1094 = vmatpush.bf16.msra.mxu0 %v809
    %1095 = vmatpush.bf16.msra.mxu0 %v801
    %1096 = vmatpush.bf16.msra.mxu0 %v793
    %1097 = vmatpush.bf16.msra.mxu0 %v785
    %1098 = vmatpush.bf16.msra.mxu0 %v777
    %1099 = vmatpush.bf16.msra.mxu0 %v769
    %1100 = vmatpush.bf16.msra.mxu0 %v761
    %1101 = vmatpush.bf16.msra.mxu0 %v753
    %1102 = vmatmul.bf16.gmra.mxu0 %v297
    %v1103 = vpop.f32.mrf.mxu0
    %v1104 = vadd.f32 %v1090, %v1103
    %v1105 = vpop.f32.mrf.mxu0
    %v1106 = vadd.f32 %v1092, %v1105
    %1107 = vdwg.mxu0
    %1108 = vmatpush.bf16.msra.mxu0 %v746
    %1109 = vmatpush.bf16.msra.mxu0 %v738
    %1110 = vmatpush.bf16.msra.mxu0 %v730
    %1111 = vmatpush.bf16.msra.mxu0 %v722
    %1112 = vmatpush.bf16.msra.mxu0 %v714
    %1113 = vmatpush.bf16.msra.mxu0 %v706
    %1114 = vmatpush.bf16.msra.mxu0 %v698
    %1115 = vmatpush.bf16.msra.mxu0 %v690
    %1116 = vmatmul.bf16.gmra.mxu0 %v296
    %v1117 = vpop.f32.mrf.mxu0
    %v1118 = vadd.f32 %v280, %v1117
    %v1119 = vpop.f32.mrf.mxu0
    %v1120 = vadd.f32 %v280, %v1119
    %1121 = vdwg.mxu0
    %1122 = vmatpush.bf16.msra.mxu0 %v810
    %1123 = vmatpush.bf16.msra.mxu0 %v802
    %1124 = vmatpush.bf16.msra.mxu0 %v794
    %1125 = vmatpush.bf16.msra.mxu0 %v786
    %1126 = vmatpush.bf16.msra.mxu0 %v778
    %1127 = vmatpush.bf16.msra.mxu0 %v770
    %1128 = vmatpush.bf16.msra.mxu0 %v762
    %1129 = vmatpush.bf16.msra.mxu0 %v754
    %1130 = vmatmul.bf16.gmra.mxu0 %v297
    %v1131 = vpop.f32.mrf.mxu0
    %v1132 = vadd.f32 %v1118, %v1131
    %v1133 = vpop.f32.mrf.mxu0
    %v1134 = vadd.f32 %v1120, %v1133
    %1135 = vdwg.mxu0
    %1136 = vmatpush.bf16.msra.mxu0 %v747
    %1137 = vmatpush.bf16.msra.mxu0 %v739
    %1138 = vmatpush.bf16.msra.mxu0 %v731
    %1139 = vmatpush.bf16.msra.mxu0 %v723
    %1140 = vmatpush.bf16.msra.mxu0 %v715
    %1141 = vmatpush.bf16.msra.mxu0 %v707
    %1142 = vmatpush.bf16.msra.mxu0 %v699
    %1143 = vmatpush.bf16.msra.mxu0 %v691
    %1144 = vmatmul.bf16.gmra.mxu0 %v296
    %v1145 = vpop.f32.mrf.mxu0
    %v1146 = vadd.f32 %v281, %v1145
    %v1147 = vpop.f32.mrf.mxu0
    %v1148 = vadd.f32 %v281, %v1147
    %1149 = vdwg.mxu0
    %1150 = vmatpush.bf16.msra.mxu0 %v811
    %1151 = vmatpush.bf16.msra.mxu0 %v803
    %1152 = vmatpush.bf16.msra.mxu0 %v795
    %1153 = vmatpush.bf16.msra.mxu0 %v787
    %1154 = vmatpush.bf16.msra.mxu0 %v779
    %1155 = vmatpush.bf16.msra.mxu0 %v771
    %1156 = vmatpush.bf16.msra.mxu0 %v763
    %1157 = vmatpush.bf16.msra.mxu0 %v755
    %1158 = vmatmul.bf16.gmra.mxu0 %v297
    %v1159 = vpop.f32.mrf.mxu0
    %v1160 = vadd.f32 %v1146, %v1159
    %v1161 = vpop.f32.mrf.mxu0
    %v1162 = vadd.f32 %v1148, %v1161
    %1163 = vdwg.mxu0
    %v1164 = vmax.f32 %v964, 0.0
    %v1165 = vmax.f32 %v992, 0.0
    %v1166 = vmax.f32 %v1020, 0.0
    %v1167 = vmax.f32 %v1048, 0.0
    %v1168 = vmax.f32 %v1076, 0.0
    %v1169 = vmax.f32 %v1104, 0.0
    %v1170 = vmax.f32 %v1132, 0.0
    %v1171 = vmax.f32 %v1160, 0.0
    %v1172 = vmax.f32 %v966, 0.0
    %v1173 = vmax.f32 %v994, 0.0
    %v1174 = vmax.f32 %v1022, 0.0
    %v1175 = vmax.f32 %v1050, 0.0
    %v1176 = vmax.f32 %v1078, 0.0
    %v1177 = vmax.f32 %v1106, 0.0
    %v1178 = vmax.f32 %v1134, 0.0
    %v1179 = vmax.f32 %v1162, 0.0
    %v1180 = vpack.c.bf16 %v1172, %v1164
    %v1181 = vpack.c.bf16 %v1173, %v1165
    %v1182 = vpack.c.bf16 %v1174, %v1166
    %v1183 = vpack.c.bf16 %v1175, %v1167
    %v1184 = vpack.c.bf16 %v1176, %v1168
    %v1185 = vpack.c.bf16 %v1177, %v1169
    %v1186 = vpack.c.bf16 %v1178, %v1170
    %v1187 = vpack.c.bf16 %v1179, %v1171
    %v1188 = vld [vmem:[#allocation5] sm:$0xff]
    %v1189 = vld [vmem:[#allocation5 + $0x8] sm:$0xff]
    %v1190 = vld [vmem:[#allocation5 + $0x10] sm:$0xff]
    %v1191 = vld [vmem:[#allocation5 + $0x18] sm:$0xff]
    %v1192 = vld [vmem:[#allocation5 + $0x20] sm:$0xff]
    %v1193 = vld [vmem:[#allocation5 + $0x28] sm:$0xff]
    %v1194 = vld [vmem:[#allocation5 + $0x30] sm:$0xff]
    %v1195 = vld [vmem:[#allocation5 + $0x38] sm:$0xff]
    %v1196 = vld [vmem:[#allocation5 + $0x40] sm:$0xff]
    %v1197 = vld [vmem:[#allocation5 + $0x48] sm:$0xff]
    %v1198 = vld [vmem:[#allocation5 + $0x50] sm:$0xff]
    %v1199 = vld [vmem:[#allocation5 + $0x58] sm:$0xff]
    %v1200 = vld [vmem:[#allocation5 + $0x60] sm:$0xff]
    %v1201 = vld [vmem:[#allocation5 + $0x68] sm:$0xff]
    %v1202 = vld [vmem:[#allocation5 + $0x70] sm:$0xff]
    %v1203 = vld [vmem:[#allocation5 + $0x78] sm:$0xff]
    %v1204 = vld [vmem:[#allocation5 + $0x80] sm:$0xff]
    %v1205 = vld [vmem:[#allocation5 + $0x88] sm:$0xff]
    %v1206 = vld [vmem:[#allocation5 + $0x90] sm:$0xff]
    %v1207 = vld [vmem:[#allocation5 + $0x98] sm:$0xff]
    %v1208 = vld [vmem:[#allocation5 + $0xa0] sm:$0xff]
    %v1209 = vld [vmem:[#allocation5 + $0xa8] sm:$0xff]
    %v1210 = vld [vmem:[#allocation5 + $0xb0] sm:$0xff]
    %v1211 = vld [vmem:[#allocation5 + $0xb8] sm:$0xff]
    %v1212 = vld [vmem:[#allocation5 + $0xc0] sm:$0xff]
    %v1213 = vld [vmem:[#allocation5 + $0xc8] sm:$0xff]
    %v1214 = vld [vmem:[#allocation5 + $0xd0] sm:$0xff]
    %v1215 = vld [vmem:[#allocation5 + $0xd8] sm:$0xff]
    %v1216 = vld [vmem:[#allocation5 + $0xe0] sm:$0xff]
    %v1217 = vld [vmem:[#allocation5 + $0xe8] sm:$0xff]
    %v1218 = vld [vmem:[#allocation5 + $0xf0] sm:$0xff]
    %v1219 = vld [vmem:[#allocation5 + $0xf8] sm:$0xff]
    %v1220 = vld [vmem:[#allocation5 + $0x100] sm:$0xff]
    %v1221 = vld [vmem:[#allocation5 + $0x108] sm:$0xff]
    %v1222 = vld [vmem:[#allocation5 + $0x110] sm:$0xff]
    %v1223 = vld [vmem:[#allocation5 + $0x118] sm:$0xff]
    %v1224 = vld [vmem:[#allocation5 + $0x120] sm:$0xff]
    %v1225 = vld [vmem:[#allocation5 + $0x128] sm:$0xff]
    %v1226 = vld [vmem:[#allocation5 + $0x130] sm:$0xff]
    %v1227 = vld [vmem:[#allocation5 + $0x138] sm:$0xff]
    %v1228 = vld [vmem:[#allocation5 + $0x140] sm:$0xff]
    %v1229 = vld [vmem:[#allocation5 + $0x148] sm:$0xff]
    %v1230 = vld [vmem:[#allocation5 + $0x150] sm:$0xff]
    %v1231 = vld [vmem:[#allocation5 + $0x158] sm:$0xff]
    %v1232 = vld [vmem:[#allocation5 + $0x160] sm:$0xff]
    %v1233 = vld [vmem:[#allocation5 + $0x168] sm:$0xff]
    %v1234 = vld [vmem:[#allocation5 + $0x170] sm:$0xff]
    %v1235 = vld [vmem:[#allocation5 + $0x178] sm:$0xff]
    %v1236 = vld [vmem:[#allocation5 + $0x180] sm:$0xff]
    %v1237 = vld [vmem:[#allocation5 + $0x188] sm:$0xff]
    %v1238 = vld [vmem:[#allocation5 + $0x190] sm:$0xff]
    %v1239 = vld [vmem:[#allocation5 + $0x198] sm:$0xff]
    %v1240 = vld [vmem:[#allocation5 + $0x1a0] sm:$0xff]
    %v1241 = vld [vmem:[#allocation5 + $0x1a8] sm:$0xff]
    %v1242 = vld [vmem:[#allocation5 + $0x1b0] sm:$0xff]
    %v1243 = vld [vmem:[#allocation5 + $0x1b8] sm:$0xff]
    %v1244 = vld [vmem:[#allocation5 + $0x1c0] sm:$0xff]
    %v1245 = vld [vmem:[#allocation5 + $0x1c8] sm:$0xff]
    %v1246 = vld [vmem:[#allocation5 + $0x1d0] sm:$0xff]
    %v1247 = vld [vmem:[#allocation5 + $0x1d8] sm:$0xff]
    %v1248 = vld [vmem:[#allocation5 + $0x1e0] sm:$0xff]
    %v1249 = vld [vmem:[#allocation5 + $0x1e8] sm:$0xff]
    %v1250 = vld [vmem:[#allocation5 + $0x1f0] sm:$0xff]
    %v1251 = vld [vmem:[#allocation5 + $0x1f8] sm:$0xff]
    %v1252 = vld [vmem:[#allocation5 + $0x200] sm:$0xff]
    %v1253 = vld [vmem:[#allocation5 + $0x208] sm:$0xff]
    %v1254 = vld [vmem:[#allocation5 + $0x210] sm:$0xff]
    %v1255 = vld [vmem:[#allocation5 + $0x218] sm:$0xff]
    %v1256 = vld [vmem:[#allocation5 + $0x220] sm:$0xff]
    %v1257 = vld [vmem:[#allocation5 + $0x228] sm:$0xff]
    %v1258 = vld [vmem:[#allocation5 + $0x230] sm:$0xff]
    %v1259 = vld [vmem:[#allocation5 + $0x238] sm:$0xff]
    %v1260 = vld [vmem:[#allocation5 + $0x240] sm:$0xff]
    %v1261 = vld [vmem:[#allocation5 + $0x248] sm:$0xff]
    %v1262 = vld [vmem:[#allocation5 + $0x250] sm:$0xff]
    %v1263 = vld [vmem:[#allocation5 + $0x258] sm:$0xff]
    %v1264 = vld [vmem:[#allocation5 + $0x260] sm:$0xff]
    %v1265 = vld [vmem:[#allocation5 + $0x268] sm:$0xff]
    %v1266 = vld [vmem:[#allocation5 + $0x270] sm:$0xff]
    %v1267 = vld [vmem:[#allocation5 + $0x278] sm:$0xff]
    %v1268 = vld [vmem:[#allocation5 + $0x280] sm:$0xff]
    %v1269 = vld [vmem:[#allocation5 + $0x288] sm:$0xff]
    %v1270 = vld [vmem:[#allocation5 + $0x290] sm:$0xff]
    %v1271 = vld [vmem:[#allocation5 + $0x298] sm:$0xff]
    %v1272 = vld [vmem:[#allocation5 + $0x2a0] sm:$0xff]
    %v1273 = vld [vmem:[#allocation5 + $0x2a8] sm:$0xff]
    %v1274 = vld [vmem:[#allocation5 + $0x2b0] sm:$0xff]
    %v1275 = vld [vmem:[#allocation5 + $0x2b8] sm:$0xff]
    %v1276 = vld [vmem:[#allocation5 + $0x2c0] sm:$0xff]
    %v1277 = vld [vmem:[#allocation5 + $0x2c8] sm:$0xff]
    %v1278 = vld [vmem:[#allocation5 + $0x2d0] sm:$0xff]
    %v1279 = vld [vmem:[#allocation5 + $0x2d8] sm:$0xff]
    %v1280 = vld [vmem:[#allocation5 + $0x2e0] sm:$0xff]
    %v1281 = vld [vmem:[#allocation5 + $0x2e8] sm:$0xff]
    %v1282 = vld [vmem:[#allocation5 + $0x2f0] sm:$0xff]
    %v1283 = vld [vmem:[#allocation5 + $0x2f8] sm:$0xff]
    %v1284 = vld [vmem:[#allocation5 + $0x300] sm:$0xff]
    %v1285 = vld [vmem:[#allocation5 + $0x308] sm:$0xff]
    %v1286 = vld [vmem:[#allocation5 + $0x310] sm:$0xff]
    %v1287 = vld [vmem:[#allocation5 + $0x318] sm:$0xff]
    %v1288 = vld [vmem:[#allocation5 + $0x320] sm:$0xff]
    %v1289 = vld [vmem:[#allocation5 + $0x328] sm:$0xff]
    %v1290 = vld [vmem:[#allocation5 + $0x330] sm:$0xff]
    %v1291 = vld [vmem:[#allocation5 + $0x338] sm:$0xff]
    %v1292 = vld [vmem:[#allocation5 + $0x340] sm:$0xff]
    %v1293 = vld [vmem:[#allocation5 + $0x348] sm:$0xff]
    %v1294 = vld [vmem:[#allocation5 + $0x350] sm:$0xff]
    %v1295 = vld [vmem:[#allocation5 + $0x358] sm:$0xff]
    %v1296 = vld [vmem:[#allocation5 + $0x360] sm:$0xff]
    %v1297 = vld [vmem:[#allocation5 + $0x368] sm:$0xff]
    %v1298 = vld [vmem:[#allocation5 + $0x370] sm:$0xff]
    %v1299 = vld [vmem:[#allocation5 + $0x378] sm:$0xff]
    %v1300 = vld [vmem:[#allocation5 + $0x380] sm:$0xff]
    %v1301 = vld [vmem:[#allocation5 + $0x388] sm:$0xff]
    %v1302 = vld [vmem:[#allocation5 + $0x390] sm:$0xff]
    %v1303 = vld [vmem:[#allocation5 + $0x398] sm:$0xff]
    %v1304 = vld [vmem:[#allocation5 + $0x3a0] sm:$0xff]
    %v1305 = vld [vmem:[#allocation5 + $0x3a8] sm:$0xff]
    %v1306 = vld [vmem:[#allocation5 + $0x3b0] sm:$0xff]
    %v1307 = vld [vmem:[#allocation5 + $0x3b8] sm:$0xff]
    %v1308 = vld [vmem:[#allocation5 + $0x3c0] sm:$0xff]
    %v1309 = vld [vmem:[#allocation5 + $0x3c8] sm:$0xff]
    %v1310 = vld [vmem:[#allocation5 + $0x3d0] sm:$0xff]
    %v1311 = vld [vmem:[#allocation5 + $0x3d8] sm:$0xff]
    %v1312 = vld [vmem:[#allocation5 + $0x3e0] sm:$0xff]
    %v1313 = vld [vmem:[#allocation5 + $0x3e8] sm:$0xff]
    %v1314 = vld [vmem:[#allocation5 + $0x3f0] sm:$0xff]
    %v1315 = vld [vmem:[#allocation5 + $0x3f8] sm:$0xff]
    %v1316 = vld [vmem:[#allocation5 + $0x400] sm:$0xff]
    %v1317 = vld [vmem:[#allocation5 + $0x408] sm:$0xff]
    %v1318 = vld [vmem:[#allocation5 + $0x410] sm:$0xff]
    %v1319 = vld [vmem:[#allocation5 + $0x418] sm:$0xff]
    %v1320 = vld [vmem:[#allocation5 + $0x420] sm:$0xff]
    %v1321 = vld [vmem:[#allocation5 + $0x428] sm:$0xff]
    %v1322 = vld [vmem:[#allocation5 + $0x430] sm:$0xff]
    %v1323 = vld [vmem:[#allocation5 + $0x438] sm:$0xff]
    %v1324 = vld [vmem:[#allocation5 + $0x440] sm:$0xff]
    %v1325 = vld [vmem:[#allocation5 + $0x448] sm:$0xff]
    %v1326 = vld [vmem:[#allocation5 + $0x450] sm:$0xff]
    %v1327 = vld [vmem:[#allocation5 + $0x458] sm:$0xff]
    %v1328 = vld [vmem:[#allocation5 + $0x460] sm:$0xff]
    %v1329 = vld [vmem:[#allocation5 + $0x468] sm:$0xff]
    %v1330 = vld [vmem:[#allocation5 + $0x470] sm:$0xff]
    %v1331 = vld [vmem:[#allocation5 + $0x478] sm:$0xff]
    %v1332 = vld [vmem:[#allocation5 + $0x480] sm:$0xff]
    %v1333 = vld [vmem:[#allocation5 + $0x488] sm:$0xff]
    %v1334 = vld [vmem:[#allocation5 + $0x490] sm:$0xff]
    %v1335 = vld [vmem:[#allocation5 + $0x498] sm:$0xff]
    %v1336 = vld [vmem:[#allocation5 + $0x4a0] sm:$0xff]
    %v1337 = vld [vmem:[#allocation5 + $0x4a8] sm:$0xff]
    %v1338 = vld [vmem:[#allocation5 + $0x4b0] sm:$0xff]
    %v1339 = vld [vmem:[#allocation5 + $0x4b8] sm:$0xff]
    %v1340 = vld [vmem:[#allocation5 + $0x4c0] sm:$0xff]
    %v1341 = vld [vmem:[#allocation5 + $0x4c8] sm:$0xff]
    %v1342 = vld [vmem:[#allocation5 + $0x4d0] sm:$0xff]
    %v1343 = vld [vmem:[#allocation5 + $0x4d8] sm:$0xff]
    %v1344 = vld [vmem:[#allocation5 + $0x4e0] sm:$0xff]
    %v1345 = vld [vmem:[#allocation5 + $0x4e8] sm:$0xff]
    %v1346 = vld [vmem:[#allocation5 + $0x4f0] sm:$0xff]
    %v1347 = vld [vmem:[#allocation5 + $0x4f8] sm:$0xff]
    %v1348 = vld [vmem:[#allocation5 + $0x500] sm:$0xff]
    %v1349 = vld [vmem:[#allocation5 + $0x508] sm:$0xff]
    %v1350 = vld [vmem:[#allocation5 + $0x510] sm:$0xff]
    %v1351 = vld [vmem:[#allocation5 + $0x518] sm:$0xff]
    %v1352 = vld [vmem:[#allocation5 + $0x520] sm:$0xff]
    %v1353 = vld [vmem:[#allocation5 + $0x528] sm:$0xff]
    %v1354 = vld [vmem:[#allocation5 + $0x530] sm:$0xff]
    %v1355 = vld [vmem:[#allocation5 + $0x538] sm:$0xff]
    %v1356 = vld [vmem:[#allocation5 + $0x540] sm:$0xff]
    %v1357 = vld [vmem:[#allocation5 + $0x548] sm:$0xff]
    %v1358 = vld [vmem:[#allocation5 + $0x550] sm:$0xff]
    %v1359 = vld [vmem:[#allocation5 + $0x558] sm:$0xff]
    %v1360 = vld [vmem:[#allocation5 + $0x560] sm:$0xff]
    %v1361 = vld [vmem:[#allocation5 + $0x568] sm:$0xff]
    %v1362 = vld [vmem:[#allocation5 + $0x570] sm:$0xff]
    %v1363 = vld [vmem:[#allocation5 + $0x578] sm:$0xff]
    %v1364 = vld [vmem:[#allocation5 + $0x580] sm:$0xff]
    %v1365 = vld [vmem:[#allocation5 + $0x588] sm:$0xff]
    %v1366 = vld [vmem:[#allocation5 + $0x590] sm:$0xff]
    %v1367 = vld [vmem:[#allocation5 + $0x598] sm:$0xff]
    %v1368 = vld [vmem:[#allocation5 + $0x5a0] sm:$0xff]
    %v1369 = vld [vmem:[#allocation5 + $0x5a8] sm:$0xff]
    %v1370 = vld [vmem:[#allocation5 + $0x5b0] sm:$0xff]
    %v1371 = vld [vmem:[#allocation5 + $0x5b8] sm:$0xff]
    %v1372 = vld [vmem:[#allocation5 + $0x5c0] sm:$0xff]
    %v1373 = vld [vmem:[#allocation5 + $0x5c8] sm:$0xff]
    %v1374 = vld [vmem:[#allocation5 + $0x5d0] sm:$0xff]
    %v1375 = vld [vmem:[#allocation5 + $0x5d8] sm:$0xff]
    %v1376 = vld [vmem:[#allocation5 + $0x5e0] sm:$0xff]
    %v1377 = vld [vmem:[#allocation5 + $0x5e8] sm:$0xff]
    %v1378 = vld [vmem:[#allocation5 + $0x5f0] sm:$0xff]
    %v1379 = vld [vmem:[#allocation5 + $0x5f8] sm:$0xff]
    %v1380 = vld [vmem:[#allocation5 + $0x600] sm:$0xff]
    %v1381 = vld [vmem:[#allocation5 + $0x608] sm:$0xff]
    %v1382 = vld [vmem:[#allocation5 + $0x610] sm:$0xff]
    %v1383 = vld [vmem:[#allocation5 + $0x618] sm:$0xff]
    %v1384 = vld [vmem:[#allocation5 + $0x620] sm:$0xff]
    %v1385 = vld [vmem:[#allocation5 + $0x628] sm:$0xff]
    %v1386 = vld [vmem:[#allocation5 + $0x630] sm:$0xff]
    %v1387 = vld [vmem:[#allocation5 + $0x638] sm:$0xff]
    %v1388 = vld [vmem:[#allocation5 + $0x640] sm:$0xff]
    %v1389 = vld [vmem:[#allocation5 + $0x648] sm:$0xff]
    %v1390 = vld [vmem:[#allocation5 + $0x650] sm:$0xff]
    %v1391 = vld [vmem:[#allocation5 + $0x658] sm:$0xff]
    %v1392 = vld [vmem:[#allocation5 + $0x660] sm:$0xff]
    %v1393 = vld [vmem:[#allocation5 + $0x668] sm:$0xff]
    %v1394 = vld [vmem:[#allocation5 + $0x670] sm:$0xff]
    %v1395 = vld [vmem:[#allocation5 + $0x678] sm:$0xff]
    %v1396 = vld [vmem:[#allocation5 + $0x680] sm:$0xff]
    %v1397 = vld [vmem:[#allocation5 + $0x688] sm:$0xff]
    %v1398 = vld [vmem:[#allocation5 + $0x690] sm:$0xff]
    %v1399 = vld [vmem:[#allocation5 + $0x698] sm:$0xff]
    %v1400 = vld [vmem:[#allocation5 + $0x6a0] sm:$0xff]
    %v1401 = vld [vmem:[#allocation5 + $0x6a8] sm:$0xff]
    %v1402 = vld [vmem:[#allocation5 + $0x6b0] sm:$0xff]
    %v1403 = vld [vmem:[#allocation5 + $0x6b8] sm:$0xff]
    %v1404 = vld [vmem:[#allocation5 + $0x6c0] sm:$0xff]
    %v1405 = vld [vmem:[#allocation5 + $0x6c8] sm:$0xff]
    %v1406 = vld [vmem:[#allocation5 + $0x6d0] sm:$0xff]
    %v1407 = vld [vmem:[#allocation5 + $0x6d8] sm:$0xff]
    %v1408 = vld [vmem:[#allocation5 + $0x6e0] sm:$0xff]
    %v1409 = vld [vmem:[#allocation5 + $0x6e8] sm:$0xff]
    %v1410 = vld [vmem:[#allocation5 + $0x6f0] sm:$0xff]
    %v1411 = vld [vmem:[#allocation5 + $0x6f8] sm:$0xff]
    %v1412 = vld [vmem:[#allocation5 + $0x700] sm:$0xff]
    %v1413 = vld [vmem:[#allocation5 + $0x708] sm:$0xff]
    %v1414 = vld [vmem:[#allocation5 + $0x710] sm:$0xff]
    %v1415 = vld [vmem:[#allocation5 + $0x718] sm:$0xff]
    %v1416 = vld [vmem:[#allocation5 + $0x720] sm:$0xff]
    %v1417 = vld [vmem:[#allocation5 + $0x728] sm:$0xff]
    %v1418 = vld [vmem:[#allocation5 + $0x730] sm:$0xff]
    %v1419 = vld [vmem:[#allocation5 + $0x738] sm:$0xff]
    %v1420 = vld [vmem:[#allocation5 + $0x740] sm:$0xff]
    %v1421 = vld [vmem:[#allocation5 + $0x748] sm:$0xff]
    %v1422 = vld [vmem:[#allocation5 + $0x750] sm:$0xff]
    %v1423 = vld [vmem:[#allocation5 + $0x758] sm:$0xff]
    %v1424 = vld [vmem:[#allocation5 + $0x760] sm:$0xff]
    %v1425 = vld [vmem:[#allocation5 + $0x768] sm:$0xff]
    %v1426 = vld [vmem:[#allocation5 + $0x770] sm:$0xff]
    %v1427 = vld [vmem:[#allocation5 + $0x778] sm:$0xff]
    %v1428 = vld [vmem:[#allocation5 + $0x780] sm:$0xff]
    %v1429 = vld [vmem:[#allocation5 + $0x788] sm:$0xff]
    %v1430 = vld [vmem:[#allocation5 + $0x790] sm:$0xff]
    %v1431 = vld [vmem:[#allocation5 + $0x798] sm:$0xff]
    %v1432 = vld [vmem:[#allocation5 + $0x7a0] sm:$0xff]
    %v1433 = vld [vmem:[#allocation5 + $0x7a8] sm:$0xff]
    %v1434 = vld [vmem:[#allocation5 + $0x7b0] sm:$0xff]
    %v1435 = vld [vmem:[#allocation5 + $0x7b8] sm:$0xff]
    %v1436 = vld [vmem:[#allocation5 + $0x7c0] sm:$0xff]
    %v1437 = vld [vmem:[#allocation5 + $0x7c8] sm:$0xff]
    %v1438 = vld [vmem:[#allocation5 + $0x7d0] sm:$0xff]
    %v1439 = vld [vmem:[#allocation5 + $0x7d8] sm:$0xff]
    %v1440 = vld [vmem:[#allocation5 + $0x7e0] sm:$0xff]
    %v1441 = vld [vmem:[#allocation5 + $0x7e8] sm:$0xff]
    %v1442 = vld [vmem:[#allocation5 + $0x7f0] sm:$0xff]
    %v1443 = vld [vmem:[#allocation5 + $0x7f8] sm:$0xff]
    %v1444 = vld [vmem:[%s4] sm:$0xf]
    %v1446 = vperm.slane %v1444, 0
    %v1447 = vperm.slane %v1444, 1
    %v1448 = vperm.slane %v1444, 2
    %v1449 = vperm.slane %v1444, 3
    %v1710 = vunpack.c.l.b16 %v1188
    %v1711 = vunpack.c.h.b16 %v1188
    %v1712 = vunpack.c.l.b16 %v1189
    %v1713 = vunpack.c.h.b16 %v1189
    %v1714 = vunpack.c.l.b16 %v1190
    %v1715 = vunpack.c.h.b16 %v1190
    %v1716 = vunpack.c.l.b16 %v1191
    %v1717 = vunpack.c.h.b16 %v1191
    %v1718 = vunpack.c.l.b16 %v1192
    %v1719 = vunpack.c.h.b16 %v1192
    %v1720 = vunpack.c.l.b16 %v1193
    %v1721 = vunpack.c.h.b16 %v1193
    %v1722 = vunpack.c.l.b16 %v1194
    %v1723 = vunpack.c.h.b16 %v1194
    %v1724 = vunpack.c.l.b16 %v1195
    %v1725 = vunpack.c.h.b16 %v1195
    %v1726 = vunpack.c.l.b16 %v1196
    %v1727 = vunpack.c.h.b16 %v1196
    %v1728 = vunpack.c.l.b16 %v1197
    %v1729 = vunpack.c.h.b16 %v1197
    %v1730 = vunpack.c.l.b16 %v1198
    %v1731 = vunpack.c.h.b16 %v1198
    %v1732 = vunpack.c.l.b16 %v1199
    %v1733 = vunpack.c.h.b16 %v1199
    %v1734 = vunpack.c.l.b16 %v1200
    %v1735 = vunpack.c.h.b16 %v1200
    %v1736 = vunpack.c.l.b16 %v1201
    %v1737 = vunpack.c.h.b16 %v1201
    %v1738 = vunpack.c.l.b16 %v1202
    %v1739 = vunpack.c.h.b16 %v1202
    %v1740 = vunpack.c.l.b16 %v1203
    %v1741 = vunpack.c.h.b16 %v1203
    %v1742 = vunpack.c.l.b16 %v1204
    %v1743 = vunpack.c.h.b16 %v1204
    %v1744 = vunpack.c.l.b16 %v1205
    %v1745 = vunpack.c.h.b16 %v1205
    %v1746 = vunpack.c.l.b16 %v1206
    %v1747 = vunpack.c.h.b16 %v1206
    %v1748 = vunpack.c.l.b16 %v1207
    %v1749 = vunpack.c.h.b16 %v1207
    %v1750 = vunpack.c.l.b16 %v1208
    %v1751 = vunpack.c.h.b16 %v1208
    %v1752 = vunpack.c.l.b16 %v1209
    %v1753 = vunpack.c.h.b16 %v1209
    %v1754 = vunpack.c.l.b16 %v1210
    %v1755 = vunpack.c.h.b16 %v1210
    %v1756 = vunpack.c.l.b16 %v1211
    %v1757 = vunpack.c.h.b16 %v1211
    %v1758 = vunpack.c.l.b16 %v1212
    %v1759 = vunpack.c.h.b16 %v1212
    %v1760 = vunpack.c.l.b16 %v1213
    %v1761 = vunpack.c.h.b16 %v1213
    %v1762 = vunpack.c.l.b16 %v1214
    %v1763 = vunpack.c.h.b16 %v1214
    %v1764 = vunpack.c.l.b16 %v1215
    %v1765 = vunpack.c.h.b16 %v1215
    %v1766 = vunpack.c.l.b16 %v1216
    %v1767 = vunpack.c.h.b16 %v1216
    %v1768 = vunpack.c.l.b16 %v1217
    %v1769 = vunpack.c.h.b16 %v1217
    %v1770 = vunpack.c.l.b16 %v1218
    %v1771 = vunpack.c.h.b16 %v1218
    %v1772 = vunpack.c.l.b16 %v1219
    %v1773 = vunpack.c.h.b16 %v1219
    %v1774 = vunpack.c.l.b16 %v1220
    %v1775 = vunpack.c.h.b16 %v1220
    %v1776 = vunpack.c.l.b16 %v1221
    %v1777 = vunpack.c.h.b16 %v1221
    %v1778 = vunpack.c.l.b16 %v1222
    %v1779 = vunpack.c.h.b16 %v1222
    %v1780 = vunpack.c.l.b16 %v1223
    %v1781 = vunpack.c.h.b16 %v1223
    %v1782 = vunpack.c.l.b16 %v1224
    %v1783 = vunpack.c.h.b16 %v1224
    %v1784 = vunpack.c.l.b16 %v1225
    %v1785 = vunpack.c.h.b16 %v1225
    %v1786 = vunpack.c.l.b16 %v1226
    %v1787 = vunpack.c.h.b16 %v1226
    %v1788 = vunpack.c.l.b16 %v1227
    %v1789 = vunpack.c.h.b16 %v1227
    %v1790 = vunpack.c.l.b16 %v1228
    %v1791 = vunpack.c.h.b16 %v1228
    %v1792 = vunpack.c.l.b16 %v1229
    %v1793 = vunpack.c.h.b16 %v1229
    %v1794 = vunpack.c.l.b16 %v1230
    %v1795 = vunpack.c.h.b16 %v1230
    %v1796 = vunpack.c.l.b16 %v1231
    %v1797 = vunpack.c.h.b16 %v1231
    %v1798 = vunpack.c.l.b16 %v1232
    %v1799 = vunpack.c.h.b16 %v1232
    %v1800 = vunpack.c.l.b16 %v1233
    %v1801 = vunpack.c.h.b16 %v1233
    %v1802 = vunpack.c.l.b16 %v1234
    %v1803 = vunpack.c.h.b16 %v1234
    %v1804 = vunpack.c.l.b16 %v1235
    %v1805 = vunpack.c.h.b16 %v1235
    %v1806 = vunpack.c.l.b16 %v1236
    %v1807 = vunpack.c.h.b16 %v1236
    %v1808 = vunpack.c.l.b16 %v1237
    %v1809 = vunpack.c.h.b16 %v1237
    %v1810 = vunpack.c.l.b16 %v1238
    %v1811 = vunpack.c.h.b16 %v1238
    %v1812 = vunpack.c.l.b16 %v1239
    %v1813 = vunpack.c.h.b16 %v1239
    %v1814 = vunpack.c.l.b16 %v1240
    %v1815 = vunpack.c.h.b16 %v1240
    %v1816 = vunpack.c.l.b16 %v1241
    %v1817 = vunpack.c.h.b16 %v1241
    %v1818 = vunpack.c.l.b16 %v1242
    %v1819 = vunpack.c.h.b16 %v1242
    %v1820 = vunpack.c.l.b16 %v1243
    %v1821 = vunpack.c.h.b16 %v1243
    %v1822 = vunpack.c.l.b16 %v1244
    %v1823 = vunpack.c.h.b16 %v1244
    %v1824 = vunpack.c.l.b16 %v1245
    %v1825 = vunpack.c.h.b16 %v1245
    %v1826 = vunpack.c.l.b16 %v1246
    %v1827 = vunpack.c.h.b16 %v1246
    %v1828 = vunpack.c.l.b16 %v1247
    %v1829 = vunpack.c.h.b16 %v1247
    %v1830 = vunpack.c.l.b16 %v1248
    %v1831 = vunpack.c.h.b16 %v1248
    %v1832 = vunpack.c.l.b16 %v1249
    %v1833 = vunpack.c.h.b16 %v1249
    %v1834 = vunpack.c.l.b16 %v1250
    %v1835 = vunpack.c.h.b16 %v1250
    %v1836 = vunpack.c.l.b16 %v1251
    %v1837 = vunpack.c.h.b16 %v1251
    %v1838 = vunpack.c.l.b16 %v1252
    %v1839 = vunpack.c.h.b16 %v1252
    %v1840 = vunpack.c.l.b16 %v1253
    %v1841 = vunpack.c.h.b16 %v1253
    %v1842 = vunpack.c.l.b16 %v1254
    %v1843 = vunpack.c.h.b16 %v1254
    %v1844 = vunpack.c.l.b16 %v1255
    %v1845 = vunpack.c.h.b16 %v1255
    %v1846 = vunpack.c.l.b16 %v1256
    %v1847 = vunpack.c.h.b16 %v1256
    %v1848 = vunpack.c.l.b16 %v1257
    %v1849 = vunpack.c.h.b16 %v1257
    %v1850 = vunpack.c.l.b16 %v1258
    %v1851 = vunpack.c.h.b16 %v1258
    %v1852 = vunpack.c.l.b16 %v1259
    %v1853 = vunpack.c.h.b16 %v1259
    %v1854 = vunpack.c.l.b16 %v1260
    %v1855 = vunpack.c.h.b16 %v1260
    %v1856 = vunpack.c.l.b16 %v1261
    %v1857 = vunpack.c.h.b16 %v1261
    %v1858 = vunpack.c.l.b16 %v1262
    %v1859 = vunpack.c.h.b16 %v1262
    %v1860 = vunpack.c.l.b16 %v1263
    %v1861 = vunpack.c.h.b16 %v1263
    %v1862 = vunpack.c.l.b16 %v1264
    %v1863 = vunpack.c.h.b16 %v1264
    %v1864 = vunpack.c.l.b16 %v1265
    %v1865 = vunpack.c.h.b16 %v1265
    %v1866 = vunpack.c.l.b16 %v1266
    %v1867 = vunpack.c.h.b16 %v1266
    %v1868 = vunpack.c.l.b16 %v1267
    %v1869 = vunpack.c.h.b16 %v1267
    %v1870 = vunpack.c.l.b16 %v1268
    %v1871 = vunpack.c.h.b16 %v1268
    %v1872 = vunpack.c.l.b16 %v1269
    %v1873 = vunpack.c.h.b16 %v1269
    %v1874 = vunpack.c.l.b16 %v1270
    %v1875 = vunpack.c.h.b16 %v1270
    %v1876 = vunpack.c.l.b16 %v1271
    %v1877 = vunpack.c.h.b16 %v1271
    %v1878 = vunpack.c.l.b16 %v1272
    %v1879 = vunpack.c.h.b16 %v1272
    %v1880 = vunpack.c.l.b16 %v1273
    %v1881 = vunpack.c.h.b16 %v1273
    %v1882 = vunpack.c.l.b16 %v1274
    %v1883 = vunpack.c.h.b16 %v1274
    %v1884 = vunpack.c.l.b16 %v1275
    %v1885 = vunpack.c.h.b16 %v1275
    %v1886 = vunpack.c.l.b16 %v1276
    %v1887 = vunpack.c.h.b16 %v1276
    %v1888 = vunpack.c.l.b16 %v1277
    %v1889 = vunpack.c.h.b16 %v1277
    %v1890 = vunpack.c.l.b16 %v1278
    %v1891 = vunpack.c.h.b16 %v1278
    %v1892 = vunpack.c.l.b16 %v1279
    %v1893 = vunpack.c.h.b16 %v1279
    %v1894 = vunpack.c.l.b16 %v1280
    %v1895 = vunpack.c.h.b16 %v1280
    %v1896 = vunpack.c.l.b16 %v1281
    %v1897 = vunpack.c.h.b16 %v1281
    %v1898 = vunpack.c.l.b16 %v1282
    %v1899 = vunpack.c.h.b16 %v1282
    %v1900 = vunpack.c.l.b16 %v1283
    %v1901 = vunpack.c.h.b16 %v1283
    %v1902 = vunpack.c.l.b16 %v1284
    %v1903 = vunpack.c.h.b16 %v1284
    %v1904 = vunpack.c.l.b16 %v1285
    %v1905 = vunpack.c.h.b16 %v1285
    %v1906 = vunpack.c.l.b16 %v1286
    %v1907 = vunpack.c.h.b16 %v1286
    %v1908 = vunpack.c.l.b16 %v1287
    %v1909 = vunpack.c.h.b16 %v1287
    %v1910 = vunpack.c.l.b16 %v1288
    %v1911 = vunpack.c.h.b16 %v1288
    %v1912 = vunpack.c.l.b16 %v1289
    %v1913 = vunpack.c.h.b16 %v1289
    %v1914 = vunpack.c.l.b16 %v1290
    %v1915 = vunpack.c.h.b16 %v1290
    %v1916 = vunpack.c.l.b16 %v1291
    %v1917 = vunpack.c.h.b16 %v1291
    %v1918 = vunpack.c.l.b16 %v1292
    %v1919 = vunpack.c.h.b16 %v1292
    %v1920 = vunpack.c.l.b16 %v1293
    %v1921 = vunpack.c.h.b16 %v1293
    %v1922 = vunpack.c.l.b16 %v1294
    %v1923 = vunpack.c.h.b16 %v1294
    %v1924 = vunpack.c.l.b16 %v1295
    %v1925 = vunpack.c.h.b16 %v1295
    %v1926 = vunpack.c.l.b16 %v1296
    %v1927 = vunpack.c.h.b16 %v1296
    %v1928 = vunpack.c.l.b16 %v1297
    %v1929 = vunpack.c.h.b16 %v1297
    %v1930 = vunpack.c.l.b16 %v1298
    %v1931 = vunpack.c.h.b16 %v1298
    %v1932 = vunpack.c.l.b16 %v1299
    %v1933 = vunpack.c.h.b16 %v1299
    %v1934 = vunpack.c.l.b16 %v1300
    %v1935 = vunpack.c.h.b16 %v1300
    %v1936 = vunpack.c.l.b16 %v1301
    %v1937 = vunpack.c.h.b16 %v1301
    %v1938 = vunpack.c.l.b16 %v1302
    %v1939 = vunpack.c.h.b16 %v1302
    %v1940 = vunpack.c.l.b16 %v1303
    %v1941 = vunpack.c.h.b16 %v1303
    %v1942 = vunpack.c.l.b16 %v1304
    %v1943 = vunpack.c.h.b16 %v1304
    %v1944 = vunpack.c.l.b16 %v1305
    %v1945 = vunpack.c.h.b16 %v1305
    %v1946 = vunpack.c.l.b16 %v1306
    %v1947 = vunpack.c.h.b16 %v1306
    %v1948 = vunpack.c.l.b16 %v1307
    %v1949 = vunpack.c.h.b16 %v1307
    %v1950 = vunpack.c.l.b16 %v1308
    %v1951 = vunpack.c.h.b16 %v1308
    %v1952 = vunpack.c.l.b16 %v1309
    %v1953 = vunpack.c.h.b16 %v1309
    %v1954 = vunpack.c.l.b16 %v1310
    %v1955 = vunpack.c.h.b16 %v1310
    %v1956 = vunpack.c.l.b16 %v1311
    %v1957 = vunpack.c.h.b16 %v1311
    %v1958 = vunpack.c.l.b16 %v1312
    %v1959 = vunpack.c.h.b16 %v1312
    %v1960 = vunpack.c.l.b16 %v1313
    %v1961 = vunpack.c.h.b16 %v1313
    %v1962 = vunpack.c.l.b16 %v1314
    %v1963 = vunpack.c.h.b16 %v1314
    %v1964 = vunpack.c.l.b16 %v1315
    %v1965 = vunpack.c.h.b16 %v1315
    %v1966 = vunpack.c.l.b16 %v1316
    %v1967 = vunpack.c.h.b16 %v1316
    %v1968 = vunpack.c.l.b16 %v1317
    %v1969 = vunpack.c.h.b16 %v1317
    %v1970 = vunpack.c.l.b16 %v1318
    %v1971 = vunpack.c.h.b16 %v1318
    %v1972 = vunpack.c.l.b16 %v1319
    %v1973 = vunpack.c.h.b16 %v1319
    %v1974 = vunpack.c.l.b16 %v1320
    %v1975 = vunpack.c.h.b16 %v1320
    %v1976 = vunpack.c.l.b16 %v1321
    %v1977 = vunpack.c.h.b16 %v1321
    %v1978 = vunpack.c.l.b16 %v1322
    %v1979 = vunpack.c.h.b16 %v1322
    %v1980 = vunpack.c.l.b16 %v1323
    %v1981 = vunpack.c.h.b16 %v1323
    %v1982 = vunpack.c.l.b16 %v1324
    %v1983 = vunpack.c.h.b16 %v1324
    %v1984 = vunpack.c.l.b16 %v1325
    %v1985 = vunpack.c.h.b16 %v1325
    %v1986 = vunpack.c.l.b16 %v1326
    %v1987 = vunpack.c.h.b16 %v1326
    %v1988 = vunpack.c.l.b16 %v1327
    %v1989 = vunpack.c.h.b16 %v1327
    %v1990 = vunpack.c.l.b16 %v1328
    %v1991 = vunpack.c.h.b16 %v1328
    %v1992 = vunpack.c.l.b16 %v1329
    %v1993 = vunpack.c.h.b16 %v1329
    %v1994 = vunpack.c.l.b16 %v1330
    %v1995 = vunpack.c.h.b16 %v1330
    %v1996 = vunpack.c.l.b16 %v1331
    %v1997 = vunpack.c.h.b16 %v1331
    %v1998 = vunpack.c.l.b16 %v1332
    %v1999 = vunpack.c.h.b16 %v1332
    %v2000 = vunpack.c.l.b16 %v1333
    %v2001 = vunpack.c.h.b16 %v1333
    %v2002 = vunpack.c.l.b16 %v1334
    %v2003 = vunpack.c.h.b16 %v1334
    %v2004 = vunpack.c.l.b16 %v1335
    %v2005 = vunpack.c.h.b16 %v1335
    %v2006 = vunpack.c.l.b16 %v1336
    %v2007 = vunpack.c.h.b16 %v1336
    %v2008 = vunpack.c.l.b16 %v1337
    %v2009 = vunpack.c.h.b16 %v1337
    %v2010 = vunpack.c.l.b16 %v1338
    %v2011 = vunpack.c.h.b16 %v1338
    %v2012 = vunpack.c.l.b16 %v1339
    %v2013 = vunpack.c.h.b16 %v1339
    %v2014 = vunpack.c.l.b16 %v1340
    %v2015 = vunpack.c.h.b16 %v1340
    %v2016 = vunpack.c.l.b16 %v1341
    %v2017 = vunpack.c.h.b16 %v1341
    %v2018 = vunpack.c.l.b16 %v1342
    %v2019 = vunpack.c.h.b16 %v1342
    %v2020 = vunpack.c.l.b16 %v1343
    %v2021 = vunpack.c.h.b16 %v1343
    %v2022 = vunpack.c.l.b16 %v1344
    %v2023 = vunpack.c.h.b16 %v1344
    %v2024 = vunpack.c.l.b16 %v1345
    %v2025 = vunpack.c.h.b16 %v1345
    %v2026 = vunpack.c.l.b16 %v1346
    %v2027 = vunpack.c.h.b16 %v1346
    %v2028 = vunpack.c.l.b16 %v1347
    %v2029 = vunpack.c.h.b16 %v1347
    %v2030 = vunpack.c.l.b16 %v1348
    %v2031 = vunpack.c.h.b16 %v1348
    %v2032 = vunpack.c.l.b16 %v1349
    %v2033 = vunpack.c.h.b16 %v1349
    %v2034 = vunpack.c.l.b16 %v1350
    %v2035 = vunpack.c.h.b16 %v1350
    %v2036 = vunpack.c.l.b16 %v1351
    %v2037 = vunpack.c.h.b16 %v1351
    %v2038 = vunpack.c.l.b16 %v1352
    %v2039 = vunpack.c.h.b16 %v1352
    %v2040 = vunpack.c.l.b16 %v1353
    %v2041 = vunpack.c.h.b16 %v1353
    %v2042 = vunpack.c.l.b16 %v1354
    %v2043 = vunpack.c.h.b16 %v1354
    %v2044 = vunpack.c.l.b16 %v1355
    %v2045 = vunpack.c.h.b16 %v1355
    %v2046 = vunpack.c.l.b16 %v1356
    %v2047 = vunpack.c.h.b16 %v1356
    %v2048 = vunpack.c.l.b16 %v1357
    %v2049 = vunpack.c.h.b16 %v1357
    %v2050 = vunpack.c.l.b16 %v1358
    %v2051 = vunpack.c.h.b16 %v1358
    %v2052 = vunpack.c.l.b16 %v1359
    %v2053 = vunpack.c.h.b16 %v1359
    %v2054 = vunpack.c.l.b16 %v1360
    %v2055 = vunpack.c.h.b16 %v1360
    %v2056 = vunpack.c.l.b16 %v1361
    %v2057 = vunpack.c.h.b16 %v1361
    %v2058 = vunpack.c.l.b16 %v1362
    %v2059 = vunpack.c.h.b16 %v1362
    %v2060 = vunpack.c.l.b16 %v1363
    %v2061 = vunpack.c.h.b16 %v1363
    %v2062 = vunpack.c.l.b16 %v1364
    %v2063 = vunpack.c.h.b16 %v1364
    %v2064 = vunpack.c.l.b16 %v1365
    %v2065 = vunpack.c.h.b16 %v1365
    %v2066 = vunpack.c.l.b16 %v1366
    %v2067 = vunpack.c.h.b16 %v1366
    %v2068 = vunpack.c.l.b16 %v1367
    %v2069 = vunpack.c.h.b16 %v1367
    %v2070 = vunpack.c.l.b16 %v1368
    %v2071 = vunpack.c.h.b16 %v1368
    %v2072 = vunpack.c.l.b16 %v1369
    %v2073 = vunpack.c.h.b16 %v1369
    %v2074 = vunpack.c.l.b16 %v1370
    %v2075 = vunpack.c.h.b16 %v1370
    %v2076 = vunpack.c.l.b16 %v1371
    %v2077 = vunpack.c.h.b16 %v1371
    %v2078 = vunpack.c.l.b16 %v1372
    %v2079 = vunpack.c.h.b16 %v1372
    %v2080 = vunpack.c.l.b16 %v1373
    %v2081 = vunpack.c.h.b16 %v1373
    %v2082 = vunpack.c.l.b16 %v1374
    %v2083 = vunpack.c.h.b16 %v1374
    %v2084 = vunpack.c.l.b16 %v1375
    %v2085 = vunpack.c.h.b16 %v1375
    %v2086 = vunpack.c.l.b16 %v1376
    %v2087 = vunpack.c.h.b16 %v1376
    %v2088 = vunpack.c.l.b16 %v1377
    %v2089 = vunpack.c.h.b16 %v1377
    %v2090 = vunpack.c.l.b16 %v1378
    %v2091 = vunpack.c.h.b16 %v1378
    %v2092 = vunpack.c.l.b16 %v1379
    %v2093 = vunpack.c.h.b16 %v1379
    %v2094 = vunpack.c.l.b16 %v1380
    %v2095 = vunpack.c.h.b16 %v1380
    %v2096 = vunpack.c.l.b16 %v1381
    %v2097 = vunpack.c.h.b16 %v1381
    %v2098 = vunpack.c.l.b16 %v1382
    %v2099 = vunpack.c.h.b16 %v1382
    %v2100 = vunpack.c.l.b16 %v1383
    %v2101 = vunpack.c.h.b16 %v1383
    %v2102 = vunpack.c.l.b16 %v1384
    %v2103 = vunpack.c.h.b16 %v1384
    %v2104 = vunpack.c.l.b16 %v1385
    %v2105 = vunpack.c.h.b16 %v1385
    %v2106 = vunpack.c.l.b16 %v1386
    %v2107 = vunpack.c.h.b16 %v1386
    %v2108 = vunpack.c.l.b16 %v1387
    %v2109 = vunpack.c.h.b16 %v1387
    %v2110 = vunpack.c.l.b16 %v1388
    %v2111 = vunpack.c.h.b16 %v1388
    %v2112 = vunpack.c.l.b16 %v1389
    %v2113 = vunpack.c.h.b16 %v1389
    %v2114 = vunpack.c.l.b16 %v1390
    %v2115 = vunpack.c.h.b16 %v1390
    %v2116 = vunpack.c.l.b16 %v1391
    %v2117 = vunpack.c.h.b16 %v1391
    %v2118 = vunpack.c.l.b16 %v1392
    %v2119 = vunpack.c.h.b16 %v1392
    %v2120 = vunpack.c.l.b16 %v1393
    %v2121 = vunpack.c.h.b16 %v1393
    %v2122 = vunpack.c.l.b16 %v1394
    %v2123 = vunpack.c.h.b16 %v1394
    %v2124 = vunpack.c.l.b16 %v1395
    %v2125 = vunpack.c.h.b16 %v1395
    %v2126 = vunpack.c.l.b16 %v1396
    %v2127 = vunpack.c.h.b16 %v1396
    %v2128 = vunpack.c.l.b16 %v1397
    %v2129 = vunpack.c.h.b16 %v1397
    %v2130 = vunpack.c.l.b16 %v1398
    %v2131 = vunpack.c.h.b16 %v1398
    %v2132 = vunpack.c.l.b16 %v1399
    %v2133 = vunpack.c.h.b16 %v1399
    %v2134 = vunpack.c.l.b16 %v1400
    %v2135 = vunpack.c.h.b16 %v1400
    %v2136 = vunpack.c.l.b16 %v1401
    %v2137 = vunpack.c.h.b16 %v1401
    %v2138 = vunpack.c.l.b16 %v1402
    %v2139 = vunpack.c.h.b16 %v1402
    %v2140 = vunpack.c.l.b16 %v1403
    %v2141 = vunpack.c.h.b16 %v1403
    %v2142 = vunpack.c.l.b16 %v1404
    %v2143 = vunpack.c.h.b16 %v1404
    %v2144 = vunpack.c.l.b16 %v1405
    %v2145 = vunpack.c.h.b16 %v1405
    %v2146 = vunpack.c.l.b16 %v1406
    %v2147 = vunpack.c.h.b16 %v1406
    %v2148 = vunpack.c.l.b16 %v1407
    %v2149 = vunpack.c.h.b16 %v1407
    %v2150 = vunpack.c.l.b16 %v1408
    %v2151 = vunpack.c.h.b16 %v1408
    %v2152 = vunpack.c.l.b16 %v1409
    %v2153 = vunpack.c.h.b16 %v1409
    %v2154 = vunpack.c.l.b16 %v1410
    %v2155 = vunpack.c.h.b16 %v1410
    %v2156 = vunpack.c.l.b16 %v1411
    %v2157 = vunpack.c.h.b16 %v1411
    %v2158 = vunpack.c.l.b16 %v1412
    %v2159 = vunpack.c.h.b16 %v1412
    %v2160 = vunpack.c.l.b16 %v1413
    %v2161 = vunpack.c.h.b16 %v1413
    %v2162 = vunpack.c.l.b16 %v1414
    %v2163 = vunpack.c.h.b16 %v1414
    %v2164 = vunpack.c.l.b16 %v1415
    %v2165 = vunpack.c.h.b16 %v1415
    %v2166 = vunpack.c.l.b16 %v1416
    %v2167 = vunpack.c.h.b16 %v1416
    %v2168 = vunpack.c.l.b16 %v1417
    %v2169 = vunpack.c.h.b16 %v1417
    %v2170 = vunpack.c.l.b16 %v1418
    %v2171 = vunpack.c.h.b16 %v1418
    %v2172 = vunpack.c.l.b16 %v1419
    %v2173 = vunpack.c.h.b16 %v1419
    %v2174 = vunpack.c.l.b16 %v1420
    %v2175 = vunpack.c.h.b16 %v1420
    %v2176 = vunpack.c.l.b16 %v1421
    %v2177 = vunpack.c.h.b16 %v1421
    %v2178 = vunpack.c.l.b16 %v1422
    %v2179 = vunpack.c.h.b16 %v1422
    %v2180 = vunpack.c.l.b16 %v1423
    %v2181 = vunpack.c.h.b16 %v1423
    %v2182 = vunpack.c.l.b16 %v1424
    %v2183 = vunpack.c.h.b16 %v1424
    %v2184 = vunpack.c.l.b16 %v1425
    %v2185 = vunpack.c.h.b16 %v1425
    %v2186 = vunpack.c.l.b16 %v1426
    %v2187 = vunpack.c.h.b16 %v1426
    %v2188 = vunpack.c.l.b16 %v1427
    %v2189 = vunpack.c.h.b16 %v1427
    %v2190 = vunpack.c.l.b16 %v1428
    %v2191 = vunpack.c.h.b16 %v1428
    %v2192 = vunpack.c.l.b16 %v1429
    %v2193 = vunpack.c.h.b16 %v1429
    %v2194 = vunpack.c.l.b16 %v1430
    %v2195 = vunpack.c.h.b16 %v1430
    %v2196 = vunpack.c.l.b16 %v1431
    %v2197 = vunpack.c.h.b16 %v1431
    %v2198 = vunpack.c.l.b16 %v1432
    %v2199 = vunpack.c.h.b16 %v1432
    %v2200 = vunpack.c.l.b16 %v1433
    %v2201 = vunpack.c.h.b16 %v1433
    %v2202 = vunpack.c.l.b16 %v1434
    %v2203 = vunpack.c.h.b16 %v1434
    %v2204 = vunpack.c.l.b16 %v1435
    %v2205 = vunpack.c.h.b16 %v1435
    %v2206 = vunpack.c.l.b16 %v1436
    %v2207 = vunpack.c.h.b16 %v1436
    %v2208 = vunpack.c.l.b16 %v1437
    %v2209 = vunpack.c.h.b16 %v1437
    %v2210 = vunpack.c.l.b16 %v1438
    %v2211 = vunpack.c.h.b16 %v1438
    %v2212 = vunpack.c.l.b16 %v1439
    %v2213 = vunpack.c.h.b16 %v1439
    %v2214 = vunpack.c.l.b16 %v1440
    %v2215 = vunpack.c.h.b16 %v1440
    %v2216 = vunpack.c.l.b16 %v1441
    %v2217 = vunpack.c.h.b16 %v1441
    %v2218 = vunpack.c.l.b16 %v1442
    %v2219 = vunpack.c.h.b16 %v1442
    %v2220 = vunpack.c.l.b16 %v1443
    %v2221 = vunpack.c.h.b16 %v1443
    %v2222 = vpack.c.b16 %v1714, %v1710
    %v2223 = vpack.c.b16 %v1715, %v1711
    %v2224 = vpack.c.b16 %v1716, %v1712
    %v2225 = vpack.c.b16 %v1717, %v1713
    %v2226 = vpack.c.b16 %v1722, %v1718
    %v2227 = vpack.c.b16 %v1723, %v1719
    %v2228 = vpack.c.b16 %v1724, %v1720
    %v2229 = vpack.c.b16 %v1725, %v1721
    %v2230 = vpack.c.b16 %v1730, %v1726
    %v2231 = vpack.c.b16 %v1731, %v1727
    %v2232 = vpack.c.b16 %v1732, %v1728
    %v2233 = vpack.c.b16 %v1733, %v1729
    %v2234 = vpack.c.b16 %v1738, %v1734
    %v2235 = vpack.c.b16 %v1739, %v1735
    %v2236 = vpack.c.b16 %v1740, %v1736
    %v2237 = vpack.c.b16 %v1741, %v1737
    %v2238 = vpack.c.b16 %v1746, %v1742
    %v2239 = vpack.c.b16 %v1747, %v1743
    %v2240 = vpack.c.b16 %v1748, %v1744
    %v2241 = vpack.c.b16 %v1749, %v1745
    %v2242 = vpack.c.b16 %v1754, %v1750
    %v2243 = vpack.c.b16 %v1755, %v1751
    %v2244 = vpack.c.b16 %v1756, %v1752
    %v2245 = vpack.c.b16 %v1757, %v1753
    %v2246 = vpack.c.b16 %v1762, %v1758
    %v2247 = vpack.c.b16 %v1763, %v1759
    %v2248 = vpack.c.b16 %v1764, %v1760
    %v2249 = vpack.c.b16 %v1765, %v1761
    %v2250 = vpack.c.b16 %v1770, %v1766
    %v2251 = vpack.c.b16 %v1771, %v1767
    %v2252 = vpack.c.b16 %v1772, %v1768
    %v2253 = vpack.c.b16 %v1773, %v1769
    %v2254 = vpack.c.b16 %v1778, %v1774
    %v2255 = vpack.c.b16 %v1779, %v1775
    %v2256 = vpack.c.b16 %v1780, %v1776
    %v2257 = vpack.c.b16 %v1781, %v1777
    %v2258 = vpack.c.b16 %v1786, %v1782
    %v2259 = vpack.c.b16 %v1787, %v1783
    %v2260 = vpack.c.b16 %v1788, %v1784
    %v2261 = vpack.c.b16 %v1789, %v1785
    %v2262 = vpack.c.b16 %v1794, %v1790
    %v2263 = vpack.c.b16 %v1795, %v1791
    %v2264 = vpack.c.b16 %v1796, %v1792
    %v2265 = vpack.c.b16 %v1797, %v1793
    %v2266 = vpack.c.b16 %v1802, %v1798
    %v2267 = vpack.c.b16 %v1803, %v1799
    %v2268 = vpack.c.b16 %v1804, %v1800
    %v2269 = vpack.c.b16 %v1805, %v1801
    %v2270 = vpack.c.b16 %v1810, %v1806
    %v2271 = vpack.c.b16 %v1811, %v1807
    %v2272 = vpack.c.b16 %v1812, %v1808
    %v2273 = vpack.c.b16 %v1813, %v1809
    %v2274 = vpack.c.b16 %v1818, %v1814
    %v2275 = vpack.c.b16 %v1819, %v1815
    %v2276 = vpack.c.b16 %v1820, %v1816
    %v2277 = vpack.c.b16 %v1821, %v1817
    %v2278 = vpack.c.b16 %v1826, %v1822
    %v2279 = vpack.c.b16 %v1827, %v1823
    %v2280 = vpack.c.b16 %v1828, %v1824
    %v2281 = vpack.c.b16 %v1829, %v1825
    %v2282 = vpack.c.b16 %v1834, %v1830
    %v2283 = vpack.c.b16 %v1835, %v1831
    %v2284 = vpack.c.b16 %v1836, %v1832
    %v2285 = vpack.c.b16 %v1837, %v1833
    %v2286 = vpack.c.b16 %v1842, %v1838
    %v2287 = vpack.c.b16 %v1843, %v1839
    %v2288 = vpack.c.b16 %v1844, %v1840
    %v2289 = vpack.c.b16 %v1845, %v1841
    %v2290 = vpack.c.b16 %v1850, %v1846
    %v2291 = vpack.c.b16 %v1851, %v1847
    %v2292 = vpack.c.b16 %v1852, %v1848
    %v2293 = vpack.c.b16 %v1853, %v1849
    %v2294 = vpack.c.b16 %v1858, %v1854
    %v2295 = vpack.c.b16 %v1859, %v1855
    %v2296 = vpack.c.b16 %v1860, %v1856
    %v2297 = vpack.c.b16 %v1861, %v1857
    %v2298 = vpack.c.b16 %v1866, %v1862
    %v2299 = vpack.c.b16 %v1867, %v1863
    %v2300 = vpack.c.b16 %v1868, %v1864
    %v2301 = vpack.c.b16 %v1869, %v1865
    %v2302 = vpack.c.b16 %v1874, %v1870
    %v2303 = vpack.c.b16 %v1875, %v1871
    %v2304 = vpack.c.b16 %v1876, %v1872
    %v2305 = vpack.c.b16 %v1877, %v1873
    %v2306 = vpack.c.b16 %v1882, %v1878
    %v2307 = vpack.c.b16 %v1883, %v1879
    %v2308 = vpack.c.b16 %v1884, %v1880
    %v2309 = vpack.c.b16 %v1885, %v1881
    %v2310 = vpack.c.b16 %v1890, %v1886
    %v2311 = vpack.c.b16 %v1891, %v1887
    %v2312 = vpack.c.b16 %v1892, %v1888
    %v2313 = vpack.c.b16 %v1893, %v1889
    %v2314 = vpack.c.b16 %v1898, %v1894
    %v2315 = vpack.c.b16 %v1899, %v1895
    %v2316 = vpack.c.b16 %v1900, %v1896
    %v2317 = vpack.c.b16 %v1901, %v1897
    %v2318 = vpack.c.b16 %v1906, %v1902
    %v2319 = vpack.c.b16 %v1907, %v1903
    %v2320 = vpack.c.b16 %v1908, %v1904
    %v2321 = vpack.c.b16 %v1909, %v1905
    %v2322 = vpack.c.b16 %v1914, %v1910
    %v2323 = vpack.c.b16 %v1915, %v1911
    %v2324 = vpack.c.b16 %v1916, %v1912
    %v2325 = vpack.c.b16 %v1917, %v1913
    %v2326 = vpack.c.b16 %v1922, %v1918
    %v2327 = vpack.c.b16 %v1923, %v1919
    %v2328 = vpack.c.b16 %v1924, %v1920
    %v2329 = vpack.c.b16 %v1925, %v1921
    %v2330 = vpack.c.b16 %v1930, %v1926
    %v2331 = vpack.c.b16 %v1931, %v1927
    %v2332 = vpack.c.b16 %v1932, %v1928
    %v2333 = vpack.c.b16 %v1933, %v1929
    %v2334 = vpack.c.b16 %v1938, %v1934
    %v2335 = vpack.c.b16 %v1939, %v1935
    %v2336 = vpack.c.b16 %v1940, %v1936
    %v2337 = vpack.c.b16 %v1941, %v1937
    %v2338 = vpack.c.b16 %v1946, %v1942
    %v2339 = vpack.c.b16 %v1947, %v1943
    %v2340 = vpack.c.b16 %v1948, %v1944
    %v2341 = vpack.c.b16 %v1949, %v1945
    %v2342 = vpack.c.b16 %v1954, %v1950
    %v2343 = vpack.c.b16 %v1955, %v1951
    %v2344 = vpack.c.b16 %v1956, %v1952
    %v2345 = vpack.c.b16 %v1957, %v1953
    %v2346 = vpack.c.b16 %v1962, %v1958
    %v2347 = vpack.c.b16 %v1963, %v1959
    %v2348 = vpack.c.b16 %v1964, %v1960
    %v2349 = vpack.c.b16 %v1965, %v1961
    %v2350 = vpack.c.b16 %v1970, %v1966
    %v2351 = vpack.c.b16 %v1971, %v1967
    %v2352 = vpack.c.b16 %v1972, %v1968
    %v2353 = vpack.c.b16 %v1973, %v1969
    %v2354 = vpack.c.b16 %v1978, %v1974
    %v2355 = vpack.c.b16 %v1979, %v1975
    %v2356 = vpack.c.b16 %v1980, %v1976
    %v2357 = vpack.c.b16 %v1981, %v1977
    %v2358 = vpack.c.b16 %v1986, %v1982
    %v2359 = vpack.c.b16 %v1987, %v1983
    %v2360 = vpack.c.b16 %v1988, %v1984
    %v2361 = vpack.c.b16 %v1989, %v1985
    %v2362 = vpack.c.b16 %v1994, %v1990
    %v2363 = vpack.c.b16 %v1995, %v1991
    %v2364 = vpack.c.b16 %v1996, %v1992
    %v2365 = vpack.c.b16 %v1997, %v1993
    %v2366 = vpack.c.b16 %v2002, %v1998
    %v2367 = vpack.c.b16 %v2003, %v1999
    %v2368 = vpack.c.b16 %v2004, %v2000
    %v2369 = vpack.c.b16 %v2005, %v2001
    %v2370 = vpack.c.b16 %v2010, %v2006
    %v2371 = vpack.c.b16 %v2011, %v2007
    %v2372 = vpack.c.b16 %v2012, %v2008
    %v2373 = vpack.c.b16 %v2013, %v2009
    %v2374 = vpack.c.b16 %v2018, %v2014
    %v2375 = vpack.c.b16 %v2019, %v2015
    %v2376 = vpack.c.b16 %v2020, %v2016
    %v2377 = vpack.c.b16 %v2021, %v2017
    %v2378 = vpack.c.b16 %v2026, %v2022
    %v2379 = vpack.c.b16 %v2027, %v2023
    %v2380 = vpack.c.b16 %v2028, %v2024
    %v2381 = vpack.c.b16 %v2029, %v2025
    %v2382 = vpack.c.b16 %v2034, %v2030
    %v2383 = vpack.c.b16 %v2035, %v2031
    %v2384 = vpack.c.b16 %v2036, %v2032
    %v2385 = vpack.c.b16 %v2037, %v2033
    %v2386 = vpack.c.b16 %v2042, %v2038
    %v2387 = vpack.c.b16 %v2043, %v2039
    %v2388 = vpack.c.b16 %v2044, %v2040
    %v2389 = vpack.c.b16 %v2045, %v2041
    %v2390 = vpack.c.b16 %v2050, %v2046
    %v2391 = vpack.c.b16 %v2051, %v2047
    %v2392 = vpack.c.b16 %v2052, %v2048
    %v2393 = vpack.c.b16 %v2053, %v2049
    %v2394 = vpack.c.b16 %v2058, %v2054
    %v2395 = vpack.c.b16 %v2059, %v2055
    %v2396 = vpack.c.b16 %v2060, %v2056
    %v2397 = vpack.c.b16 %v2061, %v2057
    %v2398 = vpack.c.b16 %v2066, %v2062
    %v2399 = vpack.c.b16 %v2067, %v2063
    %v2400 = vpack.c.b16 %v2068, %v2064
    %v2401 = vpack.c.b16 %v2069, %v2065
    %v2402 = vpack.c.b16 %v2074, %v2070
    %v2403 = vpack.c.b16 %v2075, %v2071
    %v2404 = vpack.c.b16 %v2076, %v2072
    %v2405 = vpack.c.b16 %v2077, %v2073
    %v2406 = vpack.c.b16 %v2082, %v2078
    %v2407 = vpack.c.b16 %v2083, %v2079
    %v2408 = vpack.c.b16 %v2084, %v2080
    %v2409 = vpack.c.b16 %v2085, %v2081
    %v2410 = vpack.c.b16 %v2090, %v2086
    %v2411 = vpack.c.b16 %v2091, %v2087
    %v2412 = vpack.c.b16 %v2092, %v2088
    %v2413 = vpack.c.b16 %v2093, %v2089
    %v2414 = vpack.c.b16 %v2098, %v2094
    %v2415 = vpack.c.b16 %v2099, %v2095
    %v2416 = vpack.c.b16 %v2100, %v2096
    %v2417 = vpack.c.b16 %v2101, %v2097
    %v2418 = vpack.c.b16 %v2106, %v2102
    %v2419 = vpack.c.b16 %v2107, %v2103
    %v2420 = vpack.c.b16 %v2108, %v2104
    %v2421 = vpack.c.b16 %v2109, %v2105
    %v2422 = vpack.c.b16 %v2114, %v2110
    %v2423 = vpack.c.b16 %v2115, %v2111
    %v2424 = vpack.c.b16 %v2116, %v2112
    %v2425 = vpack.c.b16 %v2117, %v2113
    %v2426 = vpack.c.b16 %v2122, %v2118
    %v2427 = vpack.c.b16 %v2123, %v2119
    %v2428 = vpack.c.b16 %v2124, %v2120
    %v2429 = vpack.c.b16 %v2125, %v2121
    %v2430 = vpack.c.b16 %v2130, %v2126
    %v2431 = vpack.c.b16 %v2131, %v2127
    %v2432 = vpack.c.b16 %v2132, %v2128
    %v2433 = vpack.c.b16 %v2133, %v2129
    %v2434 = vpack.c.b16 %v2138, %v2134
    %v2435 = vpack.c.b16 %v2139, %v2135
    %v2436 = vpack.c.b16 %v2140, %v2136
    %v2437 = vpack.c.b16 %v2141, %v2137
    %v2438 = vpack.c.b16 %v2146, %v2142
    %v2439 = vpack.c.b16 %v2147, %v2143
    %v2440 = vpack.c.b16 %v2148, %v2144
    %v2441 = vpack.c.b16 %v2149, %v2145
    %v2442 = vpack.c.b16 %v2154, %v2150
    %v2443 = vpack.c.b16 %v2155, %v2151
    %v2444 = vpack.c.b16 %v2156, %v2152
    %v2445 = vpack.c.b16 %v2157, %v2153
    %v2446 = vpack.c.b16 %v2162, %v2158
    %v2447 = vpack.c.b16 %v2163, %v2159
    %v2448 = vpack.c.b16 %v2164, %v2160
    %v2449 = vpack.c.b16 %v2165, %v2161
    %v2450 = vpack.c.b16 %v2170, %v2166
    %v2451 = vpack.c.b16 %v2171, %v2167
    %v2452 = vpack.c.b16 %v2172, %v2168
    %v2453 = vpack.c.b16 %v2173, %v2169
    %v2454 = vpack.c.b16 %v2178, %v2174
    %v2455 = vpack.c.b16 %v2179, %v2175
    %v2456 = vpack.c.b16 %v2180, %v2176
    %v2457 = vpack.c.b16 %v2181, %v2177
    %v2458 = vpack.c.b16 %v2186, %v2182
    %v2459 = vpack.c.b16 %v2187, %v2183
    %v2460 = vpack.c.b16 %v2188, %v2184
    %v2461 = vpack.c.b16 %v2189, %v2185
    %v2462 = vpack.c.b16 %v2194, %v2190
    %v2463 = vpack.c.b16 %v2195, %v2191
    %v2464 = vpack.c.b16 %v2196, %v2192
    %v2465 = vpack.c.b16 %v2197, %v2193
    %v2466 = vpack.c.b16 %v2202, %v2198
    %v2467 = vpack.c.b16 %v2203, %v2199
    %v2468 = vpack.c.b16 %v2204, %v2200
    %v2469 = vpack.c.b16 %v2205, %v2201
    %v2470 = vpack.c.b16 %v2210, %v2206
    %v2471 = vpack.c.b16 %v2211, %v2207
    %v2472 = vpack.c.b16 %v2212, %v2208
    %v2473 = vpack.c.b16 %v2213, %v2209
    %v2474 = vpack.c.b16 %v2218, %v2214
    %v2475 = vpack.c.b16 %v2219, %v2215
    %v2476 = vpack.c.b16 %v2220, %v2216
    %v2477 = vpack.c.b16 %v2221, %v2217
    %2734 = vmatpush.bf16.msra.mxu0 %v2250
    %2735 = vmatpush.bf16.msra.mxu0 %v2246
    %2736 = vmatpush.bf16.msra.mxu0 %v2242
    %2737 = vmatpush.bf16.msra.mxu0 %v2238
    %2738 = vmatpush.bf16.msra.mxu0 %v2234
    %2739 = vmatpush.bf16.msra.mxu0 %v2230
    %2740 = vmatpush.bf16.msra.mxu0 %v2226
    %2741 = vmatpush.bf16.msra.mxu0 %v2222
    %2742 = vmatmul.bf16.gmra.mxu0 %v1180
    %v2743 = vpop.f32.mrf.mxu0
    %v2744 = vadd.f32 %v1446, %v2743
    %v2745 = vpop.f32.mrf.mxu0
    %v2746 = vadd.f32 %v1446, %v2745
    %2747 = vdwg.mxu0
    %2748 = vmatpush.bf16.msra.mxu0 %v2282
    %2749 = vmatpush.bf16.msra.mxu0 %v2278
    %2750 = vmatpush.bf16.msra.mxu0 %v2274
    %2751 = vmatpush.bf16.msra.mxu0 %v2270
    %2752 = vmatpush.bf16.msra.mxu0 %v2266
    %2753 = vmatpush.bf16.msra.mxu0 %v2262
    %2754 = vmatpush.bf16.msra.mxu0 %v2258
    %2755 = vmatpush.bf16.msra.mxu0 %v2254
    %2756 = vmatmul.bf16.gmra.mxu0 %v1181
    %v2757 = vpop.f32.mrf.mxu0
    %v2758 = vadd.f32 %v2744, %v2757
    %v2759 = vpop.f32.mrf.mxu0
    %v2760 = vadd.f32 %v2746, %v2759
    %2761 = vdwg.mxu0
    %2762 = vmatpush.bf16.msra.mxu0 %v2314
    %2763 = vmatpush.bf16.msra.mxu0 %v2310
    %2764 = vmatpush.bf16.msra.mxu0 %v2306
    %2765 = vmatpush.bf16.msra.mxu0 %v2302
    %2766 = vmatpush.bf16.msra.mxu0 %v2298
    %2767 = vmatpush.bf16.msra.mxu0 %v2294
    %2768 = vmatpush.bf16.msra.mxu0 %v2290
    %2769 = vmatpush.bf16.msra.mxu0 %v2286
    %2770 = vmatmul.bf16.gmra.mxu0 %v1182
    %v2771 = vpop.f32.mrf.mxu0
    %v2772 = vadd.f32 %v2758, %v2771
    %v2773 = vpop.f32.mrf.mxu0
    %v2774 = vadd.f32 %v2760, %v2773
    %2775 = vdwg.mxu0
    %2776 = vmatpush.bf16.msra.mxu0 %v2346
    %2777 = vmatpush.bf16.msra.mxu0 %v2342
    %2778 = vmatpush.bf16.msra.mxu0 %v2338
    %2779 = vmatpush.bf16.msra.mxu0 %v2334
    %2780 = vmatpush.bf16.msra.mxu0 %v2330
    %2781 = vmatpush.bf16.msra.mxu0 %v2326
    %2782 = vmatpush.bf16.msra.mxu0 %v2322
    %2783 = vmatpush.bf16.msra.mxu0 %v2318
    %2784 = vmatmul.bf16.gmra.mxu0 %v1183
    %v2785 = vpop.f32.mrf.mxu0
    %v2786 = vadd.f32 %v2772, %v2785
    %v2787 = vpop.f32.mrf.mxu0
    %v2788 = vadd.f32 %v2774, %v2787
    %2789 = vdwg.mxu0
    %2790 = vmatpush.bf16.msra.mxu0 %v2378
    %2791 = vmatpush.bf16.msra.mxu0 %v2374
    %2792 = vmatpush.bf16.msra.mxu0 %v2370
    %2793 = vmatpush.bf16.msra.mxu0 %v2366
    %2794 = vmatpush.bf16.msra.mxu0 %v2362
    %2795 = vmatpush.bf16.msra.mxu0 %v2358
    %2796 = vmatpush.bf16.msra.mxu0 %v2354
    %2797 = vmatpush.bf16.msra.mxu0 %v2350
    %2798 = vmatmul.bf16.gmra.mxu0 %v1184
    %v2799 = vpop.f32.mrf.mxu0
    %v2800 = vadd.f32 %v2786, %v2799
    %v2801 = vpop.f32.mrf.mxu0
    %v2802 = vadd.f32 %v2788, %v2801
    %2803 = vdwg.mxu0
    %2804 = vmatpush.bf16.msra.mxu0 %v2410
    %2805 = vmatpush.bf16.msra.mxu0 %v2406
    %2806 = vmatpush.bf16.msra.mxu0 %v2402
    %2807 = vmatpush.bf16.msra.mxu0 %v2398
    %2808 = vmatpush.bf16.msra.mxu0 %v2394
    %2809 = vmatpush.bf16.msra.mxu0 %v2390
    %2810 = vmatpush.bf16.msra.mxu0 %v2386
    %2811 = vmatpush.bf16.msra.mxu0 %v2382
    %2812 = vmatmul.bf16.gmra.mxu0 %v1185
    %v2813 = vpop.f32.mrf.mxu0
    %v2814 = vadd.f32 %v2800, %v2813
    %v2815 = vpop.f32.mrf.mxu0
    %v2816 = vadd.f32 %v2802, %v2815
    %2817 = vdwg.mxu0
    %2818 = vmatpush.bf16.msra.mxu0 %v2442
    %2819 = vmatpush.bf16.msra.mxu0 %v2438
    %2820 = vmatpush.bf16.msra.mxu0 %v2434
    %2821 = vmatpush.bf16.msra.mxu0 %v2430
    %2822 = vmatpush.bf16.msra.mxu0 %v2426
    %2823 = vmatpush.bf16.msra.mxu0 %v2422
    %2824 = vmatpush.bf16.msra.mxu0 %v2418
    %2825 = vmatpush.bf16.msra.mxu0 %v2414
    %2826 = vmatmul.bf16.gmra.mxu0 %v1186
    %v2827 = vpop.f32.mrf.mxu0
    %v2828 = vadd.f32 %v2814, %v2827
    %v2829 = vpop.f32.mrf.mxu0
    %v2830 = vadd.f32 %v2816, %v2829
    %2831 = vdwg.mxu0
    %2832 = vmatpush.bf16.msra.mxu0 %v2474
    %2833 = vmatpush.bf16.msra.mxu0 %v2470
    %2834 = vmatpush.bf16.msra.mxu0 %v2466
    %2835 = vmatpush.bf16.msra.mxu0 %v2462
    %2836 = vmatpush.bf16.msra.mxu0 %v2458
    %2837 = vmatpush.bf16.msra.mxu0 %v2454
    %2838 = vmatpush.bf16.msra.mxu0 %v2450
    %2839 = vmatpush.bf16.msra.mxu0 %v2446
    %2840 = vmatmul.bf16.gmra.mxu0 %v1187
    %v2841 = vpop.f32.mrf.mxu0
    %v2842 = vadd.f32 %v2828, %v2841
    %v2843 = vpop.f32.mrf.mxu0
    %v2844 = vadd.f32 %v2830, %v2843
    %2845 = vdwg.mxu0
    %2846 = vmatpush.bf16.msra.mxu0 %v2251
    %2847 = vmatpush.bf16.msra.mxu0 %v2247
    %2848 = vmatpush.bf16.msra.mxu0 %v2243
    %2849 = vmatpush.bf16.msra.mxu0 %v2239
    %2850 = vmatpush.bf16.msra.mxu0 %v2235
    %2851 = vmatpush.bf16.msra.mxu0 %v2231
    %2852 = vmatpush.bf16.msra.mxu0 %v2227
    %2853 = vmatpush.bf16.msra.mxu0 %v2223
    %2854 = vmatmul.bf16.gmra.mxu0 %v1180
    %v2855 = vpop.f32.mrf.mxu0
    %v2856 = vadd.f32 %v1447, %v2855
    %v2857 = vpop.f32.mrf.mxu0
    %v2858 = vadd.f32 %v1447, %v2857
    %2859 = vdwg.mxu0
    %2860 = vmatpush.bf16.msra.mxu0 %v2283
    %2861 = vmatpush.bf16.msra.mxu0 %v2279
    %2862 = vmatpush.bf16.msra.mxu0 %v2275
    %2863 = vmatpush.bf16.msra.mxu0 %v2271
    %2864 = vmatpush.bf16.msra.mxu0 %v2267
    %2865 = vmatpush.bf16.msra.mxu0 %v2263
    %2866 = vmatpush.bf16.msra.mxu0 %v2259
    %2867 = vmatpush.bf16.msra.mxu0 %v2255
    %2868 = vmatmul.bf16.gmra.mxu0 %v1181
    %v2869 = vpop.f32.mrf.mxu0
    %v2870 = vadd.f32 %v2856, %v2869
    %v2871 = vpop.f32.mrf.mxu0
    %v2872 = vadd.f32 %v2858, %v2871
    %2873 = vdwg.mxu0
    %2874 = vmatpush.bf16.msra.mxu0 %v2315
    %2875 = vmatpush.bf16.msra.mxu0 %v2311
    %2876 = vmatpush.bf16.msra.mxu0 %v2307
    %2877 = vmatpush.bf16.msra.mxu0 %v2303
    %2878 = vmatpush.bf16.msra.mxu0 %v2299
    %2879 = vmatpush.bf16.msra.mxu0 %v2295
    %2880 = vmatpush.bf16.msra.mxu0 %v2291
    %2881 = vmatpush.bf16.msra.mxu0 %v2287
    %2882 = vmatmul.bf16.gmra.mxu0 %v1182
    %v2883 = vpop.f32.mrf.mxu0
    %v2884 = vadd.f32 %v2870, %v2883
    %v2885 = vpop.f32.mrf.mxu0
    %v2886 = vadd.f32 %v2872, %v2885
    %2887 = vdwg.mxu0
    %2888 = vmatpush.bf16.msra.mxu0 %v2347
    %2889 = vmatpush.bf16.msra.mxu0 %v2343
    %2890 = vmatpush.bf16.msra.mxu0 %v2339
    %2891 = vmatpush.bf16.msra.mxu0 %v2335
    %2892 = vmatpush.bf16.msra.mxu0 %v2331
    %2893 = vmatpush.bf16.msra.mxu0 %v2327
    %2894 = vmatpush.bf16.msra.mxu0 %v2323
    %2895 = vmatpush.bf16.msra.mxu0 %v2319
    %2896 = vmatmul.bf16.gmra.mxu0 %v1183
    %v2897 = vpop.f32.mrf.mxu0
    %v2898 = vadd.f32 %v2884, %v2897
    %v2899 = vpop.f32.mrf.mxu0
    %v2900 = vadd.f32 %v2886, %v2899
    %2901 = vdwg.mxu0
    %2902 = vmatpush.bf16.msra.mxu0 %v2379
    %2903 = vmatpush.bf16.msra.mxu0 %v2375
    %2904 = vmatpush.bf16.msra.mxu0 %v2371
    %2905 = vmatpush.bf16.msra.mxu0 %v2367
    %2906 = vmatpush.bf16.msra.mxu0 %v2363
    %2907 = vmatpush.bf16.msra.mxu0 %v2359
    %2908 = vmatpush.bf16.msra.mxu0 %v2355
    %2909 = vmatpush.bf16.msra.mxu0 %v2351
    %2910 = vmatmul.bf16.gmra.mxu0 %v1184
    %v2911 = vpop.f32.mrf.mxu0
    %v2912 = vadd.f32 %v2898, %v2911
    %v2913 = vpop.f32.mrf.mxu0
    %v2914 = vadd.f32 %v2900, %v2913
    %2915 = vdwg.mxu0
    %2916 = vmatpush.bf16.msra.mxu0 %v2411
    %2917 = vmatpush.bf16.msra.mxu0 %v2407
    %2918 = vmatpush.bf16.msra.mxu0 %v2403
    %2919 = vmatpush.bf16.msra.mxu0 %v2399
    %2920 = vmatpush.bf16.msra.mxu0 %v2395
    %2921 = vmatpush.bf16.msra.mxu0 %v2391
    %2922 = vmatpush.bf16.msra.mxu0 %v2387
    %2923 = vmatpush.bf16.msra.mxu0 %v2383
    %2924 = vmatmul.bf16.gmra.mxu0 %v1185
    %v2925 = vpop.f32.mrf.mxu0
    %v2926 = vadd.f32 %v2912, %v2925
    %v2927 = vpop.f32.mrf.mxu0
    %v2928 = vadd.f32 %v2914, %v2927
    %2929 = vdwg.mxu0
    %2930 = vmatpush.bf16.msra.mxu0 %v2443
    %2931 = vmatpush.bf16.msra.mxu0 %v2439
    %2932 = vmatpush.bf16.msra.mxu0 %v2435
    %2933 = vmatpush.bf16.msra.mxu0 %v2431
    %2934 = vmatpush.bf16.msra.mxu0 %v2427
    %2935 = vmatpush.bf16.msra.mxu0 %v2423
    %2936 = vmatpush.bf16.msra.mxu0 %v2419
    %2937 = vmatpush.bf16.msra.mxu0 %v2415
    %2938 = vmatmul.bf16.gmra.mxu0 %v1186
    %v2939 = vpop.f32.mrf.mxu0
    %v2940 = vadd.f32 %v2926, %v2939
    %v2941 = vpop.f32.mrf.mxu0
    %v2942 = vadd.f32 %v2928, %v2941
    %2943 = vdwg.mxu0
    %2944 = vmatpush.bf16.msra.mxu0 %v2475
    %2945 = vmatpush.bf16.msra.mxu0 %v2471
    %2946 = vmatpush.bf16.msra.mxu0 %v2467
    %2947 = vmatpush.bf16.msra.mxu0 %v2463
    %2948 = vmatpush.bf16.msra.mxu0 %v2459
    %2949 = vmatpush.bf16.msra.mxu0 %v2455
    %2950 = vmatpush.bf16.msra.mxu0 %v2451
    %2951 = vmatpush.bf16.msra.mxu0 %v2447
    %2952 = vmatmul.bf16.gmra.mxu0 %v1187
    %v2953 = vpop.f32.mrf.mxu0
    %v2954 = vadd.f32 %v2940, %v2953
    %v2955 = vpop.f32.mrf.mxu0
    %v2956 = vadd.f32 %v2942, %v2955
    %2957 = vdwg.mxu0
    %2958 = vmatpush.bf16.msra.mxu0 %v2252
    %2959 = vmatpush.bf16.msra.mxu0 %v2248
    %2960 = vmatpush.bf16.msra.mxu0 %v2244
    %2961 = vmatpush.bf16.msra.mxu0 %v2240
    %2962 = vmatpush.bf16.msra.mxu0 %v2236
    %2963 = vmatpush.bf16.msra.mxu0 %v2232
    %2964 = vmatpush.bf16.msra.mxu0 %v2228
    %2965 = vmatpush.bf16.msra.mxu0 %v2224
    %2966 = vmatmul.bf16.gmra.mxu0 %v1180
    %v2967 = vpop.f32.mrf.mxu0
    %v2968 = vadd.f32 %v1448, %v2967
    %v2969 = vpop.f32.mrf.mxu0
    %v2970 = vadd.f32 %v1448, %v2969
    %2971 = vdwg.mxu0
    %2972 = vmatpush.bf16.msra.mxu0 %v2284
    %2973 = vmatpush.bf16.msra.mxu0 %v2280
    %2974 = vmatpush.bf16.msra.mxu0 %v2276
    %2975 = vmatpush.bf16.msra.mxu0 %v2272
    %2976 = vmatpush.bf16.msra.mxu0 %v2268
    %2977 = vmatpush.bf16.msra.mxu0 %v2264
    %2978 = vmatpush.bf16.msra.mxu0 %v2260
    %2979 = vmatpush.bf16.msra.mxu0 %v2256
    %2980 = vmatmul.bf16.gmra.mxu0 %v1181
    %v2981 = vpop.f32.mrf.mxu0
    %v2982 = vadd.f32 %v2968, %v2981
    %v2983 = vpop.f32.mrf.mxu0
    %v2984 = vadd.f32 %v2970, %v2983
    %2985 = vdwg.mxu0
    %2986 = vmatpush.bf16.msra.mxu0 %v2316
    %2987 = vmatpush.bf16.msra.mxu0 %v2312
    %2988 = vmatpush.bf16.msra.mxu0 %v2308
    %2989 = vmatpush.bf16.msra.mxu0 %v2304
    %2990 = vmatpush.bf16.msra.mxu0 %v2300
    %2991 = vmatpush.bf16.msra.mxu0 %v2296
    %2992 = vmatpush.bf16.msra.mxu0 %v2292
    %2993 = vmatpush.bf16.msra.mxu0 %v2288
    %2994 = vmatmul.bf16.gmra.mxu0 %v1182
    %v2995 = vpop.f32.mrf.mxu0
    %v2996 = vadd.f32 %v2982, %v2995
    %v2997 = vpop.f32.mrf.mxu0
    %v2998 = vadd.f32 %v2984, %v2997
    %2999 = vdwg.mxu0
    %3000 = vmatpush.bf16.msra.mxu0 %v2348
    %3001 = vmatpush.bf16.msra.mxu0 %v2344
    %3002 = vmatpush.bf16.msra.mxu0 %v2340
    %3003 = vmatpush.bf16.msra.mxu0 %v2336
    %3004 = vmatpush.bf16.msra.mxu0 %v2332
    %3005 = vmatpush.bf16.msra.mxu0 %v2328
    %3006 = vmatpush.bf16.msra.mxu0 %v2324
    %3007 = vmatpush.bf16.msra.mxu0 %v2320
    %3008 = vmatmul.bf16.gmra.mxu0 %v1183
    %v3009 = vpop.f32.mrf.mxu0
    %v3010 = vadd.f32 %v2996, %v3009
    %v3011 = vpop.f32.mrf.mxu0
    %v3012 = vadd.f32 %v2998, %v3011
    %3013 = vdwg.mxu0
    %3014 = vmatpush.bf16.msra.mxu0 %v2380
    %3015 = vmatpush.bf16.msra.mxu0 %v2376
    %3016 = vmatpush.bf16.msra.mxu0 %v2372
    %3017 = vmatpush.bf16.msra.mxu0 %v2368
    %3018 = vmatpush.bf16.msra.mxu0 %v2364
    %3019 = vmatpush.bf16.msra.mxu0 %v2360
    %3020 = vmatpush.bf16.msra.mxu0 %v2356
    %3021 = vmatpush.bf16.msra.mxu0 %v2352
    %3022 = vmatmul.bf16.gmra.mxu0 %v1184
    %v3023 = vpop.f32.mrf.mxu0
    %v3024 = vadd.f32 %v3010, %v3023
    %v3025 = vpop.f32.mrf.mxu0
    %v3026 = vadd.f32 %v3012, %v3025
    %3027 = vdwg.mxu0
    %3028 = vmatpush.bf16.msra.mxu0 %v2412
    %3029 = vmatpush.bf16.msra.mxu0 %v2408
    %3030 = vmatpush.bf16.msra.mxu0 %v2404
    %3031 = vmatpush.bf16.msra.mxu0 %v2400
    %3032 = vmatpush.bf16.msra.mxu0 %v2396
    %3033 = vmatpush.bf16.msra.mxu0 %v2392
    %3034 = vmatpush.bf16.msra.mxu0 %v2388
    %3035 = vmatpush.bf16.msra.mxu0 %v2384
    %3036 = vmatmul.bf16.gmra.mxu0 %v1185
    %v3037 = vpop.f32.mrf.mxu0
    %v3038 = vadd.f32 %v3024, %v3037
    %v3039 = vpop.f32.mrf.mxu0
    %v3040 = vadd.f32 %v3026, %v3039
    %3041 = vdwg.mxu0
    %3042 = vmatpush.bf16.msra.mxu0 %v2444
    %3043 = vmatpush.bf16.msra.mxu0 %v2440
    %3044 = vmatpush.bf16.msra.mxu0 %v2436
    %3045 = vmatpush.bf16.msra.mxu0 %v2432
    %3046 = vmatpush.bf16.msra.mxu0 %v2428
    %3047 = vmatpush.bf16.msra.mxu0 %v2424
    %3048 = vmatpush.bf16.msra.mxu0 %v2420
    %3049 = vmatpush.bf16.msra.mxu0 %v2416
    %3050 = vmatmul.bf16.gmra.mxu0 %v1186
    %v3051 = vpop.f32.mrf.mxu0
    %v3052 = vadd.f32 %v3038, %v3051
    %v3053 = vpop.f32.mrf.mxu0
    %v3054 = vadd.f32 %v3040, %v3053
    %3055 = vdwg.mxu0
    %3056 = vmatpush.bf16.msra.mxu0 %v2476
    %3057 = vmatpush.bf16.msra.mxu0 %v2472
    %3058 = vmatpush.bf16.msra.mxu0 %v2468
    %3059 = vmatpush.bf16.msra.mxu0 %v2464
    %3060 = vmatpush.bf16.msra.mxu0 %v2460
    %3061 = vmatpush.bf16.msra.mxu0 %v2456
    %3062 = vmatpush.bf16.msra.mxu0 %v2452
    %3063 = vmatpush.bf16.msra.mxu0 %v2448
    %3064 = vmatmul.bf16.gmra.mxu0 %v1187
    %v3065 = vpop.f32.mrf.mxu0
    %v3066 = vadd.f32 %v3052, %v3065
    %v3067 = vpop.f32.mrf.mxu0
    %v3068 = vadd.f32 %v3054, %v3067
    %3069 = vdwg.mxu0
    %3070 = vmatpush.bf16.msra.mxu0 %v2253
    %3071 = vmatpush.bf16.msra.mxu0 %v2249
    %3072 = vmatpush.bf16.msra.mxu0 %v2245
    %3073 = vmatpush.bf16.msra.mxu0 %v2241
    %3074 = vmatpush.bf16.msra.mxu0 %v2237
    %3075 = vmatpush.bf16.msra.mxu0 %v2233
    %3076 = vmatpush.bf16.msra.mxu0 %v2229
    %3077 = vmatpush.bf16.msra.mxu0 %v2225
    %3078 = vmatmul.bf16.gmra.mxu0 %v1180
    %v3079 = vpop.f32.mrf.mxu0
    %v3080 = vadd.f32 %v1449, %v3079
    %v3081 = vpop.f32.mrf.mxu0
    %v3082 = vadd.f32 %v1449, %v3081
    %3083 = vdwg.mxu0
    %3084 = vmatpush.bf16.msra.mxu0 %v2285
    %3085 = vmatpush.bf16.msra.mxu0 %v2281
    %3086 = vmatpush.bf16.msra.mxu0 %v2277
    %3087 = vmatpush.bf16.msra.mxu0 %v2273
    %3088 = vmatpush.bf16.msra.mxu0 %v2269
    %3089 = vmatpush.bf16.msra.mxu0 %v2265
    %3090 = vmatpush.bf16.msra.mxu0 %v2261
    %3091 = vmatpush.bf16.msra.mxu0 %v2257
    %3092 = vmatmul.bf16.gmra.mxu0 %v1181
    %v3093 = vpop.f32.mrf.mxu0
    %v3094 = vadd.f32 %v3080, %v3093
    %v3095 = vpop.f32.mrf.mxu0
    %v3096 = vadd.f32 %v3082, %v3095
    %3097 = vdwg.mxu0
    %3098 = vmatpush.bf16.msra.mxu0 %v2317
    %3099 = vmatpush.bf16.msra.mxu0 %v2313
    %3100 = vmatpush.bf16.msra.mxu0 %v2309
    %3101 = vmatpush.bf16.msra.mxu0 %v2305
    %3102 = vmatpush.bf16.msra.mxu0 %v2301
    %3103 = vmatpush.bf16.msra.mxu0 %v2297
    %3104 = vmatpush.bf16.msra.mxu0 %v2293
    %3105 = vmatpush.bf16.msra.mxu0 %v2289
    %3106 = vmatmul.bf16.gmra.mxu0 %v1182
    %v3107 = vpop.f32.mrf.mxu0
    %v3108 = vadd.f32 %v3094, %v3107
    %v3109 = vpop.f32.mrf.mxu0
    %v3110 = vadd.f32 %v3096, %v3109
    %3111 = vdwg.mxu0
    %3112 = vmatpush.bf16.msra.mxu0 %v2349
    %3113 = vmatpush.bf16.msra.mxu0 %v2345
    %3114 = vmatpush.bf16.msra.mxu0 %v2341
    %3115 = vmatpush.bf16.msra.mxu0 %v2337
    %3116 = vmatpush.bf16.msra.mxu0 %v2333
    %3117 = vmatpush.bf16.msra.mxu0 %v2329
    %3118 = vmatpush.bf16.msra.mxu0 %v2325
    %3119 = vmatpush.bf16.msra.mxu0 %v2321
    %3120 = vmatmul.bf16.gmra.mxu0 %v1183
    %v3121 = vpop.f32.mrf.mxu0
    %v3122 = vadd.f32 %v3108, %v3121
    %v3123 = vpop.f32.mrf.mxu0
    %v3124 = vadd.f32 %v3110, %v3123
    %3125 = vdwg.mxu0
    %3126 = vmatpush.bf16.msra.mxu0 %v2381
    %3127 = vmatpush.bf16.msra.mxu0 %v2377
    %3128 = vmatpush.bf16.msra.mxu0 %v2373
    %3129 = vmatpush.bf16.msra.mxu0 %v2369
    %3130 = vmatpush.bf16.msra.mxu0 %v2365
    %3131 = vmatpush.bf16.msra.mxu0 %v2361
    %3132 = vmatpush.bf16.msra.mxu0 %v2357
    %3133 = vmatpush.bf16.msra.mxu0 %v2353
    %3134 = vmatmul.bf16.gmra.mxu0 %v1184
    %v3135 = vpop.f32.mrf.mxu0
    %v3136 = vadd.f32 %v3122, %v3135
    %v3137 = vpop.f32.mrf.mxu0
    %v3138 = vadd.f32 %v3124, %v3137
    %3139 = vdwg.mxu0
    %3140 = vmatpush.bf16.msra.mxu0 %v2413
    %3141 = vmatpush.bf16.msra.mxu0 %v2409
    %3142 = vmatpush.bf16.msra.mxu0 %v2405
    %3143 = vmatpush.bf16.msra.mxu0 %v2401
    %3144 = vmatpush.bf16.msra.mxu0 %v2397
    %3145 = vmatpush.bf16.msra.mxu0 %v2393
    %3146 = vmatpush.bf16.msra.mxu0 %v2389
    %3147 = vmatpush.bf16.msra.mxu0 %v2385
    %3148 = vmatmul.bf16.gmra.mxu0 %v1185
    %v3149 = vpop.f32.mrf.mxu0
    %v3150 = vadd.f32 %v3136, %v3149
    %v3151 = vpop.f32.mrf.mxu0
    %v3152 = vadd.f32 %v3138, %v3151
    %3153 = vdwg.mxu0
    %3154 = vmatpush.bf16.msra.mxu0 %v2445
    %3155 = vmatpush.bf16.msra.mxu0 %v2441
    %3156 = vmatpush.bf16.msra.mxu0 %v2437
    %3157 = vmatpush.bf16.msra.mxu0 %v2433
    %3158 = vmatpush.bf16.msra.mxu0 %v2429
    %3159 = vmatpush.bf16.msra.mxu0 %v2425
    %3160 = vmatpush.bf16.msra.mxu0 %v2421
    %3161 = vmatpush.bf16.msra.mxu0 %v2417
    %3162 = vmatmul.bf16.gmra.mxu0 %v1186
    %v3163 = vpop.f32.mrf.mxu0
    %v3164 = vadd.f32 %v3150, %v3163
    %v3165 = vpop.f32.mrf.mxu0
    %v3166 = vadd.f32 %v3152, %v3165
    %3167 = vdwg.mxu0
    %3168 = vmatpush.bf16.msra.mxu0 %v2477
    %3169 = vmatpush.bf16.msra.mxu0 %v2473
    %3170 = vmatpush.bf16.msra.mxu0 %v2469
    %3171 = vmatpush.bf16.msra.mxu0 %v2465
    %3172 = vmatpush.bf16.msra.mxu0 %v2461
    %3173 = vmatpush.bf16.msra.mxu0 %v2457
    %3174 = vmatpush.bf16.msra.mxu0 %v2453
    %3175 = vmatpush.bf16.msra.mxu0 %v2449
    %3176 = vmatmul.bf16.gmra.mxu0 %v1187
    %v3177 = vpop.f32.mrf.mxu0
    %v3178 = vadd.f32 %v3164, %v3177
    %v3179 = vpop.f32.mrf.mxu0
    %v3180 = vadd.f32 %v3166, %v3179
    %3181 = vdwg.mxu0
    %v3182 = vmax.f32 %v2842, 0.0
    %v3183 = vmax.f32 %v2954, 0.0
    %v3184 = vmax.f32 %v3066, 0.0
    %v3185 = vmax.f32 %v3178, 0.0
    %v3186 = vmax.f32 %v2844, 0.0
    %v3187 = vmax.f32 %v2956, 0.0
    %v3188 = vmax.f32 %v3068, 0.0
    %v3189 = vmax.f32 %v3180, 0.0
    %v3190 = vpack.c.bf16 %v3186, %v3182
    %v3191 = vpack.c.bf16 %v3187, %v3183
    %v3192 = vpack.c.bf16 %v3188, %v3184
    %v3193 = vpack.c.bf16 %v3189, %v3185
    %v3194 = vld [vmem:[#allocation7] sm:$0xf]
    %v3195 = vld [vmem:[#allocation7 + $0x4] sm:$0xf]
    %v3196 = vld [vmem:[#allocation7 + $0x8] sm:$0xf]
    %v3197 = vld [vmem:[#allocation7 + $0xc] sm:$0xf]
    %v3198 = vld [vmem:[#allocation7 + $0x10] sm:$0xf]
    %v3199 = vld [vmem:[#allocation7 + $0x14] sm:$0xf]
    %v3200 = vld [vmem:[#allocation7 + $0x18] sm:$0xf]
    %v3201 = vld [vmem:[#allocation7 + $0x1c] sm:$0xf]
    %v3202 = vld [vmem:[#allocation7 + $0x20] sm:$0xf]
    %v3203 = vld [vmem:[#allocation7 + $0x24] sm:$0xf]
    %v3204 = vld [vmem:[#allocation7 + $0x28] sm:$0xf]
    %v3205 = vld [vmem:[#allocation7 + $0x2c] sm:$0xf]
    %v3206 = vld [vmem:[#allocation7 + $0x30] sm:$0xf]
    %v3207 = vld [vmem:[#allocation7 + $0x34] sm:$0xf]
    %v3208 = vld [vmem:[#allocation7 + $0x38] sm:$0xf]
    %v3209 = vld [vmem:[#allocation7 + $0x3c] sm:$0xf]
    %v3210 = vld [vmem:[#allocation7 + $0x40] sm:$0xf]
    %v3211 = vld [vmem:[#allocation7 + $0x44] sm:$0xf]
    %v3212 = vld [vmem:[#allocation7 + $0x48] sm:$0xf]
    %v3213 = vld [vmem:[#allocation7 + $0x4c] sm:$0xf]
    %v3214 = vld [vmem:[#allocation7 + $0x50] sm:$0xf]
    %v3215 = vld [vmem:[#allocation7 + $0x54] sm:$0xf]
    %v3216 = vld [vmem:[#allocation7 + $0x58] sm:$0xf]
    %v3217 = vld [vmem:[#allocation7 + $0x5c] sm:$0xf]
    %v3218 = vld [vmem:[#allocation7 + $0x60] sm:$0xf]
    %v3219 = vld [vmem:[#allocation7 + $0x64] sm:$0xf]
    %v3220 = vld [vmem:[#allocation7 + $0x68] sm:$0xf]
    %v3221 = vld [vmem:[#allocation7 + $0x6c] sm:$0xf]
    %v3222 = vld [vmem:[#allocation7 + $0x70] sm:$0xf]
    %v3223 = vld [vmem:[#allocation7 + $0x74] sm:$0xf]
    %v3224 = vld [vmem:[#allocation7 + $0x78] sm:$0xf]
    %v3225 = vld [vmem:[#allocation7 + $0x7c] sm:$0xf]
    %v3226 = vld [vmem:[#allocation7 + $0x80] sm:$0xf]
    %v3227 = vld [vmem:[#allocation7 + $0x84] sm:$0xf]
    %v3228 = vld [vmem:[#allocation7 + $0x88] sm:$0xf]
    %v3229 = vld [vmem:[#allocation7 + $0x8c] sm:$0xf]
    %v3230 = vld [vmem:[#allocation7 + $0x90] sm:$0xf]
    %v3231 = vld [vmem:[#allocation7 + $0x94] sm:$0xf]
    %v3232 = vld [vmem:[#allocation7 + $0x98] sm:$0xf]
    %v3233 = vld [vmem:[#allocation7 + $0x9c] sm:$0xf]
    %v3234 = vld [vmem:[#allocation7 + $0xa0] sm:$0xf]
    %v3235 = vld [vmem:[#allocation7 + $0xa4] sm:$0xf]
    %v3236 = vld [vmem:[#allocation7 + $0xa8] sm:$0xf]
    %v3237 = vld [vmem:[#allocation7 + $0xac] sm:$0xf]
    %v3238 = vld [vmem:[#allocation7 + $0xb0] sm:$0xf]
    %v3239 = vld [vmem:[#allocation7 + $0xb4] sm:$0xf]
    %v3240 = vld [vmem:[#allocation7 + $0xb8] sm:$0xf]
    %v3241 = vld [vmem:[#allocation7 + $0xbc] sm:$0xf]
    %v3242 = vld [vmem:[#allocation7 + $0xc0] sm:$0xf]
    %v3243 = vld [vmem:[#allocation7 + $0xc4] sm:$0xf]
    %v3244 = vld [vmem:[#allocation7 + $0xc8] sm:$0xf]
    %v3245 = vld [vmem:[#allocation7 + $0xcc] sm:$0xf]
    %v3246 = vld [vmem:[#allocation7 + $0xd0] sm:$0xf]
    %v3247 = vld [vmem:[#allocation7 + $0xd4] sm:$0xf]
    %v3248 = vld [vmem:[#allocation7 + $0xd8] sm:$0xf]
    %v3249 = vld [vmem:[#allocation7 + $0xdc] sm:$0xf]
    %v3250 = vld [vmem:[#allocation7 + $0xe0] sm:$0xf]
    %v3251 = vld [vmem:[#allocation7 + $0xe4] sm:$0xf]
    %v3252 = vld [vmem:[#allocation7 + $0xe8] sm:$0xf]
    %v3253 = vld [vmem:[#allocation7 + $0xec] sm:$0xf]
    %v3254 = vld [vmem:[#allocation7 + $0xf0] sm:$0xf]
    %v3255 = vld [vmem:[#allocation7 + $0xf4] sm:$0xf]
    %v3256 = vld [vmem:[#allocation7 + $0xf8] sm:$0xf]
    %v3257 = vld [vmem:[#allocation7 + $0xfc] sm:$0xf]
    %v3258 = vld [vmem:[%s6] sm:$0x1]
    %v3260 = vperm.slane %v3258, 0
    %v3326 = vunpack.c.l.b16 %v3194
    %v3327 = vunpack.c.l.b16 %v3195
    %v3328 = vunpack.c.l.b16 %v3196
    %v3329 = vunpack.c.l.b16 %v3197
    %v3330 = vunpack.c.l.b16 %v3198
    %v3331 = vunpack.c.l.b16 %v3199
    %v3332 = vunpack.c.l.b16 %v3200
    %v3333 = vunpack.c.l.b16 %v3201
    %v3334 = vunpack.c.l.b16 %v3202
    %v3335 = vunpack.c.l.b16 %v3203
    %v3336 = vunpack.c.l.b16 %v3204
    %v3337 = vunpack.c.l.b16 %v3205
    %v3338 = vunpack.c.l.b16 %v3206
    %v3339 = vunpack.c.l.b16 %v3207
    %v3340 = vunpack.c.l.b16 %v3208
    %v3341 = vunpack.c.l.b16 %v3209
    %v3342 = vunpack.c.l.b16 %v3210
    %v3343 = vunpack.c.l.b16 %v3211
    %v3344 = vunpack.c.l.b16 %v3212
    %v3345 = vunpack.c.l.b16 %v3213
    %v3346 = vunpack.c.l.b16 %v3214
    %v3347 = vunpack.c.l.b16 %v3215
    %v3348 = vunpack.c.l.b16 %v3216
    %v3349 = vunpack.c.l.b16 %v3217
    %v3350 = vunpack.c.l.b16 %v3218
    %v3351 = vunpack.c.l.b16 %v3219
    %v3352 = vunpack.c.l.b16 %v3220
    %v3353 = vunpack.c.l.b16 %v3221
    %v3354 = vunpack.c.l.b16 %v3222
    %v3355 = vunpack.c.l.b16 %v3223
    %v3356 = vunpack.c.l.b16 %v3224
    %v3357 = vunpack.c.l.b16 %v3225
    %v3358 = vunpack.c.l.b16 %v3226
    %v3359 = vunpack.c.l.b16 %v3227
    %v3360 = vunpack.c.l.b16 %v3228
    %v3361 = vunpack.c.l.b16 %v3229
    %v3362 = vunpack.c.l.b16 %v3230
    %v3363 = vunpack.c.l.b16 %v3231
    %v3364 = vunpack.c.l.b16 %v3232
    %v3365 = vunpack.c.l.b16 %v3233
    %v3366 = vunpack.c.l.b16 %v3234
    %v3367 = vunpack.c.l.b16 %v3235
    %v3368 = vunpack.c.l.b16 %v3236
    %v3369 = vunpack.c.l.b16 %v3237
    %v3370 = vunpack.c.l.b16 %v3238
    %v3371 = vunpack.c.l.b16 %v3239
    %v3372 = vunpack.c.l.b16 %v3240
    %v3373 = vunpack.c.l.b16 %v3241
    %v3374 = vunpack.c.l.b16 %v3242
    %v3375 = vunpack.c.l.b16 %v3243
    %v3376 = vunpack.c.l.b16 %v3244
    %v3377 = vunpack.c.l.b16 %v3245
    %v3378 = vunpack.c.l.b16 %v3246
    %v3379 = vunpack.c.l.b16 %v3247
    %v3380 = vunpack.c.l.b16 %v3248
    %v3381 = vunpack.c.l.b16 %v3249
    %v3382 = vunpack.c.l.b16 %v3250
    %v3383 = vunpack.c.l.b16 %v3251
    %v3384 = vunpack.c.l.b16 %v3252
    %v3385 = vunpack.c.l.b16 %v3253
    %v3386 = vunpack.c.l.b16 %v3254
    %v3387 = vunpack.c.l.b16 %v3255
    %v3388 = vunpack.c.l.b16 %v3256
    %v3389 = vunpack.c.l.b16 %v3257
    %v3390 = vpack.c.b16 %v3327, %v3326
    %v3391 = vpack.c.b16 %v3329, %v3328
    %v3392 = vpack.c.b16 %v3331, %v3330
    %v3393 = vpack.c.b16 %v3333, %v3332
    %v3394 = vpack.c.b16 %v3335, %v3334
    %v3395 = vpack.c.b16 %v3337, %v3336
    %v3396 = vpack.c.b16 %v3339, %v3338
    %v3397 = vpack.c.b16 %v3341, %v3340
    %v3398 = vpack.c.b16 %v3343, %v3342
    %v3399 = vpack.c.b16 %v3345, %v3344
    %v3400 = vpack.c.b16 %v3347, %v3346
    %v3401 = vpack.c.b16 %v3349, %v3348
    %v3402 = vpack.c.b16 %v3351, %v3350
    %v3403 = vpack.c.b16 %v3353, %v3352
    %v3404 = vpack.c.b16 %v3355, %v3354
    %v3405 = vpack.c.b16 %v3357, %v3356
    %v3406 = vpack.c.b16 %v3359, %v3358
    %v3407 = vpack.c.b16 %v3361, %v3360
    %v3408 = vpack.c.b16 %v3363, %v3362
    %v3409 = vpack.c.b16 %v3365, %v3364
    %v3410 = vpack.c.b16 %v3367, %v3366
    %v3411 = vpack.c.b16 %v3369, %v3368
    %v3412 = vpack.c.b16 %v3371, %v3370
    %v3413 = vpack.c.b16 %v3373, %v3372
    %v3414 = vpack.c.b16 %v3375, %v3374
    %v3415 = vpack.c.b16 %v3377, %v3376
    %v3416 = vpack.c.b16 %v3379, %v3378
    %v3417 = vpack.c.b16 %v3381, %v3380
    %v3418 = vpack.c.b16 %v3383, %v3382
    %v3419 = vpack.c.b16 %v3385, %v3384
    %v3420 = vpack.c.b16 %v3387, %v3386
    %v3421 = vpack.c.b16 %v3389, %v3388
    %3454 = vmatpush.bf16.msra.mxu0 %v3397
    %3455 = vmatpush.bf16.msra.mxu0 %v3396
    %3456 = vmatpush.bf16.msra.mxu0 %v3395
    %3457 = vmatpush.bf16.msra.mxu0 %v3394
    %3458 = vmatpush.bf16.msra.mxu0 %v3393
    %3459 = vmatpush.bf16.msra.mxu0 %v3392
    %3460 = vmatpush.bf16.msra.mxu0 %v3391
    %3461 = vmatpush.bf16.msra.mxu0 %v3390
    %3462 = vmatmul.bf16.gmra.mxu0 %v3190
    %v3463 = vpop.f32.mrf.mxu0
    %v3464 = vadd.f32 %v3260, %v3463
    %v3465 = vpop.f32.mrf.mxu0
    %v3466 = vadd.f32 %v3260, %v3465
    %3467 = vdwg.mxu0
    %3468 = vmatpush.bf16.msra.mxu0 %v3405
    %3469 = vmatpush.bf16.msra.mxu0 %v3404
    %3470 = vmatpush.bf16.msra.mxu0 %v3403
    %3471 = vmatpush.bf16.msra.mxu0 %v3402
    %3472 = vmatpush.bf16.msra.mxu0 %v3401
    %3473 = vmatpush.bf16.msra.mxu0 %v3400
    %3474 = vmatpush.bf16.msra.mxu0 %v3399
    %3475 = vmatpush.bf16.msra.mxu0 %v3398
    %3476 = vmatmul.bf16.gmra.mxu0 %v3191
    %v3477 = vpop.f32.mrf.mxu0
    %v3478 = vadd.f32 %v3464, %v3477
    %v3479 = vpop.f32.mrf.mxu0
    %v3480 = vadd.f32 %v3466, %v3479
    %3481 = vdwg.mxu0
    %3482 = vmatpush.bf16.msra.mxu0 %v3413
    %3483 = vmatpush.bf16.msra.mxu0 %v3412
    %3484 = vmatpush.bf16.msra.mxu0 %v3411
    %3485 = vmatpush.bf16.msra.mxu0 %v3410
    %3486 = vmatpush.bf16.msra.mxu0 %v3409
    %3487 = vmatpush.bf16.msra.mxu0 %v3408
    %3488 = vmatpush.bf16.msra.mxu0 %v3407
    %3489 = vmatpush.bf16.msra.mxu0 %v3406
    %3490 = vmatmul.bf16.gmra.mxu0 %v3192
    %v3491 = vpop.f32.mrf.mxu0
    %v3492 = vadd.f32 %v3478, %v3491
    %v3493 = vpop.f32.mrf.mxu0
    %v3494 = vadd.f32 %v3480, %v3493
    %3495 = vdwg.mxu0
    %3496 = vmatpush.bf16.msra.mxu0 %v3421
    %3497 = vmatpush.bf16.msra.mxu0 %v3420
    %3498 = vmatpush.bf16.msra.mxu0 %v3419
    %3499 = vmatpush.bf16.msra.mxu0 %v3418
    %3500 = vmatpush.bf16.msra.mxu0 %v3417
    %3501 = vmatpush.bf16.msra.mxu0 %v3416
    %3502 = vmatpush.bf16.msra.mxu0 %v3415
    %3503 = vmatpush.bf16.msra.mxu0 %v3414
    %3504 = vmatmul.bf16.gmra.mxu0 %v3193
    %v3505 = vpop.f32.mrf.mxu0
    %v3506 = vadd.f32 %v3492, %v3505
    %v3507 = vpop.f32.mrf.mxu0
    %v3508 = vadd.f32 %v3494, %v3507
    %3509 = vdwg.mxu0
    %3510 = vst [vmem:[#allocation14] sm:$0xff] %v3506
    %3511 = vst [vmem:[#allocation14 + $0x8] sm:$0xff] %v3508
    %v3512 = vpack.c.bf16 %v3508, %v3506
    %v3513 = vld [vmem:[#allocation8] sm:$0xff]
    %v3514 = vld [vmem:[#allocation8 + $0x8] sm:$0xff]
    %v3515 = vld [vmem:[#allocation8 + $0x10] sm:$0xff]
    %v3516 = vld [vmem:[#allocation8 + $0x18] sm:$0xff]
    %v3517 = vld [vmem:[#allocation8 + $0x20] sm:$0xff]
    %v3518 = vld [vmem:[#allocation8 + $0x28] sm:$0xff]
    %v3519 = vld [vmem:[#allocation8 + $0x30] sm:$0xff]
    %v3520 = vld [vmem:[#allocation8 + $0x38] sm:$0xff]
    %v3521 = vld [vmem:[#allocation8 + $0x40] sm:$0xff]
    %v3522 = vld [vmem:[#allocation8 + $0x48] sm:$0xff]
    %v3523 = vld [vmem:[#allocation8 + $0x50] sm:$0xff]
    %v3524 = vld [vmem:[#allocation8 + $0x58] sm:$0xff]
    %v3525 = vld [vmem:[#allocation8 + $0x60] sm:$0xff]
    %v3526 = vld [vmem:[#allocation8 + $0x68] sm:$0xff]
    %v3527 = vld [vmem:[#allocation8 + $0x70] sm:$0xff]
    %v3528 = vld [vmem:[#allocation8 + $0x78] sm:$0xff]
    %v3529 = vld [vmem:[#allocation8 + $0x80] sm:$0xff]
    %v3530 = vld [vmem:[#allocation8 + $0x88] sm:$0xff]
    %v3531 = vld [vmem:[#allocation8 + $0x90] sm:$0xff]
    %v3532 = vld [vmem:[#allocation8 + $0x98] sm:$0xff]
    %v3533 = vld [vmem:[#allocation8 + $0xa0] sm:$0xff]
    %v3534 = vld [vmem:[#allocation8 + $0xa8] sm:$0xff]
    %v3535 = vld [vmem:[#allocation8 + $0xb0] sm:$0xff]
    %v3536 = vld [vmem:[#allocation8 + $0xb8] sm:$0xff]
    %v3537 = vld [vmem:[#allocation8 + $0xc0] sm:$0xff]
    %v3538 = vld [vmem:[#allocation8 + $0xc8] sm:$0xff]
    %v3539 = vld [vmem:[#allocation8 + $0xd0] sm:$0xff]
    %v3540 = vld [vmem:[#allocation8 + $0xd8] sm:$0xff]
    %v3541 = vld [vmem:[#allocation8 + $0xe0] sm:$0xff]
    %v3542 = vld [vmem:[#allocation8 + $0xe8] sm:$0xff]
    %v3543 = vld [vmem:[#allocation8 + $0xf0] sm:$0xff]
    %v3544 = vld [vmem:[#allocation8 + $0xf8] sm:$0xff]
    %v3545 = vld [vmem:[%s8] sm:$0xf]
    %v3547 = vperm.slane %v3545, 0
    %v3548 = vperm.slane %v3545, 1
    %v3549 = vperm.slane %v3545, 2
    %v3550 = vperm.slane %v3545, 3
    %v3587 = vunpack.c.l.b16 %v3513
    %v3588 = vunpack.c.h.b16 %v3513
    %v3589 = vunpack.c.l.b16 %v3514
    %v3590 = vunpack.c.h.b16 %v3514
    %v3591 = vunpack.c.l.b16 %v3515
    %v3592 = vunpack.c.h.b16 %v3515
    %v3593 = vunpack.c.l.b16 %v3516
    %v3594 = vunpack.c.h.b16 %v3516
    %v3595 = vunpack.c.l.b16 %v3517
    %v3596 = vunpack.c.h.b16 %v3517
    %v3597 = vunpack.c.l.b16 %v3518
    %v3598 = vunpack.c.h.b16 %v3518
    %v3599 = vunpack.c.l.b16 %v3519
    %v3600 = vunpack.c.h.b16 %v3519
    %v3601 = vunpack.c.l.b16 %v3520
    %v3602 = vunpack.c.h.b16 %v3520
    %v3603 = vunpack.c.l.b16 %v3521
    %v3604 = vunpack.c.h.b16 %v3521
    %v3605 = vunpack.c.l.b16 %v3522
    %v3606 = vunpack.c.h.b16 %v3522
    %v3607 = vunpack.c.l.b16 %v3523
    %v3608 = vunpack.c.h.b16 %v3523
    %v3609 = vunpack.c.l.b16 %v3524
    %v3610 = vunpack.c.h.b16 %v3524
    %v3611 = vunpack.c.l.b16 %v3525
    %v3612 = vunpack.c.h.b16 %v3525
    %v3613 = vunpack.c.l.b16 %v3526
    %v3614 = vunpack.c.h.b16 %v3526
    %v3615 = vunpack.c.l.b16 %v3527
    %v3616 = vunpack.c.h.b16 %v3527
    %v3617 = vunpack.c.l.b16 %v3528
    %v3618 = vunpack.c.h.b16 %v3528
    %v3619 = vunpack.c.l.b16 %v3529
    %v3620 = vunpack.c.h.b16 %v3529
    %v3621 = vunpack.c.l.b16 %v3530
    %v3622 = vunpack.c.h.b16 %v3530
    %v3623 = vunpack.c.l.b16 %v3531
    %v3624 = vunpack.c.h.b16 %v3531
    %v3625 = vunpack.c.l.b16 %v3532
    %v3626 = vunpack.c.h.b16 %v3532
    %v3627 = vunpack.c.l.b16 %v3533
    %v3628 = vunpack.c.h.b16 %v3533
    %v3629 = vunpack.c.l.b16 %v3534
    %v3630 = vunpack.c.h.b16 %v3534
    %v3631 = vunpack.c.l.b16 %v3535
    %v3632 = vunpack.c.h.b16 %v3535
    %v3633 = vunpack.c.l.b16 %v3536
    %v3634 = vunpack.c.h.b16 %v3536
    %v3635 = vunpack.c.l.b16 %v3537
    %v3636 = vunpack.c.h.b16 %v3537
    %v3637 = vunpack.c.l.b16 %v3538
    %v3638 = vunpack.c.h.b16 %v3538
    %v3639 = vunpack.c.l.b16 %v3539
    %v3640 = vunpack.c.h.b16 %v3539
    %v3641 = vunpack.c.l.b16 %v3540
    %v3642 = vunpack.c.h.b16 %v3540
    %v3643 = vunpack.c.l.b16 %v3541
    %v3644 = vunpack.c.h.b16 %v3541
    %v3645 = vunpack.c.l.b16 %v3542
    %v3646 = vunpack.c.h.b16 %v3542
    %v3647 = vunpack.c.l.b16 %v3543
    %v3648 = vunpack.c.h.b16 %v3543
    %v3649 = vunpack.c.l.b16 %v3544
    %v3650 = vunpack.c.h.b16 %v3544
    %v3651 = vpack.c.b16 %v3591, %v3587
    %v3652 = vpack.c.b16 %v3592, %v3588
    %v3653 = vpack.c.b16 %v3593, %v3589
    %v3654 = vpack.c.b16 %v3594, %v3590
    %v3655 = vpack.c.b16 %v3599, %v3595
    %v3656 = vpack.c.b16 %v3600, %v3596
    %v3657 = vpack.c.b16 %v3601, %v3597
    %v3658 = vpack.c.b16 %v3602, %v3598
    %v3659 = vpack.c.b16 %v3607, %v3603
    %v3660 = vpack.c.b16 %v3608, %v3604
    %v3661 = vpack.c.b16 %v3609, %v3605
    %v3662 = vpack.c.b16 %v3610, %v3606
    %v3663 = vpack.c.b16 %v3615, %v3611
    %v3664 = vpack.c.b16 %v3616, %v3612
    %v3665 = vpack.c.b16 %v3617, %v3613
    %v3666 = vpack.c.b16 %v3618, %v3614
    %v3667 = vpack.c.b16 %v3623, %v3619
    %v3668 = vpack.c.b16 %v3624, %v3620
    %v3669 = vpack.c.b16 %v3625, %v3621
    %v3670 = vpack.c.b16 %v3626, %v3622
    %v3671 = vpack.c.b16 %v3631, %v3627
    %v3672 = vpack.c.b16 %v3632, %v3628
    %v3673 = vpack.c.b16 %v3633, %v3629
    %v3674 = vpack.c.b16 %v3634, %v3630
    %v3675 = vpack.c.b16 %v3639, %v3635
    %v3676 = vpack.c.b16 %v3640, %v3636
    %v3677 = vpack.c.b16 %v3641, %v3637
    %v3678 = vpack.c.b16 %v3642, %v3638
    %v3679 = vpack.c.b16 %v3647, %v3643
    %v3680 = vpack.c.b16 %v3648, %v3644
    %v3681 = vpack.c.b16 %v3649, %v3645
    %v3682 = vpack.c.b16 %v3650, %v3646
    %3715 = vmatpush.bf16.msra.mxu0 %v3679
    %3716 = vmatpush.bf16.msra.mxu0 %v3675
    %3717 = vmatpush.bf16.msra.mxu0 %v3671
    %3718 = vmatpush.bf16.msra.mxu0 %v3667
    %3719 = vmatpush.bf16.msra.mxu0 %v3663
    %3720 = vmatpush.bf16.msra.mxu0 %v3659
    %3721 = vmatpush.bf16.msra.mxu0 %v3655
    %3722 = vmatpush.bf16.msra.mxu0 %v3651
    %3723 = vmatmul.bf16.gmra.mxu0 %v3512
    %v3724 = vpop.f32.mrf.mxu0
    %v3725 = vadd.f32 %v3547, %v3724
    %v3726 = vpop.f32.mrf.mxu0
    %v3727 = vadd.f32 %v3547, %v3726
    %3728 = vdwg.mxu0
    %3729 = vmatpush.bf16.msra.mxu0 %v3680
    %3730 = vmatpush.bf16.msra.mxu0 %v3676
    %3731 = vmatpush.bf16.msra.mxu0 %v3672
    %3732 = vmatpush.bf16.msra.mxu0 %v3668
    %3733 = vmatpush.bf16.msra.mxu0 %v3664
    %3734 = vmatpush.bf16.msra.mxu0 %v3660
    %3735 = vmatpush.bf16.msra.mxu0 %v3656
    %3736 = vmatpush.bf16.msra.mxu0 %v3652
    %3737 = vmatmul.bf16.gmra.mxu0 %v3512
    %v3738 = vpop.f32.mrf.mxu0
    %v3739 = vadd.f32 %v3548, %v3738
    %v3740 = vpop.f32.mrf.mxu0
    %v3741 = vadd.f32 %v3548, %v3740
    %3742 = vdwg.mxu0
    %3743 = vmatpush.bf16.msra.mxu0 %v3681
    %3744 = vmatpush.bf16.msra.mxu0 %v3677
    %3745 = vmatpush.bf16.msra.mxu0 %v3673
    %3746 = vmatpush.bf16.msra.mxu0 %v3669
    %3747 = vmatpush.bf16.msra.mxu0 %v3665
    %3748 = vmatpush.bf16.msra.mxu0 %v3661
    %3749 = vmatpush.bf16.msra.mxu0 %v3657
    %3750 = vmatpush.bf16.msra.mxu0 %v3653
    %3751 = vmatmul.bf16.gmra.mxu0 %v3512
    %v3752 = vpop.f32.mrf.mxu0
    %v3753 = vadd.f32 %v3549, %v3752
    %v3754 = vpop.f32.mrf.mxu0
    %v3755 = vadd.f32 %v3549, %v3754
    %3756 = vdwg.mxu0
    %3757 = vmatpush.bf16.msra.mxu0 %v3682
    %3758 = vmatpush.bf16.msra.mxu0 %v3678
    %3759 = vmatpush.bf16.msra.mxu0 %v3674
    %3760 = vmatpush.bf16.msra.mxu0 %v3670
    %3761 = vmatpush.bf16.msra.mxu0 %v3666
    %3762 = vmatpush.bf16.msra.mxu0 %v3662
    %3763 = vmatpush.bf16.msra.mxu0 %v3658
    %3764 = vmatpush.bf16.msra.mxu0 %v3654
    %3765 = vmatmul.bf16.gmra.mxu0 %v3512
    %v3766 = vpop.f32.mrf.mxu0
    %v3767 = vadd.f32 %v3550, %v3766
    %v3768 = vpop.f32.mrf.mxu0
    %v3769 = vadd.f32 %v3550, %v3768
    %3770 = vdwg.mxu0
    %v3771 = vtanh.pop %v3725
    %v3772 = vtanh.pop %v3739
    %v3773 = vtanh.pop %v3753
    %v3774 = vtanh.pop %v3767
    %v3775 = vtanh.pop %v3727
    %v3776 = vtanh.pop %v3741
    %v3777 = vtanh.pop %v3755
    %v3778 = vtanh.pop %v3769
    %v3779 = vpack.c.bf16 %v3775, %v3771
    %v3780 = vpack.c.bf16 %v3776, %v3772
    %v3781 = vpack.c.bf16 %v3777, %v3773
    %v3782 = vpack.c.bf16 %v3778, %v3774
    %v3783 = vld [vmem:[#allocation10] sm:$0xff]
    %v3784 = vld [vmem:[#allocation10 + $0x8] sm:$0xff]
    %v3785 = vld [vmem:[#allocation10 + $0x10] sm:$0xff]
    %v3786 = vld [vmem:[#allocation10 + $0x18] sm:$0xff]
    %v3787 = vld [vmem:[#allocation10 + $0x20] sm:$0xff]
    %v3788 = vld [vmem:[#allocation10 + $0x28] sm:$0xff]
    %v3789 = vld [vmem:[#allocation10 + $0x30] sm:$0xff]
    %v3790 = vld [vmem:[#allocation10 + $0x38] sm:$0xff]
    %v3791 = vld [vmem:[#allocation10 + $0x40] sm:$0xff]
    %v3792 = vld [vmem:[#allocation10 + $0x48] sm:$0xff]
    %v3793 = vld [vmem:[#allocation10 + $0x50] sm:$0xff]
    %v3794 = vld [vmem:[#allocation10 + $0x58] sm:$0xff]
    %v3795 = vld [vmem:[#allocation10 + $0x60] sm:$0xff]
    %v3796 = vld [vmem:[#allocation10 + $0x68] sm:$0xff]
    %v3797 = vld [vmem:[#allocation10 + $0x70] sm:$0xff]
    %v3798 = vld [vmem:[#allocation10 + $0x78] sm:$0xff]
    %v3799 = vld [vmem:[#allocation10 + $0x80] sm:$0xff]
    %v3800 = vld [vmem:[#allocation10 + $0x88] sm:$0xff]
    %v3801 = vld [vmem:[#allocation10 + $0x90] sm:$0xff]
    %v3802 = vld [vmem:[#allocation10 + $0x98] sm:$0xff]
    %v3803 = vld [vmem:[#allocation10 + $0xa0] sm:$0xff]
    %v3804 = vld [vmem:[#allocation10 + $0xa8] sm:$0xff]
    %v3805 = vld [vmem:[#allocation10 + $0xb0] sm:$0xff]
    %v3806 = vld [vmem:[#allocation10 + $0xb8] sm:$0xff]
    %v3807 = vld [vmem:[#allocation10 + $0xc0] sm:$0xff]
    %v3808 = vld [vmem:[#allocation10 + $0xc8] sm:$0xff]
    %v3809 = vld [vmem:[#allocation10 + $0xd0] sm:$0xff]
    %v3810 = vld [vmem:[#allocation10 + $0xd8] sm:$0xff]
    %v3811 = vld [vmem:[#allocation10 + $0xe0] sm:$0xff]
    %v3812 = vld [vmem:[#allocation10 + $0xe8] sm:$0xff]
    %v3813 = vld [vmem:[#allocation10 + $0xf0] sm:$0xff]
    %v3814 = vld [vmem:[#allocation10 + $0xf8] sm:$0xff]
    %v3815 = vld [vmem:[#allocation10 + $0x100] sm:$0xff]
    %v3816 = vld [vmem:[#allocation10 + $0x108] sm:$0xff]
    %v3817 = vld [vmem:[#allocation10 + $0x110] sm:$0xff]
    %v3818 = vld [vmem:[#allocation10 + $0x118] sm:$0xff]
    %v3819 = vld [vmem:[#allocation10 + $0x120] sm:$0xff]
    %v3820 = vld [vmem:[#allocation10 + $0x128] sm:$0xff]
    %v3821 = vld [vmem:[#allocation10 + $0x130] sm:$0xff]
    %v3822 = vld [vmem:[#allocation10 + $0x138] sm:$0xff]
    %v3823 = vld [vmem:[#allocation10 + $0x140] sm:$0xff]
    %v3824 = vld [vmem:[#allocation10 + $0x148] sm:$0xff]
    %v3825 = vld [vmem:[#allocation10 + $0x150] sm:$0xff]
    %v3826 = vld [vmem:[#allocation10 + $0x158] sm:$0xff]
    %v3827 = vld [vmem:[#allocation10 + $0x160] sm:$0xff]
    %v3828 = vld [vmem:[#allocation10 + $0x168] sm:$0xff]
    %v3829 = vld [vmem:[#allocation10 + $0x170] sm:$0xff]
    %v3830 = vld [vmem:[#allocation10 + $0x178] sm:$0xff]
    %v3831 = vld [vmem:[#allocation10 + $0x180] sm:$0xff]
    %v3832 = vld [vmem:[#allocation10 + $0x188] sm:$0xff]
    %v3833 = vld [vmem:[#allocation10 + $0x190] sm:$0xff]
    %v3834 = vld [vmem:[#allocation10 + $0x198] sm:$0xff]
    %v3835 = vld [vmem:[#allocation10 + $0x1a0] sm:$0xff]
    %v3836 = vld [vmem:[#allocation10 + $0x1a8] sm:$0xff]
    %v3837 = vld [vmem:[#allocation10 + $0x1b0] sm:$0xff]
    %v3838 = vld [vmem:[#allocation10 + $0x1b8] sm:$0xff]
    %v3839 = vld [vmem:[#allocation10 + $0x1c0] sm:$0xff]
    %v3840 = vld [vmem:[#allocation10 + $0x1c8] sm:$0xff]
    %v3841 = vld [vmem:[#allocation10 + $0x1d0] sm:$0xff]
    %v3842 = vld [vmem:[#allocation10 + $0x1d8] sm:$0xff]
    %v3843 = vld [vmem:[#allocation10 + $0x1e0] sm:$0xff]
    %v3844 = vld [vmem:[#allocation10 + $0x1e8] sm:$0xff]
    %v3845 = vld [vmem:[#allocation10 + $0x1f0] sm:$0xff]
    %v3846 = vld [vmem:[#allocation10 + $0x1f8] sm:$0xff]
    %v3847 = vld [vmem:[#allocation10 + $0x200] sm:$0xff]
    %v3848 = vld [vmem:[#allocation10 + $0x208] sm:$0xff]
    %v3849 = vld [vmem:[#allocation10 + $0x210] sm:$0xff]
    %v3850 = vld [vmem:[#allocation10 + $0x218] sm:$0xff]
    %v3851 = vld [vmem:[#allocation10 + $0x220] sm:$0xff]
    %v3852 = vld [vmem:[#allocation10 + $0x228] sm:$0xff]
    %v3853 = vld [vmem:[#allocation10 + $0x230] sm:$0xff]
    %v3854 = vld [vmem:[#allocation10 + $0x238] sm:$0xff]
    %v3855 = vld [vmem:[#allocation10 + $0x240] sm:$0xff]
    %v3856 = vld [vmem:[#allocation10 + $0x248] sm:$0xff]
    %v3857 = vld [vmem:[#allocation10 + $0x250] sm:$0xff]
    %v3858 = vld [vmem:[#allocation10 + $0x258] sm:$0xff]
    %v3859 = vld [vmem:[#allocation10 + $0x260] sm:$0xff]
    %v3860 = vld [vmem:[#allocation10 + $0x268] sm:$0xff]
    %v3861 = vld [vmem:[#allocation10 + $0x270] sm:$0xff]
    %v3862 = vld [vmem:[#allocation10 + $0x278] sm:$0xff]
    %v3863 = vld [vmem:[#allocation10 + $0x280] sm:$0xff]
    %v3864 = vld [vmem:[#allocation10 + $0x288] sm:$0xff]
    %v3865 = vld [vmem:[#allocation10 + $0x290] sm:$0xff]
    %v3866 = vld [vmem:[#allocation10 + $0x298] sm:$0xff]
    %v3867 = vld [vmem:[#allocation10 + $0x2a0] sm:$0xff]
    %v3868 = vld [vmem:[#allocation10 + $0x2a8] sm:$0xff]
    %v3869 = vld [vmem:[#allocation10 + $0x2b0] sm:$0xff]
    %v3870 = vld [vmem:[#allocation10 + $0x2b8] sm:$0xff]
    %v3871 = vld [vmem:[#allocation10 + $0x2c0] sm:$0xff]
    %v3872 = vld [vmem:[#allocation10 + $0x2c8] sm:$0xff]
    %v3873 = vld [vmem:[#allocation10 + $0x2d0] sm:$0xff]
    %v3874 = vld [vmem:[#allocation10 + $0x2d8] sm:$0xff]
    %v3875 = vld [vmem:[#allocation10 + $0x2e0] sm:$0xff]
    %v3876 = vld [vmem:[#allocation10 + $0x2e8] sm:$0xff]
    %v3877 = vld [vmem:[#allocation10 + $0x2f0] sm:$0xff]
    %v3878 = vld [vmem:[#allocation10 + $0x2f8] sm:$0xff]
    %v3879 = vld [vmem:[#allocation10 + $0x300] sm:$0xff]
    %v3880 = vld [vmem:[#allocation10 + $0x308] sm:$0xff]
    %v3881 = vld [vmem:[#allocation10 + $0x310] sm:$0xff]
    %v3882 = vld [vmem:[#allocation10 + $0x318] sm:$0xff]
    %v3883 = vld [vmem:[#allocation10 + $0x320] sm:$0xff]
    %v3884 = vld [vmem:[#allocation10 + $0x328] sm:$0xff]
    %v3885 = vld [vmem:[#allocation10 + $0x330] sm:$0xff]
    %v3886 = vld [vmem:[#allocation10 + $0x338] sm:$0xff]
    %v3887 = vld [vmem:[#allocation10 + $0x340] sm:$0xff]
    %v3888 = vld [vmem:[#allocation10 + $0x348] sm:$0xff]
    %v3889 = vld [vmem:[#allocation10 + $0x350] sm:$0xff]
    %v3890 = vld [vmem:[#allocation10 + $0x358] sm:$0xff]
    %v3891 = vld [vmem:[#allocation10 + $0x360] sm:$0xff]
    %v3892 = vld [vmem:[#allocation10 + $0x368] sm:$0xff]
    %v3893 = vld [vmem:[#allocation10 + $0x370] sm:$0xff]
    %v3894 = vld [vmem:[#allocation10 + $0x378] sm:$0xff]
    %v3895 = vld [vmem:[#allocation10 + $0x380] sm:$0xff]
    %v3896 = vld [vmem:[#allocation10 + $0x388] sm:$0xff]
    %v3897 = vld [vmem:[#allocation10 + $0x390] sm:$0xff]
    %v3898 = vld [vmem:[#allocation10 + $0x398] sm:$0xff]
    %v3899 = vld [vmem:[#allocation10 + $0x3a0] sm:$0xff]
    %v3900 = vld [vmem:[#allocation10 + $0x3a8] sm:$0xff]
    %v3901 = vld [vmem:[#allocation10 + $0x3b0] sm:$0xff]
    %v3902 = vld [vmem:[#allocation10 + $0x3b8] sm:$0xff]
    %v3903 = vld [vmem:[#allocation10 + $0x3c0] sm:$0xff]
    %v3904 = vld [vmem:[#allocation10 + $0x3c8] sm:$0xff]
    %v3905 = vld [vmem:[#allocation10 + $0x3d0] sm:$0xff]
    %v3906 = vld [vmem:[#allocation10 + $0x3d8] sm:$0xff]
    %v3907 = vld [vmem:[#allocation10 + $0x3e0] sm:$0xff]
    %v3908 = vld [vmem:[#allocation10 + $0x3e8] sm:$0xff]
    %v3909 = vld [vmem:[#allocation10 + $0x3f0] sm:$0xff]
    %v3910 = vld [vmem:[#allocation10 + $0x3f8] sm:$0xff]
    %v3911 = vld [vmem:[#allocation10 + $0x400] sm:$0xff]
    %v3912 = vld [vmem:[#allocation10 + $0x408] sm:$0xff]
    %v3913 = vld [vmem:[#allocation10 + $0x410] sm:$0xff]
    %v3914 = vld [vmem:[#allocation10 + $0x418] sm:$0xff]
    %v3915 = vld [vmem:[#allocation10 + $0x420] sm:$0xff]
    %v3916 = vld [vmem:[#allocation10 + $0x428] sm:$0xff]
    %v3917 = vld [vmem:[#allocation10 + $0x430] sm:$0xff]
    %v3918 = vld [vmem:[#allocation10 + $0x438] sm:$0xff]
    %v3919 = vld [vmem:[#allocation10 + $0x440] sm:$0xff]
    %v3920 = vld [vmem:[#allocation10 + $0x448] sm:$0xff]
    %v3921 = vld [vmem:[#allocation10 + $0x450] sm:$0xff]
    %v3922 = vld [vmem:[#allocation10 + $0x458] sm:$0xff]
    %v3923 = vld [vmem:[#allocation10 + $0x460] sm:$0xff]
    %v3924 = vld [vmem:[#allocation10 + $0x468] sm:$0xff]
    %v3925 = vld [vmem:[#allocation10 + $0x470] sm:$0xff]
    %v3926 = vld [vmem:[#allocation10 + $0x478] sm:$0xff]
    %v3927 = vld [vmem:[#allocation10 + $0x480] sm:$0xff]
    %v3928 = vld [vmem:[#allocation10 + $0x488] sm:$0xff]
    %v3929 = vld [vmem:[#allocation10 + $0x490] sm:$0xff]
    %v3930 = vld [vmem:[#allocation10 + $0x498] sm:$0xff]
    %v3931 = vld [vmem:[#allocation10 + $0x4a0] sm:$0xff]
    %v3932 = vld [vmem:[#allocation10 + $0x4a8] sm:$0xff]
    %v3933 = vld [vmem:[#allocation10 + $0x4b0] sm:$0xff]
    %v3934 = vld [vmem:[#allocation10 + $0x4b8] sm:$0xff]
    %v3935 = vld [vmem:[#allocation10 + $0x4c0] sm:$0xff]
    %v3936 = vld [vmem:[#allocation10 + $0x4c8] sm:$0xff]
    %v3937 = vld [vmem:[#allocation10 + $0x4d0] sm:$0xff]
    %v3938 = vld [vmem:[#allocation10 + $0x4d8] sm:$0xff]
    %v3939 = vld [vmem:[#allocation10 + $0x4e0] sm:$0xff]
    %v3940 = vld [vmem:[#allocation10 + $0x4e8] sm:$0xff]
    %v3941 = vld [vmem:[#allocation10 + $0x4f0] sm:$0xff]
    %v3942 = vld [vmem:[#allocation10 + $0x4f8] sm:$0xff]
    %v3943 = vld [vmem:[#allocation10 + $0x500] sm:$0xff]
    %v3944 = vld [vmem:[#allocation10 + $0x508] sm:$0xff]
    %v3945 = vld [vmem:[#allocation10 + $0x510] sm:$0xff]
    %v3946 = vld [vmem:[#allocation10 + $0x518] sm:$0xff]
    %v3947 = vld [vmem:[#allocation10 + $0x520] sm:$0xff]
    %v3948 = vld [vmem:[#allocation10 + $0x528] sm:$0xff]
    %v3949 = vld [vmem:[#allocation10 + $0x530] sm:$0xff]
    %v3950 = vld [vmem:[#allocation10 + $0x538] sm:$0xff]
    %v3951 = vld [vmem:[#allocation10 + $0x540] sm:$0xff]
    %v3952 = vld [vmem:[#allocation10 + $0x548] sm:$0xff]
    %v3953 = vld [vmem:[#allocation10 + $0x550] sm:$0xff]
    %v3954 = vld [vmem:[#allocation10 + $0x558] sm:$0xff]
    %v3955 = vld [vmem:[#allocation10 + $0x560] sm:$0xff]
    %v3956 = vld [vmem:[#allocation10 + $0x568] sm:$0xff]
    %v3957 = vld [vmem:[#allocation10 + $0x570] sm:$0xff]
    %v3958 = vld [vmem:[#allocation10 + $0x578] sm:$0xff]
    %v3959 = vld [vmem:[#allocation10 + $0x580] sm:$0xff]
    %v3960 = vld [vmem:[#allocation10 + $0x588] sm:$0xff]
    %v3961 = vld [vmem:[#allocation10 + $0x590] sm:$0xff]
    %v3962 = vld [vmem:[#allocation10 + $0x598] sm:$0xff]
    %v3963 = vld [vmem:[#allocation10 + $0x5a0] sm:$0xff]
    %v3964 = vld [vmem:[#allocation10 + $0x5a8] sm:$0xff]
    %v3965 = vld [vmem:[#allocation10 + $0x5b0] sm:$0xff]
    %v3966 = vld [vmem:[#allocation10 + $0x5b8] sm:$0xff]
    %v3967 = vld [vmem:[#allocation10 + $0x5c0] sm:$0xff]
    %v3968 = vld [vmem:[#allocation10 + $0x5c8] sm:$0xff]
    %v3969 = vld [vmem:[#allocation10 + $0x5d0] sm:$0xff]
    %v3970 = vld [vmem:[#allocation10 + $0x5d8] sm:$0xff]
    %v3971 = vld [vmem:[#allocation10 + $0x5e0] sm:$0xff]
    %v3972 = vld [vmem:[#allocation10 + $0x5e8] sm:$0xff]
    %v3973 = vld [vmem:[#allocation10 + $0x5f0] sm:$0xff]
    %v3974 = vld [vmem:[#allocation10 + $0x5f8] sm:$0xff]
    %v3975 = vld [vmem:[#allocation10 + $0x600] sm:$0xff]
    %v3976 = vld [vmem:[#allocation10 + $0x608] sm:$0xff]
    %v3977 = vld [vmem:[#allocation10 + $0x610] sm:$0xff]
    %v3978 = vld [vmem:[#allocation10 + $0x618] sm:$0xff]
    %v3979 = vld [vmem:[#allocation10 + $0x620] sm:$0xff]
    %v3980 = vld [vmem:[#allocation10 + $0x628] sm:$0xff]
    %v3981 = vld [vmem:[#allocation10 + $0x630] sm:$0xff]
    %v3982 = vld [vmem:[#allocation10 + $0x638] sm:$0xff]
    %v3983 = vld [vmem:[#allocation10 + $0x640] sm:$0xff]
    %v3984 = vld [vmem:[#allocation10 + $0x648] sm:$0xff]
    %v3985 = vld [vmem:[#allocation10 + $0x650] sm:$0xff]
    %v3986 = vld [vmem:[#allocation10 + $0x658] sm:$0xff]
    %v3987 = vld [vmem:[#allocation10 + $0x660] sm:$0xff]
    %v3988 = vld [vmem:[#allocation10 + $0x668] sm:$0xff]
    %v3989 = vld [vmem:[#allocation10 + $0x670] sm:$0xff]
    %v3990 = vld [vmem:[#allocation10 + $0x678] sm:$0xff]
    %v3991 = vld [vmem:[#allocation10 + $0x680] sm:$0xff]
    %v3992 = vld [vmem:[#allocation10 + $0x688] sm:$0xff]
    %v3993 = vld [vmem:[#allocation10 + $0x690] sm:$0xff]
    %v3994 = vld [vmem:[#allocation10 + $0x698] sm:$0xff]
    %v3995 = vld [vmem:[#allocation10 + $0x6a0] sm:$0xff]
    %v3996 = vld [vmem:[#allocation10 + $0x6a8] sm:$0xff]
    %v3997 = vld [vmem:[#allocation10 + $0x6b0] sm:$0xff]
    %v3998 = vld [vmem:[#allocation10 + $0x6b8] sm:$0xff]
    %v3999 = vld [vmem:[#allocation10 + $0x6c0] sm:$0xff]
    %v4000 = vld [vmem:[#allocation10 + $0x6c8] sm:$0xff]
    %v4001 = vld [vmem:[#allocation10 + $0x6d0] sm:$0xff]
    %v4002 = vld [vmem:[#allocation10 + $0x6d8] sm:$0xff]
    %v4003 = vld [vmem:[#allocation10 + $0x6e0] sm:$0xff]
    %v4004 = vld [vmem:[#allocation10 + $0x6e8] sm:$0xff]
    %v4005 = vld [vmem:[#allocation10 + $0x6f0] sm:$0xff]
    %v4006 = vld [vmem:[#allocation10 + $0x6f8] sm:$0xff]
    %v4007 = vld [vmem:[#allocation10 + $0x700] sm:$0xff]
    %v4008 = vld [vmem:[#allocation10 + $0x708] sm:$0xff]
    %v4009 = vld [vmem:[#allocation10 + $0x710] sm:$0xff]
    %v4010 = vld [vmem:[#allocation10 + $0x718] sm:$0xff]
    %v4011 = vld [vmem:[#allocation10 + $0x720] sm:$0xff]
    %v4012 = vld [vmem:[#allocation10 + $0x728] sm:$0xff]
    %v4013 = vld [vmem:[#allocation10 + $0x730] sm:$0xff]
    %v4014 = vld [vmem:[#allocation10 + $0x738] sm:$0xff]
    %v4015 = vld [vmem:[#allocation10 + $0x740] sm:$0xff]
    %v4016 = vld [vmem:[#allocation10 + $0x748] sm:$0xff]
    %v4017 = vld [vmem:[#allocation10 + $0x750] sm:$0xff]
    %v4018 = vld [vmem:[#allocation10 + $0x758] sm:$0xff]
    %v4019 = vld [vmem:[#allocation10 + $0x760] sm:$0xff]
    %v4020 = vld [vmem:[#allocation10 + $0x768] sm:$0xff]
    %v4021 = vld [vmem:[#allocation10 + $0x770] sm:$0xff]
    %v4022 = vld [vmem:[#allocation10 + $0x778] sm:$0xff]
    %v4023 = vld [vmem:[#allocation10 + $0x780] sm:$0xff]
    %v4024 = vld [vmem:[#allocation10 + $0x788] sm:$0xff]
    %v4025 = vld [vmem:[#allocation10 + $0x790] sm:$0xff]
    %v4026 = vld [vmem:[#allocation10 + $0x798] sm:$0xff]
    %v4027 = vld [vmem:[#allocation10 + $0x7a0] sm:$0xff]
    %v4028 = vld [vmem:[#allocation10 + $0x7a8] sm:$0xff]
    %v4029 = vld [vmem:[#allocation10 + $0x7b0] sm:$0xff]
    %v4030 = vld [vmem:[#allocation10 + $0x7b8] sm:$0xff]
    %v4031 = vld [vmem:[#allocation10 + $0x7c0] sm:$0xff]
    %v4032 = vld [vmem:[#allocation10 + $0x7c8] sm:$0xff]
    %v4033 = vld [vmem:[#allocation10 + $0x7d0] sm:$0xff]
    %v4034 = vld [vmem:[#allocation10 + $0x7d8] sm:$0xff]
    %v4035 = vld [vmem:[#allocation10 + $0x7e0] sm:$0xff]
    %v4036 = vld [vmem:[#allocation10 + $0x7e8] sm:$0xff]
    %v4037 = vld [vmem:[#allocation10 + $0x7f0] sm:$0xff]
    %v4038 = vld [vmem:[#allocation10 + $0x7f8] sm:$0xff]
    %v4039 = vld [vmem:[%s10] sm:$0xff]
    %v4041 = vperm.slane %v4039, 0
    %v4042 = vperm.slane %v4039, 1
    %v4043 = vperm.slane %v4039, 2
    %v4044 = vperm.slane %v4039, 3
    %v4045 = vperm.slane %v4039, 4
    %v4046 = vperm.slane %v4039, 5
    %v4047 = vperm.slane %v4039, 6
    %v4048 = vperm.slane %v4039, 7
    %v4313 = vunpack.c.l.b16 %v3783
    %v4314 = vunpack.c.h.b16 %v3783
    %v4315 = vunpack.c.l.b16 %v3784
    %v4316 = vunpack.c.h.b16 %v3784
    %v4317 = vunpack.c.l.b16 %v3785
    %v4318 = vunpack.c.h.b16 %v3785
    %v4319 = vunpack.c.l.b16 %v3786
    %v4320 = vunpack.c.h.b16 %v3786
    %v4321 = vunpack.c.l.b16 %v3787
    %v4322 = vunpack.c.h.b16 %v3787
    %v4323 = vunpack.c.l.b16 %v3788
    %v4324 = vunpack.c.h.b16 %v3788
    %v4325 = vunpack.c.l.b16 %v3789
    %v4326 = vunpack.c.h.b16 %v3789
    %v4327 = vunpack.c.l.b16 %v3790
    %v4328 = vunpack.c.h.b16 %v3790
    %v4329 = vunpack.c.l.b16 %v3791
    %v4330 = vunpack.c.h.b16 %v3791
    %v4331 = vunpack.c.l.b16 %v3792
    %v4332 = vunpack.c.h.b16 %v3792
    %v4333 = vunpack.c.l.b16 %v3793
    %v4334 = vunpack.c.h.b16 %v3793
    %v4335 = vunpack.c.l.b16 %v3794
    %v4336 = vunpack.c.h.b16 %v3794
    %v4337 = vunpack.c.l.b16 %v3795
    %v4338 = vunpack.c.h.b16 %v3795
    %v4339 = vunpack.c.l.b16 %v3796
    %v4340 = vunpack.c.h.b16 %v3796
    %v4341 = vunpack.c.l.b16 %v3797
    %v4342 = vunpack.c.h.b16 %v3797
    %v4343 = vunpack.c.l.b16 %v3798
    %v4344 = vunpack.c.h.b16 %v3798
    %v4345 = vunpack.c.l.b16 %v3799
    %v4346 = vunpack.c.h.b16 %v3799
    %v4347 = vunpack.c.l.b16 %v3800
    %v4348 = vunpack.c.h.b16 %v3800
    %v4349 = vunpack.c.l.b16 %v3801
    %v4350 = vunpack.c.h.b16 %v3801
    %v4351 = vunpack.c.l.b16 %v3802
    %v4352 = vunpack.c.h.b16 %v3802
    %v4353 = vunpack.c.l.b16 %v3803
    %v4354 = vunpack.c.h.b16 %v3803
    %v4355 = vunpack.c.l.b16 %v3804
    %v4356 = vunpack.c.h.b16 %v3804
    %v4357 = vunpack.c.l.b16 %v3805
    %v4358 = vunpack.c.h.b16 %v3805
    %v4359 = vunpack.c.l.b16 %v3806
    %v4360 = vunpack.c.h.b16 %v3806
    %v4361 = vunpack.c.l.b16 %v3807
    %v4362 = vunpack.c.h.b16 %v3807
    %v4363 = vunpack.c.l.b16 %v3808
    %v4364 = vunpack.c.h.b16 %v3808
    %v4365 = vunpack.c.l.b16 %v3809
    %v4366 = vunpack.c.h.b16 %v3809
    %v4367 = vunpack.c.l.b16 %v3810
    %v4368 = vunpack.c.h.b16 %v3810
    %v4369 = vunpack.c.l.b16 %v3811
    %v4370 = vunpack.c.h.b16 %v3811
    %v4371 = vunpack.c.l.b16 %v3812
    %v4372 = vunpack.c.h.b16 %v3812
    %v4373 = vunpack.c.l.b16 %v3813
    %v4374 = vunpack.c.h.b16 %v3813
    %v4375 = vunpack.c.l.b16 %v3814
    %v4376 = vunpack.c.h.b16 %v3814
    %v4377 = vunpack.c.l.b16 %v3815
    %v4378 = vunpack.c.h.b16 %v3815
    %v4379 = vunpack.c.l.b16 %v3816
    %v4380 = vunpack.c.h.b16 %v3816
    %v4381 = vunpack.c.l.b16 %v3817
    %v4382 = vunpack.c.h.b16 %v3817
    %v4383 = vunpack.c.l.b16 %v3818
    %v4384 = vunpack.c.h.b16 %v3818
    %v4385 = vunpack.c.l.b16 %v3819
    %v4386 = vunpack.c.h.b16 %v3819
    %v4387 = vunpack.c.l.b16 %v3820
    %v4388 = vunpack.c.h.b16 %v3820
    %v4389 = vunpack.c.l.b16 %v3821
    %v4390 = vunpack.c.h.b16 %v3821
    %v4391 = vunpack.c.l.b16 %v3822
    %v4392 = vunpack.c.h.b16 %v3822
    %v4393 = vunpack.c.l.b16 %v3823
    %v4394 = vunpack.c.h.b16 %v3823
    %v4395 = vunpack.c.l.b16 %v3824
    %v4396 = vunpack.c.h.b16 %v3824
    %v4397 = vunpack.c.l.b16 %v3825
    %v4398 = vunpack.c.h.b16 %v3825
    %v4399 = vunpack.c.l.b16 %v3826
    %v4400 = vunpack.c.h.b16 %v3826
    %v4401 = vunpack.c.l.b16 %v3827
    %v4402 = vunpack.c.h.b16 %v3827
    %v4403 = vunpack.c.l.b16 %v3828
    %v4404 = vunpack.c.h.b16 %v3828
    %v4405 = vunpack.c.l.b16 %v3829
    %v4406 = vunpack.c.h.b16 %v3829
    %v4407 = vunpack.c.l.b16 %v3830
    %v4408 = vunpack.c.h.b16 %v3830
    %v4409 = vunpack.c.l.b16 %v3831
    %v4410 = vunpack.c.h.b16 %v3831
    %v4411 = vunpack.c.l.b16 %v3832
    %v4412 = vunpack.c.h.b16 %v3832
    %v4413 = vunpack.c.l.b16 %v3833
    %v4414 = vunpack.c.h.b16 %v3833
    %v4415 = vunpack.c.l.b16 %v3834
    %v4416 = vunpack.c.h.b16 %v3834
    %v4417 = vunpack.c.l.b16 %v3835
    %v4418 = vunpack.c.h.b16 %v3835
    %v4419 = vunpack.c.l.b16 %v3836
    %v4420 = vunpack.c.h.b16 %v3836
    %v4421 = vunpack.c.l.b16 %v3837
    %v4422 = vunpack.c.h.b16 %v3837
    %v4423 = vunpack.c.l.b16 %v3838
    %v4424 = vunpack.c.h.b16 %v3838
    %v4425 = vunpack.c.l.b16 %v3839
    %v4426 = vunpack.c.h.b16 %v3839
    %v4427 = vunpack.c.l.b16 %v3840
    %v4428 = vunpack.c.h.b16 %v3840
    %v4429 = vunpack.c.l.b16 %v3841
    %v4430 = vunpack.c.h.b16 %v3841
    %v4431 = vunpack.c.l.b16 %v3842
    %v4432 = vunpack.c.h.b16 %v3842
    %v4433 = vunpack.c.l.b16 %v3843
    %v4434 = vunpack.c.h.b16 %v3843
    %v4435 = vunpack.c.l.b16 %v3844
    %v4436 = vunpack.c.h.b16 %v3844
    %v4437 = vunpack.c.l.b16 %v3845
    %v4438 = vunpack.c.h.b16 %v3845
    %v4439 = vunpack.c.l.b16 %v3846
    %v4440 = vunpack.c.h.b16 %v3846
    %v4441 = vunpack.c.l.b16 %v3847
    %v4442 = vunpack.c.h.b16 %v3847
    %v4443 = vunpack.c.l.b16 %v3848
    %v4444 = vunpack.c.h.b16 %v3848
    %v4445 = vunpack.c.l.b16 %v3849
    %v4446 = vunpack.c.h.b16 %v3849
    %v4447 = vunpack.c.l.b16 %v3850
    %v4448 = vunpack.c.h.b16 %v3850
    %v4449 = vunpack.c.l.b16 %v3851
    %v4450 = vunpack.c.h.b16 %v3851
    %v4451 = vunpack.c.l.b16 %v3852
    %v4452 = vunpack.c.h.b16 %v3852
    %v4453 = vunpack.c.l.b16 %v3853
    %v4454 = vunpack.c.h.b16 %v3853
    %v4455 = vunpack.c.l.b16 %v3854
    %v4456 = vunpack.c.h.b16 %v3854
    %v4457 = vunpack.c.l.b16 %v3855
    %v4458 = vunpack.c.h.b16 %v3855
    %v4459 = vunpack.c.l.b16 %v3856
    %v4460 = vunpack.c.h.b16 %v3856
    %v4461 = vunpack.c.l.b16 %v3857
    %v4462 = vunpack.c.h.b16 %v3857
    %v4463 = vunpack.c.l.b16 %v3858
    %v4464 = vunpack.c.h.b16 %v3858
    %v4465 = vunpack.c.l.b16 %v3859
    %v4466 = vunpack.c.h.b16 %v3859
    %v4467 = vunpack.c.l.b16 %v3860
    %v4468 = vunpack.c.h.b16 %v3860
    %v4469 = vunpack.c.l.b16 %v3861
    %v4470 = vunpack.c.h.b16 %v3861
    %v4471 = vunpack.c.l.b16 %v3862
    %v4472 = vunpack.c.h.b16 %v3862
    %v4473 = vunpack.c.l.b16 %v3863
    %v4474 = vunpack.c.h.b16 %v3863
    %v4475 = vunpack.c.l.b16 %v3864
    %v4476 = vunpack.c.h.b16 %v3864
    %v4477 = vunpack.c.l.b16 %v3865
    %v4478 = vunpack.c.h.b16 %v3865
    %v4479 = vunpack.c.l.b16 %v3866
    %v4480 = vunpack.c.h.b16 %v3866
    %v4481 = vunpack.c.l.b16 %v3867
    %v4482 = vunpack.c.h.b16 %v3867
    %v4483 = vunpack.c.l.b16 %v3868
    %v4484 = vunpack.c.h.b16 %v3868
    %v4485 = vunpack.c.l.b16 %v3869
    %v4486 = vunpack.c.h.b16 %v3869
    %v4487 = vunpack.c.l.b16 %v3870
    %v4488 = vunpack.c.h.b16 %v3870
    %v4489 = vunpack.c.l.b16 %v3871
    %v4490 = vunpack.c.h.b16 %v3871
    %v4491 = vunpack.c.l.b16 %v3872
    %v4492 = vunpack.c.h.b16 %v3872
    %v4493 = vunpack.c.l.b16 %v3873
    %v4494 = vunpack.c.h.b16 %v3873
    %v4495 = vunpack.c.l.b16 %v3874
    %v4496 = vunpack.c.h.b16 %v3874
    %v4497 = vunpack.c.l.b16 %v3875
    %v4498 = vunpack.c.h.b16 %v3875
    %v4499 = vunpack.c.l.b16 %v3876
    %v4500 = vunpack.c.h.b16 %v3876
    %v4501 = vunpack.c.l.b16 %v3877
    %v4502 = vunpack.c.h.b16 %v3877
    %v4503 = vunpack.c.l.b16 %v3878
    %v4504 = vunpack.c.h.b16 %v3878
    %v4505 = vunpack.c.l.b16 %v3879
    %v4506 = vunpack.c.h.b16 %v3879
    %v4507 = vunpack.c.l.b16 %v3880
    %v4508 = vunpack.c.h.b16 %v3880
    %v4509 = vunpack.c.l.b16 %v3881
    %v4510 = vunpack.c.h.b16 %v3881
    %v4511 = vunpack.c.l.b16 %v3882
    %v4512 = vunpack.c.h.b16 %v3882
    %v4513 = vunpack.c.l.b16 %v3883
    %v4514 = vunpack.c.h.b16 %v3883
    %v4515 = vunpack.c.l.b16 %v3884
    %v4516 = vunpack.c.h.b16 %v3884
    %v4517 = vunpack.c.l.b16 %v3885
    %v4518 = vunpack.c.h.b16 %v3885
    %v4519 = vunpack.c.l.b16 %v3886
    %v4520 = vunpack.c.h.b16 %v3886
    %v4521 = vunpack.c.l.b16 %v3887
    %v4522 = vunpack.c.h.b16 %v3887
    %v4523 = vunpack.c.l.b16 %v3888
    %v4524 = vunpack.c.h.b16 %v3888
    %v4525 = vunpack.c.l.b16 %v3889
    %v4526 = vunpack.c.h.b16 %v3889
    %v4527 = vunpack.c.l.b16 %v3890
    %v4528 = vunpack.c.h.b16 %v3890
    %v4529 = vunpack.c.l.b16 %v3891
    %v4530 = vunpack.c.h.b16 %v3891
    %v4531 = vunpack.c.l.b16 %v3892
    %v4532 = vunpack.c.h.b16 %v3892
    %v4533 = vunpack.c.l.b16 %v3893
    %v4534 = vunpack.c.h.b16 %v3893
    %v4535 = vunpack.c.l.b16 %v3894
    %v4536 = vunpack.c.h.b16 %v3894
    %v4537 = vunpack.c.l.b16 %v3895
    %v4538 = vunpack.c.h.b16 %v3895
    %v4539 = vunpack.c.l.b16 %v3896
    %v4540 = vunpack.c.h.b16 %v3896
    %v4541 = vunpack.c.l.b16 %v3897
    %v4542 = vunpack.c.h.b16 %v3897
    %v4543 = vunpack.c.l.b16 %v3898
    %v4544 = vunpack.c.h.b16 %v3898
    %v4545 = vunpack.c.l.b16 %v3899
    %v4546 = vunpack.c.h.b16 %v3899
    %v4547 = vunpack.c.l.b16 %v3900
    %v4548 = vunpack.c.h.b16 %v3900
    %v4549 = vunpack.c.l.b16 %v3901
    %v4550 = vunpack.c.h.b16 %v3901
    %v4551 = vunpack.c.l.b16 %v3902
    %v4552 = vunpack.c.h.b16 %v3902
    %v4553 = vunpack.c.l.b16 %v3903
    %v4554 = vunpack.c.h.b16 %v3903
    %v4555 = vunpack.c.l.b16 %v3904
    %v4556 = vunpack.c.h.b16 %v3904
    %v4557 = vunpack.c.l.b16 %v3905
    %v4558 = vunpack.c.h.b16 %v3905
    %v4559 = vunpack.c.l.b16 %v3906
    %v4560 = vunpack.c.h.b16 %v3906
    %v4561 = vunpack.c.l.b16 %v3907
    %v4562 = vunpack.c.h.b16 %v3907
    %v4563 = vunpack.c.l.b16 %v3908
    %v4564 = vunpack.c.h.b16 %v3908
    %v4565 = vunpack.c.l.b16 %v3909
    %v4566 = vunpack.c.h.b16 %v3909
    %v4567 = vunpack.c.l.b16 %v3910
    %v4568 = vunpack.c.h.b16 %v3910
    %v4569 = vunpack.c.l.b16 %v3911
    %v4570 = vunpack.c.h.b16 %v3911
    %v4571 = vunpack.c.l.b16 %v3912
    %v4572 = vunpack.c.h.b16 %v3912
    %v4573 = vunpack.c.l.b16 %v3913
    %v4574 = vunpack.c.h.b16 %v3913
    %v4575 = vunpack.c.l.b16 %v3914
    %v4576 = vunpack.c.h.b16 %v3914
    %v4577 = vunpack.c.l.b16 %v3915
    %v4578 = vunpack.c.h.b16 %v3915
    %v4579 = vunpack.c.l.b16 %v3916
    %v4580 = vunpack.c.h.b16 %v3916
    %v4581 = vunpack.c.l.b16 %v3917
    %v4582 = vunpack.c.h.b16 %v3917
    %v4583 = vunpack.c.l.b16 %v3918
    %v4584 = vunpack.c.h.b16 %v3918
    %v4585 = vunpack.c.l.b16 %v3919
    %v4586 = vunpack.c.h.b16 %v3919
    %v4587 = vunpack.c.l.b16 %v3920
    %v4588 = vunpack.c.h.b16 %v3920
    %v4589 = vunpack.c.l.b16 %v3921
    %v4590 = vunpack.c.h.b16 %v3921
    %v4591 = vunpack.c.l.b16 %v3922
    %v4592 = vunpack.c.h.b16 %v3922
    %v4593 = vunpack.c.l.b16 %v3923
    %v4594 = vunpack.c.h.b16 %v3923
    %v4595 = vunpack.c.l.b16 %v3924
    %v4596 = vunpack.c.h.b16 %v3924
    %v4597 = vunpack.c.l.b16 %v3925
    %v4598 = vunpack.c.h.b16 %v3925
    %v4599 = vunpack.c.l.b16 %v3926
    %v4600 = vunpack.c.h.b16 %v3926
    %v4601 = vunpack.c.l.b16 %v3927
    %v4602 = vunpack.c.h.b16 %v3927
    %v4603 = vunpack.c.l.b16 %v3928
    %v4604 = vunpack.c.h.b16 %v3928
    %v4605 = vunpack.c.l.b16 %v3929
    %v4606 = vunpack.c.h.b16 %v3929
    %v4607 = vunpack.c.l.b16 %v3930
    %v4608 = vunpack.c.h.b16 %v3930
    %v4609 = vunpack.c.l.b16 %v3931
    %v4610 = vunpack.c.h.b16 %v3931
    %v4611 = vunpack.c.l.b16 %v3932
    %v4612 = vunpack.c.h.b16 %v3932
    %v4613 = vunpack.c.l.b16 %v3933
    %v4614 = vunpack.c.h.b16 %v3933
    %v4615 = vunpack.c.l.b16 %v3934
    %v4616 = vunpack.c.h.b16 %v3934
    %v4617 = vunpack.c.l.b16 %v3935
    %v4618 = vunpack.c.h.b16 %v3935
    %v4619 = vunpack.c.l.b16 %v3936
    %v4620 = vunpack.c.h.b16 %v3936
    %v4621 = vunpack.c.l.b16 %v3937
    %v4622 = vunpack.c.h.b16 %v3937
    %v4623 = vunpack.c.l.b16 %v3938
    %v4624 = vunpack.c.h.b16 %v3938
    %v4625 = vunpack.c.l.b16 %v3939
    %v4626 = vunpack.c.h.b16 %v3939
    %v4627 = vunpack.c.l.b16 %v3940
    %v4628 = vunpack.c.h.b16 %v3940
    %v4629 = vunpack.c.l.b16 %v3941
    %v4630 = vunpack.c.h.b16 %v3941
    %v4631 = vunpack.c.l.b16 %v3942
    %v4632 = vunpack.c.h.b16 %v3942
    %v4633 = vunpack.c.l.b16 %v3943
    %v4634 = vunpack.c.h.b16 %v3943
    %v4635 = vunpack.c.l.b16 %v3944
    %v4636 = vunpack.c.h.b16 %v3944
    %v4637 = vunpack.c.l.b16 %v3945
    %v4638 = vunpack.c.h.b16 %v3945
    %v4639 = vunpack.c.l.b16 %v3946
    %v4640 = vunpack.c.h.b16 %v3946
    %v4641 = vunpack.c.l.b16 %v3947
    %v4642 = vunpack.c.h.b16 %v3947
    %v4643 = vunpack.c.l.b16 %v3948
    %v4644 = vunpack.c.h.b16 %v3948
    %v4645 = vunpack.c.l.b16 %v3949
    %v4646 = vunpack.c.h.b16 %v3949
    %v4647 = vunpack.c.l.b16 %v3950
    %v4648 = vunpack.c.h.b16 %v3950
    %v4649 = vunpack.c.l.b16 %v3951
    %v4650 = vunpack.c.h.b16 %v3951
    %v4651 = vunpack.c.l.b16 %v3952
    %v4652 = vunpack.c.h.b16 %v3952
    %v4653 = vunpack.c.l.b16 %v3953
    %v4654 = vunpack.c.h.b16 %v3953
    %v4655 = vunpack.c.l.b16 %v3954
    %v4656 = vunpack.c.h.b16 %v3954
    %v4657 = vunpack.c.l.b16 %v3955
    %v4658 = vunpack.c.h.b16 %v3955
    %v4659 = vunpack.c.l.b16 %v3956
    %v4660 = vunpack.c.h.b16 %v3956
    %v4661 = vunpack.c.l.b16 %v3957
    %v4662 = vunpack.c.h.b16 %v3957
    %v4663 = vunpack.c.l.b16 %v3958
    %v4664 = vunpack.c.h.b16 %v3958
    %v4665 = vunpack.c.l.b16 %v3959
    %v4666 = vunpack.c.h.b16 %v3959
    %v4667 = vunpack.c.l.b16 %v3960
    %v4668 = vunpack.c.h.b16 %v3960
    %v4669 = vunpack.c.l.b16 %v3961
    %v4670 = vunpack.c.h.b16 %v3961
    %v4671 = vunpack.c.l.b16 %v3962
    %v4672 = vunpack.c.h.b16 %v3962
    %v4673 = vunpack.c.l.b16 %v3963
    %v4674 = vunpack.c.h.b16 %v3963
    %v4675 = vunpack.c.l.b16 %v3964
    %v4676 = vunpack.c.h.b16 %v3964
    %v4677 = vunpack.c.l.b16 %v3965
    %v4678 = vunpack.c.h.b16 %v3965
    %v4679 = vunpack.c.l.b16 %v3966
    %v4680 = vunpack.c.h.b16 %v3966
    %v4681 = vunpack.c.l.b16 %v3967
    %v4682 = vunpack.c.h.b16 %v3967
    %v4683 = vunpack.c.l.b16 %v3968
    %v4684 = vunpack.c.h.b16 %v3968
    %v4685 = vunpack.c.l.b16 %v3969
    %v4686 = vunpack.c.h.b16 %v3969
    %v4687 = vunpack.c.l.b16 %v3970
    %v4688 = vunpack.c.h.b16 %v3970
    %v4689 = vunpack.c.l.b16 %v3971
    %v4690 = vunpack.c.h.b16 %v3971
    %v4691 = vunpack.c.l.b16 %v3972
    %v4692 = vunpack.c.h.b16 %v3972
    %v4693 = vunpack.c.l.b16 %v3973
    %v4694 = vunpack.c.h.b16 %v3973
    %v4695 = vunpack.c.l.b16 %v3974
    %v4696 = vunpack.c.h.b16 %v3974
    %v4697 = vunpack.c.l.b16 %v3975
    %v4698 = vunpack.c.h.b16 %v3975
    %v4699 = vunpack.c.l.b16 %v3976
    %v4700 = vunpack.c.h.b16 %v3976
    %v4701 = vunpack.c.l.b16 %v3977
    %v4702 = vunpack.c.h.b16 %v3977
    %v4703 = vunpack.c.l.b16 %v3978
    %v4704 = vunpack.c.h.b16 %v3978
    %v4705 = vunpack.c.l.b16 %v3979
    %v4706 = vunpack.c.h.b16 %v3979
    %v4707 = vunpack.c.l.b16 %v3980
    %v4708 = vunpack.c.h.b16 %v3980
    %v4709 = vunpack.c.l.b16 %v3981
    %v4710 = vunpack.c.h.b16 %v3981
    %v4711 = vunpack.c.l.b16 %v3982
    %v4712 = vunpack.c.h.b16 %v3982
    %v4713 = vunpack.c.l.b16 %v3983
    %v4714 = vunpack.c.h.b16 %v3983
    %v4715 = vunpack.c.l.b16 %v3984
    %v4716 = vunpack.c.h.b16 %v3984
    %v4717 = vunpack.c.l.b16 %v3985
    %v4718 = vunpack.c.h.b16 %v3985
    %v4719 = vunpack.c.l.b16 %v3986
    %v4720 = vunpack.c.h.b16 %v3986
    %v4721 = vunpack.c.l.b16 %v3987
    %v4722 = vunpack.c.h.b16 %v3987
    %v4723 = vunpack.c.l.b16 %v3988
    %v4724 = vunpack.c.h.b16 %v3988
    %v4725 = vunpack.c.l.b16 %v3989
    %v4726 = vunpack.c.h.b16 %v3989
    %v4727 = vunpack.c.l.b16 %v3990
    %v4728 = vunpack.c.h.b16 %v3990
    %v4729 = vunpack.c.l.b16 %v3991
    %v4730 = vunpack.c.h.b16 %v3991
    %v4731 = vunpack.c.l.b16 %v3992
    %v4732 = vunpack.c.h.b16 %v3992
    %v4733 = vunpack.c.l.b16 %v3993
    %v4734 = vunpack.c.h.b16 %v3993
    %v4735 = vunpack.c.l.b16 %v3994
    %v4736 = vunpack.c.h.b16 %v3994
    %v4737 = vunpack.c.l.b16 %v3995
    %v4738 = vunpack.c.h.b16 %v3995
    %v4739 = vunpack.c.l.b16 %v3996
    %v4740 = vunpack.c.h.b16 %v3996
    %v4741 = vunpack.c.l.b16 %v3997
    %v4742 = vunpack.c.h.b16 %v3997
    %v4743 = vunpack.c.l.b16 %v3998
    %v4744 = vunpack.c.h.b16 %v3998
    %v4745 = vunpack.c.l.b16 %v3999
    %v4746 = vunpack.c.h.b16 %v3999
    %v4747 = vunpack.c.l.b16 %v4000
    %v4748 = vunpack.c.h.b16 %v4000
    %v4749 = vunpack.c.l.b16 %v4001
    %v4750 = vunpack.c.h.b16 %v4001
    %v4751 = vunpack.c.l.b16 %v4002
    %v4752 = vunpack.c.h.b16 %v4002
    %v4753 = vunpack.c.l.b16 %v4003
    %v4754 = vunpack.c.h.b16 %v4003
    %v4755 = vunpack.c.l.b16 %v4004
    %v4756 = vunpack.c.h.b16 %v4004
    %v4757 = vunpack.c.l.b16 %v4005
    %v4758 = vunpack.c.h.b16 %v4005
    %v4759 = vunpack.c.l.b16 %v4006
    %v4760 = vunpack.c.h.b16 %v4006
    %v4761 = vunpack.c.l.b16 %v4007
    %v4762 = vunpack.c.h.b16 %v4007
    %v4763 = vunpack.c.l.b16 %v4008
    %v4764 = vunpack.c.h.b16 %v4008
    %v4765 = vunpack.c.l.b16 %v4009
    %v4766 = vunpack.c.h.b16 %v4009
    %v4767 = vunpack.c.l.b16 %v4010
    %v4768 = vunpack.c.h.b16 %v4010
    %v4769 = vunpack.c.l.b16 %v4011
    %v4770 = vunpack.c.h.b16 %v4011
    %v4771 = vunpack.c.l.b16 %v4012
    %v4772 = vunpack.c.h.b16 %v4012
    %v4773 = vunpack.c.l.b16 %v4013
    %v4774 = vunpack.c.h.b16 %v4013
    %v4775 = vunpack.c.l.b16 %v4014
    %v4776 = vunpack.c.h.b16 %v4014
    %v4777 = vunpack.c.l.b16 %v4015
    %v4778 = vunpack.c.h.b16 %v4015
    %v4779 = vunpack.c.l.b16 %v4016
    %v4780 = vunpack.c.h.b16 %v4016
    %v4781 = vunpack.c.l.b16 %v4017
    %v4782 = vunpack.c.h.b16 %v4017
    %v4783 = vunpack.c.l.b16 %v4018
    %v4784 = vunpack.c.h.b16 %v4018
    %v4785 = vunpack.c.l.b16 %v4019
    %v4786 = vunpack.c.h.b16 %v4019
    %v4787 = vunpack.c.l.b16 %v4020
    %v4788 = vunpack.c.h.b16 %v4020
    %v4789 = vunpack.c.l.b16 %v4021
    %v4790 = vunpack.c.h.b16 %v4021
    %v4791 = vunpack.c.l.b16 %v4022
    %v4792 = vunpack.c.h.b16 %v4022
    %v4793 = vunpack.c.l.b16 %v4023
    %v4794 = vunpack.c.h.b16 %v4023
    %v4795 = vunpack.c.l.b16 %v4024
    %v4796 = vunpack.c.h.b16 %v4024
    %v4797 = vunpack.c.l.b16 %v4025
    %v4798 = vunpack.c.h.b16 %v4025
    %v4799 = vunpack.c.l.b16 %v4026
    %v4800 = vunpack.c.h.b16 %v4026
    %v4801 = vunpack.c.l.b16 %v4027
    %v4802 = vunpack.c.h.b16 %v4027
    %v4803 = vunpack.c.l.b16 %v4028
    %v4804 = vunpack.c.h.b16 %v4028
    %v4805 = vunpack.c.l.b16 %v4029
    %v4806 = vunpack.c.h.b16 %v4029
    %v4807 = vunpack.c.l.b16 %v4030
    %v4808 = vunpack.c.h.b16 %v4030
    %v4809 = vunpack.c.l.b16 %v4031
    %v4810 = vunpack.c.h.b16 %v4031
    %v4811 = vunpack.c.l.b16 %v4032
    %v4812 = vunpack.c.h.b16 %v4032
    %v4813 = vunpack.c.l.b16 %v4033
    %v4814 = vunpack.c.h.b16 %v4033
    %v4815 = vunpack.c.l.b16 %v4034
    %v4816 = vunpack.c.h.b16 %v4034
    %v4817 = vunpack.c.l.b16 %v4035
    %v4818 = vunpack.c.h.b16 %v4035
    %v4819 = vunpack.c.l.b16 %v4036
    %v4820 = vunpack.c.h.b16 %v4036
    %v4821 = vunpack.c.l.b16 %v4037
    %v4822 = vunpack.c.h.b16 %v4037
    %v4823 = vunpack.c.l.b16 %v4038
    %v4824 = vunpack.c.h.b16 %v4038
    %v4825 = vpack.c.b16 %v4321, %v4313
    %v4826 = vpack.c.b16 %v4322, %v4314
    %v4827 = vpack.c.b16 %v4323, %v4315
    %v4828 = vpack.c.b16 %v4324, %v4316
    %v4829 = vpack.c.b16 %v4325, %v4317
    %v4830 = vpack.c.b16 %v4326, %v4318
    %v4831 = vpack.c.b16 %v4327, %v4319
    %v4832 = vpack.c.b16 %v4328, %v4320
    %v4833 = vpack.c.b16 %v4337, %v4329
    %v4834 = vpack.c.b16 %v4338, %v4330
    %v4835 = vpack.c.b16 %v4339, %v4331
    %v4836 = vpack.c.b16 %v4340, %v4332
    %v4837 = vpack.c.b16 %v4341, %v4333
    %v4838 = vpack.c.b16 %v4342, %v4334
    %v4839 = vpack.c.b16 %v4343, %v4335
    %v4840 = vpack.c.b16 %v4344, %v4336
    %v4841 = vpack.c.b16 %v4353, %v4345
    %v4842 = vpack.c.b16 %v4354, %v4346
    %v4843 = vpack.c.b16 %v4355, %v4347
    %v4844 = vpack.c.b16 %v4356, %v4348
    %v4845 = vpack.c.b16 %v4357, %v4349
    %v4846 = vpack.c.b16 %v4358, %v4350
    %v4847 = vpack.c.b16 %v4359, %v4351
    %v4848 = vpack.c.b16 %v4360, %v4352
    %v4849 = vpack.c.b16 %v4369, %v4361
    %v4850 = vpack.c.b16 %v4370, %v4362
    %v4851 = vpack.c.b16 %v4371, %v4363
    %v4852 = vpack.c.b16 %v4372, %v4364
    %v4853 = vpack.c.b16 %v4373, %v4365
    %v4854 = vpack.c.b16 %v4374, %v4366
    %v4855 = vpack.c.b16 %v4375, %v4367
    %v4856 = vpack.c.b16 %v4376, %v4368
    %v4857 = vpack.c.b16 %v4385, %v4377
    %v4858 = vpack.c.b16 %v4386, %v4378
    %v4859 = vpack.c.b16 %v4387, %v4379
    %v4860 = vpack.c.b16 %v4388, %v4380
    %v4861 = vpack.c.b16 %v4389, %v4381
    %v4862 = vpack.c.b16 %v4390, %v4382
    %v4863 = vpack.c.b16 %v4391, %v4383
    %v4864 = vpack.c.b16 %v4392, %v4384
    %v4865 = vpack.c.b16 %v4401, %v4393
    %v4866 = vpack.c.b16 %v4402, %v4394
    %v4867 = vpack.c.b16 %v4403, %v4395
    %v4868 = vpack.c.b16 %v4404, %v4396
    %v4869 = vpack.c.b16 %v4405, %v4397
    %v4870 = vpack.c.b16 %v4406, %v4398
    %v4871 = vpack.c.b16 %v4407, %v4399
    %v4872 = vpack.c.b16 %v4408, %v4400
    %v4873 = vpack.c.b16 %v4417, %v4409
    %v4874 = vpack.c.b16 %v4418, %v4410
    %v4875 = vpack.c.b16 %v4419, %v4411
    %v4876 = vpack.c.b16 %v4420, %v4412
    %v4877 = vpack.c.b16 %v4421, %v4413
    %v4878 = vpack.c.b16 %v4422, %v4414
    %v4879 = vpack.c.b16 %v4423, %v4415
    %v4880 = vpack.c.b16 %v4424, %v4416
    %v4881 = vpack.c.b16 %v4433, %v4425
    %v4882 = vpack.c.b16 %v4434, %v4426
    %v4883 = vpack.c.b16 %v4435, %v4427
    %v4884 = vpack.c.b16 %v4436, %v4428
    %v4885 = vpack.c.b16 %v4437, %v4429
    %v4886 = vpack.c.b16 %v4438, %v4430
    %v4887 = vpack.c.b16 %v4439, %v4431
    %v4888 = vpack.c.b16 %v4440, %v4432
    %v4889 = vpack.c.b16 %v4449, %v4441
    %v4890 = vpack.c.b16 %v4450, %v4442
    %v4891 = vpack.c.b16 %v4451, %v4443
    %v4892 = vpack.c.b16 %v4452, %v4444
    %v4893 = vpack.c.b16 %v4453, %v4445
    %v4894 = vpack.c.b16 %v4454, %v4446
    %v4895 = vpack.c.b16 %v4455, %v4447
    %v4896 = vpack.c.b16 %v4456, %v4448
    %v4897 = vpack.c.b16 %v4465, %v4457
    %v4898 = vpack.c.b16 %v4466, %v4458
    %v4899 = vpack.c.b16 %v4467, %v4459
    %v4900 = vpack.c.b16 %v4468, %v4460
    %v4901 = vpack.c.b16 %v4469, %v4461
    %v4902 = vpack.c.b16 %v4470, %v4462
    %v4903 = vpack.c.b16 %v4471, %v4463
    %v4904 = vpack.c.b16 %v4472, %v4464
    %v4905 = vpack.c.b16 %v4481, %v4473
    %v4906 = vpack.c.b16 %v4482, %v4474
    %v4907 = vpack.c.b16 %v4483, %v4475
    %v4908 = vpack.c.b16 %v4484, %v4476
    %v4909 = vpack.c.b16 %v4485, %v4477
    %v4910 = vpack.c.b16 %v4486, %v4478
    %v4911 = vpack.c.b16 %v4487, %v4479
    %v4912 = vpack.c.b16 %v4488, %v4480
    %v4913 = vpack.c.b16 %v4497, %v4489
    %v4914 = vpack.c.b16 %v4498, %v4490
    %v4915 = vpack.c.b16 %v4499, %v4491
    %v4916 = vpack.c.b16 %v4500, %v4492
    %v4917 = vpack.c.b16 %v4501, %v4493
    %v4918 = vpack.c.b16 %v4502, %v4494
    %v4919 = vpack.c.b16 %v4503, %v4495
    %v4920 = vpack.c.b16 %v4504, %v4496
    %v4921 = vpack.c.b16 %v4513, %v4505
    %v4922 = vpack.c.b16 %v4514, %v4506
    %v4923 = vpack.c.b16 %v4515, %v4507
    %v4924 = vpack.c.b16 %v4516, %v4508
    %v4925 = vpack.c.b16 %v4517, %v4509
    %v4926 = vpack.c.b16 %v4518, %v4510
    %v4927 = vpack.c.b16 %v4519, %v4511
    %v4928 = vpack.c.b16 %v4520, %v4512
    %v4929 = vpack.c.b16 %v4529, %v4521
    %v4930 = vpack.c.b16 %v4530, %v4522
    %v4931 = vpack.c.b16 %v4531, %v4523
    %v4932 = vpack.c.b16 %v4532, %v4524
    %v4933 = vpack.c.b16 %v4533, %v4525
    %v4934 = vpack.c.b16 %v4534, %v4526
    %v4935 = vpack.c.b16 %v4535, %v4527
    %v4936 = vpack.c.b16 %v4536, %v4528
    %v4937 = vpack.c.b16 %v4545, %v4537
    %v4938 = vpack.c.b16 %v4546, %v4538
    %v4939 = vpack.c.b16 %v4547, %v4539
    %v4940 = vpack.c.b16 %v4548, %v4540
    %v4941 = vpack.c.b16 %v4549, %v4541
    %v4942 = vpack.c.b16 %v4550, %v4542
    %v4943 = vpack.c.b16 %v4551, %v4543
    %v4944 = vpack.c.b16 %v4552, %v4544
    %v4945 = vpack.c.b16 %v4561, %v4553
    %v4946 = vpack.c.b16 %v4562, %v4554
    %v4947 = vpack.c.b16 %v4563, %v4555
    %v4948 = vpack.c.b16 %v4564, %v4556
    %v4949 = vpack.c.b16 %v4565, %v4557
    %v4950 = vpack.c.b16 %v4566, %v4558
    %v4951 = vpack.c.b16 %v4567, %v4559
    %v4952 = vpack.c.b16 %v4568, %v4560
    %v4953 = vpack.c.b16 %v4577, %v4569
    %v4954 = vpack.c.b16 %v4578, %v4570
    %v4955 = vpack.c.b16 %v4579, %v4571
    %v4956 = vpack.c.b16 %v4580, %v4572
    %v4957 = vpack.c.b16 %v4581, %v4573
    %v4958 = vpack.c.b16 %v4582, %v4574
    %v4959 = vpack.c.b16 %v4583, %v4575
    %v4960 = vpack.c.b16 %v4584, %v4576
    %v4961 = vpack.c.b16 %v4593, %v4585
    %v4962 = vpack.c.b16 %v4594, %v4586
    %v4963 = vpack.c.b16 %v4595, %v4587
    %v4964 = vpack.c.b16 %v4596, %v4588
    %v4965 = vpack.c.b16 %v4597, %v4589
    %v4966 = vpack.c.b16 %v4598, %v4590
    %v4967 = vpack.c.b16 %v4599, %v4591
    %v4968 = vpack.c.b16 %v4600, %v4592
    %v4969 = vpack.c.b16 %v4609, %v4601
    %v4970 = vpack.c.b16 %v4610, %v4602
    %v4971 = vpack.c.b16 %v4611, %v4603
    %v4972 = vpack.c.b16 %v4612, %v4604
    %v4973 = vpack.c.b16 %v4613, %v4605
    %v4974 = vpack.c.b16 %v4614, %v4606
    %v4975 = vpack.c.b16 %v4615, %v4607
    %v4976 = vpack.c.b16 %v4616, %v4608
    %v4977 = vpack.c.b16 %v4625, %v4617
    %v4978 = vpack.c.b16 %v4626, %v4618
    %v4979 = vpack.c.b16 %v4627, %v4619
    %v4980 = vpack.c.b16 %v4628, %v4620
    %v4981 = vpack.c.b16 %v4629, %v4621
    %v4982 = vpack.c.b16 %v4630, %v4622
    %v4983 = vpack.c.b16 %v4631, %v4623
    %v4984 = vpack.c.b16 %v4632, %v4624
    %v4985 = vpack.c.b16 %v4641, %v4633
    %v4986 = vpack.c.b16 %v4642, %v4634
    %v4987 = vpack.c.b16 %v4643, %v4635
    %v4988 = vpack.c.b16 %v4644, %v4636
    %v4989 = vpack.c.b16 %v4645, %v4637
    %v4990 = vpack.c.b16 %v4646, %v4638
    %v4991 = vpack.c.b16 %v4647, %v4639
    %v4992 = vpack.c.b16 %v4648, %v4640
    %v4993 = vpack.c.b16 %v4657, %v4649
    %v4994 = vpack.c.b16 %v4658, %v4650
    %v4995 = vpack.c.b16 %v4659, %v4651
    %v4996 = vpack.c.b16 %v4660, %v4652
    %v4997 = vpack.c.b16 %v4661, %v4653
    %v4998 = vpack.c.b16 %v4662, %v4654
    %v4999 = vpack.c.b16 %v4663, %v4655
    %v5000 = vpack.c.b16 %v4664, %v4656
    %v5001 = vpack.c.b16 %v4673, %v4665
    %v5002 = vpack.c.b16 %v4674, %v4666
    %v5003 = vpack.c.b16 %v4675, %v4667
    %v5004 = vpack.c.b16 %v4676, %v4668
    %v5005 = vpack.c.b16 %v4677, %v4669
    %v5006 = vpack.c.b16 %v4678, %v4670
    %v5007 = vpack.c.b16 %v4679, %v4671
    %v5008 = vpack.c.b16 %v4680, %v4672
    %v5009 = vpack.c.b16 %v4689, %v4681
    %v5010 = vpack.c.b16 %v4690, %v4682
    %v5011 = vpack.c.b16 %v4691, %v4683
    %v5012 = vpack.c.b16 %v4692, %v4684
    %v5013 = vpack.c.b16 %v4693, %v4685
    %v5014 = vpack.c.b16 %v4694, %v4686
    %v5015 = vpack.c.b16 %v4695, %v4687
    %v5016 = vpack.c.b16 %v4696, %v4688
    %v5017 = vpack.c.b16 %v4705, %v4697
    %v5018 = vpack.c.b16 %v4706, %v4698
    %v5019 = vpack.c.b16 %v4707, %v4699
    %v5020 = vpack.c.b16 %v4708, %v4700
    %v5021 = vpack.c.b16 %v4709, %v4701
    %v5022 = vpack.c.b16 %v4710, %v4702
    %v5023 = vpack.c.b16 %v4711, %v4703
    %v5024 = vpack.c.b16 %v4712, %v4704
    %v5025 = vpack.c.b16 %v4721, %v4713
    %v5026 = vpack.c.b16 %v4722, %v4714
    %v5027 = vpack.c.b16 %v4723, %v4715
    %v5028 = vpack.c.b16 %v4724, %v4716
    %v5029 = vpack.c.b16 %v4725, %v4717
    %v5030 = vpack.c.b16 %v4726, %v4718
    %v5031 = vpack.c.b16 %v4727, %v4719
    %v5032 = vpack.c.b16 %v4728, %v4720
    %v5033 = vpack.c.b16 %v4737, %v4729
    %v5034 = vpack.c.b16 %v4738, %v4730
    %v5035 = vpack.c.b16 %v4739, %v4731
    %v5036 = vpack.c.b16 %v4740, %v4732
    %v5037 = vpack.c.b16 %v4741, %v4733
    %v5038 = vpack.c.b16 %v4742, %v4734
    %v5039 = vpack.c.b16 %v4743, %v4735
    %v5040 = vpack.c.b16 %v4744, %v4736
    %v5041 = vpack.c.b16 %v4753, %v4745
    %v5042 = vpack.c.b16 %v4754, %v4746
    %v5043 = vpack.c.b16 %v4755, %v4747
    %v5044 = vpack.c.b16 %v4756, %v4748
    %v5045 = vpack.c.b16 %v4757, %v4749
    %v5046 = vpack.c.b16 %v4758, %v4750
    %v5047 = vpack.c.b16 %v4759, %v4751
    %v5048 = vpack.c.b16 %v4760, %v4752
    %v5049 = vpack.c.b16 %v4769, %v4761
    %v5050 = vpack.c.b16 %v4770, %v4762
    %v5051 = vpack.c.b16 %v4771, %v4763
    %v5052 = vpack.c.b16 %v4772, %v4764
    %v5053 = vpack.c.b16 %v4773, %v4765
    %v5054 = vpack.c.b16 %v4774, %v4766
    %v5055 = vpack.c.b16 %v4775, %v4767
    %v5056 = vpack.c.b16 %v4776, %v4768
    %v5057 = vpack.c.b16 %v4785, %v4777
    %v5058 = vpack.c.b16 %v4786, %v4778
    %v5059 = vpack.c.b16 %v4787, %v4779
    %v5060 = vpack.c.b16 %v4788, %v4780
    %v5061 = vpack.c.b16 %v4789, %v4781
    %v5062 = vpack.c.b16 %v4790, %v4782
    %v5063 = vpack.c.b16 %v4791, %v4783
    %v5064 = vpack.c.b16 %v4792, %v4784
    %v5065 = vpack.c.b16 %v4801, %v4793
    %v5066 = vpack.c.b16 %v4802, %v4794
    %v5067 = vpack.c.b16 %v4803, %v4795
    %v5068 = vpack.c.b16 %v4804, %v4796
    %v5069 = vpack.c.b16 %v4805, %v4797
    %v5070 = vpack.c.b16 %v4806, %v4798
    %v5071 = vpack.c.b16 %v4807, %v4799
    %v5072 = vpack.c.b16 %v4808, %v4800
    %v5073 = vpack.c.b16 %v4817, %v4809
    %v5074 = vpack.c.b16 %v4818, %v4810
    %v5075 = vpack.c.b16 %v4819, %v4811
    %v5076 = vpack.c.b16 %v4820, %v4812
    %v5077 = vpack.c.b16 %v4821, %v4813
    %v5078 = vpack.c.b16 %v4822, %v4814
    %v5079 = vpack.c.b16 %v4823, %v4815
    %v5080 = vpack.c.b16 %v4824, %v4816
    %5337 = vmatpush.bf16.msra.mxu0 %v4881
    %5338 = vmatpush.bf16.msra.mxu0 %v4873
    %5339 = vmatpush.bf16.msra.mxu0 %v4865
    %5340 = vmatpush.bf16.msra.mxu0 %v4857
    %5341 = vmatpush.bf16.msra.mxu0 %v4849
    %5342 = vmatpush.bf16.msra.mxu0 %v4841
    %5343 = vmatpush.bf16.msra.mxu0 %v4833
    %5344 = vmatpush.bf16.msra.mxu0 %v4825
    %5345 = vmatmul.bf16.gmra.mxu0 %v3779
    %v5346 = vpop.f32.mrf.mxu0
    %v5347 = vadd.f32 %v4041, %v5346
    %v5348 = vpop.f32.mrf.mxu0
    %v5349 = vadd.f32 %v4041, %v5348
    %5350 = vdwg.mxu0
    %5351 = vmatpush.bf16.msra.mxu0 %v4945
    %5352 = vmatpush.bf16.msra.mxu0 %v4937
    %5353 = vmatpush.bf16.msra.mxu0 %v4929
    %5354 = vmatpush.bf16.msra.mxu0 %v4921
    %5355 = vmatpush.bf16.msra.mxu0 %v4913
    %5356 = vmatpush.bf16.msra.mxu0 %v4905
    %5357 = vmatpush.bf16.msra.mxu0 %v4897
    %5358 = vmatpush.bf16.msra.mxu0 %v4889
    %5359 = vmatmul.bf16.gmra.mxu0 %v3780
    %v5360 = vpop.f32.mrf.mxu0
    %v5361 = vadd.f32 %v5347, %v5360
    %v5362 = vpop.f32.mrf.mxu0
    %v5363 = vadd.f32 %v5349, %v5362
    %5364 = vdwg.mxu0
    %5365 = vmatpush.bf16.msra.mxu0 %v5009
    %5366 = vmatpush.bf16.msra.mxu0 %v5001
    %5367 = vmatpush.bf16.msra.mxu0 %v4993
    %5368 = vmatpush.bf16.msra.mxu0 %v4985
    %5369 = vmatpush.bf16.msra.mxu0 %v4977
    %5370 = vmatpush.bf16.msra.mxu0 %v4969
    %5371 = vmatpush.bf16.msra.mxu0 %v4961
    %5372 = vmatpush.bf16.msra.mxu0 %v4953
    %5373 = vmatmul.bf16.gmra.mxu0 %v3781
    %v5374 = vpop.f32.mrf.mxu0
    %v5375 = vadd.f32 %v5361, %v5374
    %v5376 = vpop.f32.mrf.mxu0
    %v5377 = vadd.f32 %v5363, %v5376
    %5378 = vdwg.mxu0
    %5379 = vmatpush.bf16.msra.mxu0 %v5073
    %5380 = vmatpush.bf16.msra.mxu0 %v5065
    %5381 = vmatpush.bf16.msra.mxu0 %v5057
    %5382 = vmatpush.bf16.msra.mxu0 %v5049
    %5383 = vmatpush.bf16.msra.mxu0 %v5041
    %5384 = vmatpush.bf16.msra.mxu0 %v5033
    %5385 = vmatpush.bf16.msra.mxu0 %v5025
    %5386 = vmatpush.bf16.msra.mxu0 %v5017
    %5387 = vmatmul.bf16.gmra.mxu0 %v3782
    %v5388 = vpop.f32.mrf.mxu0
    %v5389 = vadd.f32 %v5375, %v5388
    %v5390 = vpop.f32.mrf.mxu0
    %v5391 = vadd.f32 %v5377, %v5390
    %5392 = vdwg.mxu0
    %5393 = vmatpush.bf16.msra.mxu0 %v4882
    %5394 = vmatpush.bf16.msra.mxu0 %v4874
    %5395 = vmatpush.bf16.msra.mxu0 %v4866
    %5396 = vmatpush.bf16.msra.mxu0 %v4858
    %5397 = vmatpush.bf16.msra.mxu0 %v4850
    %5398 = vmatpush.bf16.msra.mxu0 %v4842
    %5399 = vmatpush.bf16.msra.mxu0 %v4834
    %5400 = vmatpush.bf16.msra.mxu0 %v4826
    %5401 = vmatmul.bf16.gmra.mxu0 %v3779
    %v5402 = vpop.f32.mrf.mxu0
    %v5403 = vadd.f32 %v4042, %v5402
    %v5404 = vpop.f32.mrf.mxu0
    %v5405 = vadd.f32 %v4042, %v5404
    %5406 = vdwg.mxu0
    %5407 = vmatpush.bf16.msra.mxu0 %v4946
    %5408 = vmatpush.bf16.msra.mxu0 %v4938
    %5409 = vmatpush.bf16.msra.mxu0 %v4930
    %5410 = vmatpush.bf16.msra.mxu0 %v4922
    %5411 = vmatpush.bf16.msra.mxu0 %v4914
    %5412 = vmatpush.bf16.msra.mxu0 %v4906
    %5413 = vmatpush.bf16.msra.mxu0 %v4898
    %5414 = vmatpush.bf16.msra.mxu0 %v4890
    %5415 = vmatmul.bf16.gmra.mxu0 %v3780
    %v5416 = vpop.f32.mrf.mxu0
    %v5417 = vadd.f32 %v5403, %v5416
    %v5418 = vpop.f32.mrf.mxu0
    %v5419 = vadd.f32 %v5405, %v5418
    %5420 = vdwg.mxu0
    %5421 = vmatpush.bf16.msra.mxu0 %v5010
    %5422 = vmatpush.bf16.msra.mxu0 %v5002
    %5423 = vmatpush.bf16.msra.mxu0 %v4994
    %5424 = vmatpush.bf16.msra.mxu0 %v4986
    %5425 = vmatpush.bf16.msra.mxu0 %v4978
    %5426 = vmatpush.bf16.msra.mxu0 %v4970
    %5427 = vmatpush.bf16.msra.mxu0 %v4962
    %5428 = vmatpush.bf16.msra.mxu0 %v4954
    %5429 = vmatmul.bf16.gmra.mxu0 %v3781
    %v5430 = vpop.f32.mrf.mxu0
    %v5431 = vadd.f32 %v5417, %v5430
    %v5432 = vpop.f32.mrf.mxu0
    %v5433 = vadd.f32 %v5419, %v5432
    %5434 = vdwg.mxu0
    %5435 = vmatpush.bf16.msra.mxu0 %v5074
    %5436 = vmatpush.bf16.msra.mxu0 %v5066
    %5437 = vmatpush.bf16.msra.mxu0 %v5058
    %5438 = vmatpush.bf16.msra.mxu0 %v5050
    %5439 = vmatpush.bf16.msra.mxu0 %v5042
    %5440 = vmatpush.bf16.msra.mxu0 %v5034
    %5441 = vmatpush.bf16.msra.mxu0 %v5026
    %5442 = vmatpush.bf16.msra.mxu0 %v5018
    %5443 = vmatmul.bf16.gmra.mxu0 %v3782
    %v5444 = vpop.f32.mrf.mxu0
    %v5445 = vadd.f32 %v5431, %v5444
    %v5446 = vpop.f32.mrf.mxu0
    %v5447 = vadd.f32 %v5433, %v5446
    %5448 = vdwg.mxu0
    %5449 = vmatpush.bf16.msra.mxu0 %v4883
    %5450 = vmatpush.bf16.msra.mxu0 %v4875
    %5451 = vmatpush.bf16.msra.mxu0 %v4867
    %5452 = vmatpush.bf16.msra.mxu0 %v4859
    %5453 = vmatpush.bf16.msra.mxu0 %v4851
    %5454 = vmatpush.bf16.msra.mxu0 %v4843
    %5455 = vmatpush.bf16.msra.mxu0 %v4835
    %5456 = vmatpush.bf16.msra.mxu0 %v4827
    %5457 = vmatmul.bf16.gmra.mxu0 %v3779
    %v5458 = vpop.f32.mrf.mxu0
    %v5459 = vadd.f32 %v4043, %v5458
    %v5460 = vpop.f32.mrf.mxu0
    %v5461 = vadd.f32 %v4043, %v5460
    %5462 = vdwg.mxu0
    %5463 = vmatpush.bf16.msra.mxu0 %v4947
    %5464 = vmatpush.bf16.msra.mxu0 %v4939
    %5465 = vmatpush.bf16.msra.mxu0 %v4931
    %5466 = vmatpush.bf16.msra.mxu0 %v4923
    %5467 = vmatpush.bf16.msra.mxu0 %v4915
    %5468 = vmatpush.bf16.msra.mxu0 %v4907
    %5469 = vmatpush.bf16.msra.mxu0 %v4899
    %5470 = vmatpush.bf16.msra.mxu0 %v4891
    %5471 = vmatmul.bf16.gmra.mxu0 %v3780
    %v5472 = vpop.f32.mrf.mxu0
    %v5473 = vadd.f32 %v5459, %v5472
    %v5474 = vpop.f32.mrf.mxu0
    %v5475 = vadd.f32 %v5461, %v5474
    %5476 = vdwg.mxu0
    %5477 = vmatpush.bf16.msra.mxu0 %v5011
    %5478 = vmatpush.bf16.msra.mxu0 %v5003
    %5479 = vmatpush.bf16.msra.mxu0 %v4995
    %5480 = vmatpush.bf16.msra.mxu0 %v4987
    %5481 = vmatpush.bf16.msra.mxu0 %v4979
    %5482 = vmatpush.bf16.msra.mxu0 %v4971
    %5483 = vmatpush.bf16.msra.mxu0 %v4963
    %5484 = vmatpush.bf16.msra.mxu0 %v4955
    %5485 = vmatmul.bf16.gmra.mxu0 %v3781
    %v5486 = vpop.f32.mrf.mxu0
    %v5487 = vadd.f32 %v5473, %v5486
    %v5488 = vpop.f32.mrf.mxu0
    %v5489 = vadd.f32 %v5475, %v5488
    %5490 = vdwg.mxu0
    %5491 = vmatpush.bf16.msra.mxu0 %v5075
    %5492 = vmatpush.bf16.msra.mxu0 %v5067
    %5493 = vmatpush.bf16.msra.mxu0 %v5059
    %5494 = vmatpush.bf16.msra.mxu0 %v5051
    %5495 = vmatpush.bf16.msra.mxu0 %v5043
    %5496 = vmatpush.bf16.msra.mxu0 %v5035
    %5497 = vmatpush.bf16.msra.mxu0 %v5027
    %5498 = vmatpush.bf16.msra.mxu0 %v5019
    %5499 = vmatmul.bf16.gmra.mxu0 %v3782
    %v5500 = vpop.f32.mrf.mxu0
    %v5501 = vadd.f32 %v5487, %v5500
    %v5502 = vpop.f32.mrf.mxu0
    %v5503 = vadd.f32 %v5489, %v5502
    %5504 = vdwg.mxu0
    %5505 = vmatpush.bf16.msra.mxu0 %v4884
    %5506 = vmatpush.bf16.msra.mxu0 %v4876
    %5507 = vmatpush.bf16.msra.mxu0 %v4868
    %5508 = vmatpush.bf16.msra.mxu0 %v4860
    %5509 = vmatpush.bf16.msra.mxu0 %v4852
    %5510 = vmatpush.bf16.msra.mxu0 %v4844
    %5511 = vmatpush.bf16.msra.mxu0 %v4836
    %5512 = vmatpush.bf16.msra.mxu0 %v4828
    %5513 = vmatmul.bf16.gmra.mxu0 %v3779
    %v5514 = vpop.f32.mrf.mxu0
    %v5515 = vadd.f32 %v4044, %v5514
    %v5516 = vpop.f32.mrf.mxu0
    %v5517 = vadd.f32 %v4044, %v5516
    %5518 = vdwg.mxu0
    %5519 = vmatpush.bf16.msra.mxu0 %v4948
    %5520 = vmatpush.bf16.msra.mxu0 %v4940
    %5521 = vmatpush.bf16.msra.mxu0 %v4932
    %5522 = vmatpush.bf16.msra.mxu0 %v4924
    %5523 = vmatpush.bf16.msra.mxu0 %v4916
    %5524 = vmatpush.bf16.msra.mxu0 %v4908
    %5525 = vmatpush.bf16.msra.mxu0 %v4900
    %5526 = vmatpush.bf16.msra.mxu0 %v4892
    %5527 = vmatmul.bf16.gmra.mxu0 %v3780
    %v5528 = vpop.f32.mrf.mxu0
    %v5529 = vadd.f32 %v5515, %v5528
    %v5530 = vpop.f32.mrf.mxu0
    %v5531 = vadd.f32 %v5517, %v5530
    %5532 = vdwg.mxu0
    %5533 = vmatpush.bf16.msra.mxu0 %v5012
    %5534 = vmatpush.bf16.msra.mxu0 %v5004
    %5535 = vmatpush.bf16.msra.mxu0 %v4996
    %5536 = vmatpush.bf16.msra.mxu0 %v4988
    %5537 = vmatpush.bf16.msra.mxu0 %v4980
    %5538 = vmatpush.bf16.msra.mxu0 %v4972
    %5539 = vmatpush.bf16.msra.mxu0 %v4964
    %5540 = vmatpush.bf16.msra.mxu0 %v4956
    %5541 = vmatmul.bf16.gmra.mxu0 %v3781
    %v5542 = vpop.f32.mrf.mxu0
    %v5543 = vadd.f32 %v5529, %v5542
    %v5544 = vpop.f32.mrf.mxu0
    %v5545 = vadd.f32 %v5531, %v5544
    %5546 = vdwg.mxu0
    %5547 = vmatpush.bf16.msra.mxu0 %v5076
    %5548 = vmatpush.bf16.msra.mxu0 %v5068
    %5549 = vmatpush.bf16.msra.mxu0 %v5060
    %5550 = vmatpush.bf16.msra.mxu0 %v5052
    %5551 = vmatpush.bf16.msra.mxu0 %v5044
    %5552 = vmatpush.bf16.msra.mxu0 %v5036
    %5553 = vmatpush.bf16.msra.mxu0 %v5028
    %5554 = vmatpush.bf16.msra.mxu0 %v5020
    %5555 = vmatmul.bf16.gmra.mxu0 %v3782
    %v5556 = vpop.f32.mrf.mxu0
    %v5557 = vadd.f32 %v5543, %v5556
    %v5558 = vpop.f32.mrf.mxu0
    %v5559 = vadd.f32 %v5545, %v5558
    %5560 = vdwg.mxu0
    %5561 = vmatpush.bf16.msra.mxu0 %v4885
    %5562 = vmatpush.bf16.msra.mxu0 %v4877
    %5563 = vmatpush.bf16.msra.mxu0 %v4869
    %5564 = vmatpush.bf16.msra.mxu0 %v4861
    %5565 = vmatpush.bf16.msra.mxu0 %v4853
    %5566 = vmatpush.bf16.msra.mxu0 %v4845
    %5567 = vmatpush.bf16.msra.mxu0 %v4837
    %5568 = vmatpush.bf16.msra.mxu0 %v4829
    %5569 = vmatmul.bf16.gmra.mxu0 %v3779
    %v5570 = vpop.f32.mrf.mxu0
    %v5571 = vadd.f32 %v4045, %v5570
    %v5572 = vpop.f32.mrf.mxu0
    %v5573 = vadd.f32 %v4045, %v5572
    %5574 = vdwg.mxu0
    %5575 = vmatpush.bf16.msra.mxu0 %v4949
    %5576 = vmatpush.bf16.msra.mxu0 %v4941
    %5577 = vmatpush.bf16.msra.mxu0 %v4933
    %5578 = vmatpush.bf16.msra.mxu0 %v4925
    %5579 = vmatpush.bf16.msra.mxu0 %v4917
    %5580 = vmatpush.bf16.msra.mxu0 %v4909
    %5581 = vmatpush.bf16.msra.mxu0 %v4901
    %5582 = vmatpush.bf16.msra.mxu0 %v4893
    %5583 = vmatmul.bf16.gmra.mxu0 %v3780
    %v5584 = vpop.f32.mrf.mxu0
    %v5585 = vadd.f32 %v5571, %v5584
    %v5586 = vpop.f32.mrf.mxu0
    %v5587 = vadd.f32 %v5573, %v5586
    %5588 = vdwg.mxu0
    %5589 = vmatpush.bf16.msra.mxu0 %v5013
    %5590 = vmatpush.bf16.msra.mxu0 %v5005
    %5591 = vmatpush.bf16.msra.mxu0 %v4997
    %5592 = vmatpush.bf16.msra.mxu0 %v4989
    %5593 = vmatpush.bf16.msra.mxu0 %v4981
    %5594 = vmatpush.bf16.msra.mxu0 %v4973
    %5595 = vmatpush.bf16.msra.mxu0 %v4965
    %5596 = vmatpush.bf16.msra.mxu0 %v4957
    %5597 = vmatmul.bf16.gmra.mxu0 %v3781
    %v5598 = vpop.f32.mrf.mxu0
    %v5599 = vadd.f32 %v5585, %v5598
    %v5600 = vpop.f32.mrf.mxu0
    %v5601 = vadd.f32 %v5587, %v5600
    %5602 = vdwg.mxu0
    %5603 = vmatpush.bf16.msra.mxu0 %v5077
    %5604 = vmatpush.bf16.msra.mxu0 %v5069
    %5605 = vmatpush.bf16.msra.mxu0 %v5061
    %5606 = vmatpush.bf16.msra.mxu0 %v5053
    %5607 = vmatpush.bf16.msra.mxu0 %v5045
    %5608 = vmatpush.bf16.msra.mxu0 %v5037
    %5609 = vmatpush.bf16.msra.mxu0 %v5029
    %5610 = vmatpush.bf16.msra.mxu0 %v5021
    %5611 = vmatmul.bf16.gmra.mxu0 %v3782
    %v5612 = vpop.f32.mrf.mxu0
    %v5613 = vadd.f32 %v5599, %v5612
    %v5614 = vpop.f32.mrf.mxu0
    %v5615 = vadd.f32 %v5601, %v5614
    %5616 = vdwg.mxu0
    %5617 = vmatpush.bf16.msra.mxu0 %v4886
    %5618 = vmatpush.bf16.msra.mxu0 %v4878
    %5619 = vmatpush.bf16.msra.mxu0 %v4870
    %5620 = vmatpush.bf16.msra.mxu0 %v4862
    %5621 = vmatpush.bf16.msra.mxu0 %v4854
    %5622 = vmatpush.bf16.msra.mxu0 %v4846
    %5623 = vmatpush.bf16.msra.mxu0 %v4838
    %5624 = vmatpush.bf16.msra.mxu0 %v4830
    %5625 = vmatmul.bf16.gmra.mxu0 %v3779
    %v5626 = vpop.f32.mrf.mxu0
    %v5627 = vadd.f32 %v4046, %v5626
    %v5628 = vpop.f32.mrf.mxu0
    %v5629 = vadd.f32 %v4046, %v5628
    %5630 = vdwg.mxu0
    %5631 = vmatpush.bf16.msra.mxu0 %v4950
    %5632 = vmatpush.bf16.msra.mxu0 %v4942
    %5633 = vmatpush.bf16.msra.mxu0 %v4934
    %5634 = vmatpush.bf16.msra.mxu0 %v4926
    %5635 = vmatpush.bf16.msra.mxu0 %v4918
    %5636 = vmatpush.bf16.msra.mxu0 %v4910
    %5637 = vmatpush.bf16.msra.mxu0 %v4902
    %5638 = vmatpush.bf16.msra.mxu0 %v4894
    %5639 = vmatmul.bf16.gmra.mxu0 %v3780
    %v5640 = vpop.f32.mrf.mxu0
    %v5641 = vadd.f32 %v5627, %v5640
    %v5642 = vpop.f32.mrf.mxu0
    %v5643 = vadd.f32 %v5629, %v5642
    %5644 = vdwg.mxu0
    %5645 = vmatpush.bf16.msra.mxu0 %v5014
    %5646 = vmatpush.bf16.msra.mxu0 %v5006
    %5647 = vmatpush.bf16.msra.mxu0 %v4998
    %5648 = vmatpush.bf16.msra.mxu0 %v4990
    %5649 = vmatpush.bf16.msra.mxu0 %v4982
    %5650 = vmatpush.bf16.msra.mxu0 %v4974
    %5651 = vmatpush.bf16.msra.mxu0 %v4966
    %5652 = vmatpush.bf16.msra.mxu0 %v4958
    %5653 = vmatmul.bf16.gmra.mxu0 %v3781
    %v5654 = vpop.f32.mrf.mxu0
    %v5655 = vadd.f32 %v5641, %v5654
    %v5656 = vpop.f32.mrf.mxu0
    %v5657 = vadd.f32 %v5643, %v5656
    %5658 = vdwg.mxu0
    %5659 = vmatpush.bf16.msra.mxu0 %v5078
    %5660 = vmatpush.bf16.msra.mxu0 %v5070
    %5661 = vmatpush.bf16.msra.mxu0 %v5062
    %5662 = vmatpush.bf16.msra.mxu0 %v5054
    %5663 = vmatpush.bf16.msra.mxu0 %v5046
    %5664 = vmatpush.bf16.msra.mxu0 %v5038
    %5665 = vmatpush.bf16.msra.mxu0 %v5030
    %5666 = vmatpush.bf16.msra.mxu0 %v5022
    %5667 = vmatmul.bf16.gmra.mxu0 %v3782
    %v5668 = vpop.f32.mrf.mxu0
    %v5669 = vadd.f32 %v5655, %v5668
    %v5670 = vpop.f32.mrf.mxu0
    %v5671 = vadd.f32 %v5657, %v5670
    %5672 = vdwg.mxu0
    %5673 = vmatpush.bf16.msra.mxu0 %v4887
    %5674 = vmatpush.bf16.msra.mxu0 %v4879
    %5675 = vmatpush.bf16.msra.mxu0 %v4871
    %5676 = vmatpush.bf16.msra.mxu0 %v4863
    %5677 = vmatpush.bf16.msra.mxu0 %v4855
    %5678 = vmatpush.bf16.msra.mxu0 %v4847
    %5679 = vmatpush.bf16.msra.mxu0 %v4839
    %5680 = vmatpush.bf16.msra.mxu0 %v4831
    %5681 = vmatmul.bf16.gmra.mxu0 %v3779
    %v5682 = vpop.f32.mrf.mxu0
    %v5683 = vadd.f32 %v4047, %v5682
    %v5684 = vpop.f32.mrf.mxu0
    %v5685 = vadd.f32 %v4047, %v5684
    %5686 = vdwg.mxu0
    %5687 = vmatpush.bf16.msra.mxu0 %v4951
    %5688 = vmatpush.bf16.msra.mxu0 %v4943
    %5689 = vmatpush.bf16.msra.mxu0 %v4935
    %5690 = vmatpush.bf16.msra.mxu0 %v4927
    %5691 = vmatpush.bf16.msra.mxu0 %v4919
    %5692 = vmatpush.bf16.msra.mxu0 %v4911
    %5693 = vmatpush.bf16.msra.mxu0 %v4903
    %5694 = vmatpush.bf16.msra.mxu0 %v4895
    %5695 = vmatmul.bf16.gmra.mxu0 %v3780
    %v5696 = vpop.f32.mrf.mxu0
    %v5697 = vadd.f32 %v5683, %v5696
    %v5698 = vpop.f32.mrf.mxu0
    %v5699 = vadd.f32 %v5685, %v5698
    %5700 = vdwg.mxu0
    %5701 = vmatpush.bf16.msra.mxu0 %v5015
    %5702 = vmatpush.bf16.msra.mxu0 %v5007
    %5703 = vmatpush.bf16.msra.mxu0 %v4999
    %5704 = vmatpush.bf16.msra.mxu0 %v4991
    %5705 = vmatpush.bf16.msra.mxu0 %v4983
    %5706 = vmatpush.bf16.msra.mxu0 %v4975
    %5707 = vmatpush.bf16.msra.mxu0 %v4967
    %5708 = vmatpush.bf16.msra.mxu0 %v4959
    %5709 = vmatmul.bf16.gmra.mxu0 %v3781
    %v5710 = vpop.f32.mrf.mxu0
    %v5711 = vadd.f32 %v5697, %v5710
    %v5712 = vpop.f32.mrf.mxu0
    %v5713 = vadd.f32 %v5699, %v5712
    %5714 = vdwg.mxu0
    %5715 = vmatpush.bf16.msra.mxu0 %v5079
    %5716 = vmatpush.bf16.msra.mxu0 %v5071
    %5717 = vmatpush.bf16.msra.mxu0 %v5063
    %5718 = vmatpush.bf16.msra.mxu0 %v5055
    %5719 = vmatpush.bf16.msra.mxu0 %v5047
    %5720 = vmatpush.bf16.msra.mxu0 %v5039
    %5721 = vmatpush.bf16.msra.mxu0 %v5031
    %5722 = vmatpush.bf16.msra.mxu0 %v5023
    %5723 = vmatmul.bf16.gmra.mxu0 %v3782
    %v5724 = vpop.f32.mrf.mxu0
    %v5725 = vadd.f32 %v5711, %v5724
    %v5726 = vpop.f32.mrf.mxu0
    %v5727 = vadd.f32 %v5713, %v5726
    %5728 = vdwg.mxu0
    %5729 = vmatpush.bf16.msra.mxu0 %v4888
    %5730 = vmatpush.bf16.msra.mxu0 %v4880
    %5731 = vmatpush.bf16.msra.mxu0 %v4872
    %5732 = vmatpush.bf16.msra.mxu0 %v4864
    %5733 = vmatpush.bf16.msra.mxu0 %v4856
    %5734 = vmatpush.bf16.msra.mxu0 %v4848
    %5735 = vmatpush.bf16.msra.mxu0 %v4840
    %5736 = vmatpush.bf16.msra.mxu0 %v4832
    %5737 = vmatmul.bf16.gmra.mxu0 %v3779
    %v5738 = vpop.f32.mrf.mxu0
    %v5739 = vadd.f32 %v4048, %v5738
    %v5740 = vpop.f32.mrf.mxu0
    %v5741 = vadd.f32 %v4048, %v5740
    %5742 = vdwg.mxu0
    %5743 = vmatpush.bf16.msra.mxu0 %v4952
    %5744 = vmatpush.bf16.msra.mxu0 %v4944
    %5745 = vmatpush.bf16.msra.mxu0 %v4936
    %5746 = vmatpush.bf16.msra.mxu0 %v4928
    %5747 = vmatpush.bf16.msra.mxu0 %v4920
    %5748 = vmatpush.bf16.msra.mxu0 %v4912
    %5749 = vmatpush.bf16.msra.mxu0 %v4904
    %5750 = vmatpush.bf16.msra.mxu0 %v4896
    %5751 = vmatmul.bf16.gmra.mxu0 %v3780
    %v5752 = vpop.f32.mrf.mxu0
    %v5753 = vadd.f32 %v5739, %v5752
    %v5754 = vpop.f32.mrf.mxu0
    %v5755 = vadd.f32 %v5741, %v5754
    %5756 = vdwg.mxu0
    %5757 = vmatpush.bf16.msra.mxu0 %v5016
    %5758 = vmatpush.bf16.msra.mxu0 %v5008
    %5759 = vmatpush.bf16.msra.mxu0 %v5000
    %5760 = vmatpush.bf16.msra.mxu0 %v4992
    %5761 = vmatpush.bf16.msra.mxu0 %v4984
    %5762 = vmatpush.bf16.msra.mxu0 %v4976
    %5763 = vmatpush.bf16.msra.mxu0 %v4968
    %5764 = vmatpush.bf16.msra.mxu0 %v4960
    %5765 = vmatmul.bf16.gmra.mxu0 %v3781
    %v5766 = vpop.f32.mrf.mxu0
    %v5767 = vadd.f32 %v5753, %v5766
    %v5768 = vpop.f32.mrf.mxu0
    %v5769 = vadd.f32 %v5755, %v5768
    %5770 = vdwg.mxu0
    %5771 = vmatpush.bf16.msra.mxu0 %v5080
    %5772 = vmatpush.bf16.msra.mxu0 %v5072
    %5773 = vmatpush.bf16.msra.mxu0 %v5064
    %5774 = vmatpush.bf16.msra.mxu0 %v5056
    %5775 = vmatpush.bf16.msra.mxu0 %v5048
    %5776 = vmatpush.bf16.msra.mxu0 %v5040
    %5777 = vmatpush.bf16.msra.mxu0 %v5032
    %5778 = vmatpush.bf16.msra.mxu0 %v5024
    %5779 = vmatmul.bf16.gmra.mxu0 %v3782
    %v5780 = vpop.f32.mrf.mxu0
    %v5781 = vadd.f32 %v5767, %v5780
    %v5782 = vpop.f32.mrf.mxu0
    %v5783 = vadd.f32 %v5769, %v5782
    %5784 = vdwg.mxu0
    %v5785 = vmax.f32 %v5389, 0.0
    %v5786 = vmax.f32 %v5445, 0.0
    %v5787 = vmax.f32 %v5501, 0.0
    %v5788 = vmax.f32 %v5557, 0.0
    %v5789 = vmax.f32 %v5613, 0.0
    %v5790 = vmax.f32 %v5669, 0.0
    %v5791 = vmax.f32 %v5725, 0.0
    %v5792 = vmax.f32 %v5781, 0.0
    %v5793 = vmax.f32 %v5391, 0.0
    %v5794 = vmax.f32 %v5447, 0.0
    %v5795 = vmax.f32 %v5503, 0.0
    %v5796 = vmax.f32 %v5559, 0.0
    %v5797 = vmax.f32 %v5615, 0.0
    %v5798 = vmax.f32 %v5671, 0.0
    %v5799 = vmax.f32 %v5727, 0.0
    %v5800 = vmax.f32 %v5783, 0.0
    %v5801 = vpack.c.bf16 %v5793, %v5785
    %v5802 = vpack.c.bf16 %v5794, %v5786
    %v5803 = vpack.c.bf16 %v5795, %v5787
    %v5804 = vpack.c.bf16 %v5796, %v5788
    %v5805 = vpack.c.bf16 %v5797, %v5789
    %v5806 = vpack.c.bf16 %v5798, %v5790
    %v5807 = vpack.c.bf16 %v5799, %v5791
    %v5808 = vpack.c.bf16 %v5800, %v5792
    %v5809 = vld [vmem:[#allocation11] sm:$0xff]
    %v5810 = vld [vmem:[#allocation11 + $0x8] sm:$0xff]
    %v5811 = vld [vmem:[#allocation11 + $0x10] sm:$0xff]
    %v5812 = vld [vmem:[#allocation11 + $0x18] sm:$0xff]
    %v5813 = vld [vmem:[#allocation11 + $0x20] sm:$0xff]
    %v5814 = vld [vmem:[#allocation11 + $0x28] sm:$0xff]
    %v5815 = vld [vmem:[#allocation11 + $0x30] sm:$0xff]
    %v5816 = vld [vmem:[#allocation11 + $0x38] sm:$0xff]
    %v5817 = vld [vmem:[#allocation11 + $0x40] sm:$0xff]
    %v5818 = vld [vmem:[#allocation11 + $0x48] sm:$0xff]
    %v5819 = vld [vmem:[#allocation11 + $0x50] sm:$0xff]
    %v5820 = vld [vmem:[#allocation11 + $0x58] sm:$0xff]
    %v5821 = vld [vmem:[#allocation11 + $0x60] sm:$0xff]
    %v5822 = vld [vmem:[#allocation11 + $0x68] sm:$0xff]
    %v5823 = vld [vmem:[#allocation11 + $0x70] sm:$0xff]
    %v5824 = vld [vmem:[#allocation11 + $0x78] sm:$0xff]
    %v5825 = vld [vmem:[#allocation11 + $0x80] sm:$0xff]
    %v5826 = vld [vmem:[#allocation11 + $0x88] sm:$0xff]
    %v5827 = vld [vmem:[#allocation11 + $0x90] sm:$0xff]
    %v5828 = vld [vmem:[#allocation11 + $0x98] sm:$0xff]
    %v5829 = vld [vmem:[#allocation11 + $0xa0] sm:$0xff]
    %v5830 = vld [vmem:[#allocation11 + $0xa8] sm:$0xff]
    %v5831 = vld [vmem:[#allocation11 + $0xb0] sm:$0xff]
    %v5832 = vld [vmem:[#allocation11 + $0xb8] sm:$0xff]
    %v5833 = vld [vmem:[#allocation11 + $0xc0] sm:$0xff]
    %v5834 = vld [vmem:[#allocation11 + $0xc8] sm:$0xff]
    %v5835 = vld [vmem:[#allocation11 + $0xd0] sm:$0xff]
    %v5836 = vld [vmem:[#allocation11 + $0xd8] sm:$0xff]
    %v5837 = vld [vmem:[#allocation11 + $0xe0] sm:$0xff]
    %v5838 = vld [vmem:[#allocation11 + $0xe8] sm:$0xff]
    %v5839 = vld [vmem:[#allocation11 + $0xf0] sm:$0xff]
    %v5840 = vld [vmem:[#allocation11 + $0xf8] sm:$0xff]
    %v5841 = vld [vmem:[#allocation11 + $0x100] sm:$0xff]
    %v5842 = vld [vmem:[#allocation11 + $0x108] sm:$0xff]
    %v5843 = vld [vmem:[#allocation11 + $0x110] sm:$0xff]
    %v5844 = vld [vmem:[#allocation11 + $0x118] sm:$0xff]
    %v5845 = vld [vmem:[#allocation11 + $0x120] sm:$0xff]
    %v5846 = vld [vmem:[#allocation11 + $0x128] sm:$0xff]
    %v5847 = vld [vmem:[#allocation11 + $0x130] sm:$0xff]
    %v5848 = vld [vmem:[#allocation11 + $0x138] sm:$0xff]
    %v5849 = vld [vmem:[#allocation11 + $0x140] sm:$0xff]
    %v5850 = vld [vmem:[#allocation11 + $0x148] sm:$0xff]
    %v5851 = vld [vmem:[#allocation11 + $0x150] sm:$0xff]
    %v5852 = vld [vmem:[#allocation11 + $0x158] sm:$0xff]
    %v5853 = vld [vmem:[#allocation11 + $0x160] sm:$0xff]
    %v5854 = vld [vmem:[#allocation11 + $0x168] sm:$0xff]
    %v5855 = vld [vmem:[#allocation11 + $0x170] sm:$0xff]
    %v5856 = vld [vmem:[#allocation11 + $0x178] sm:$0xff]
    %v5857 = vld [vmem:[#allocation11 + $0x180] sm:$0xff]
    %v5858 = vld [vmem:[#allocation11 + $0x188] sm:$0xff]
    %v5859 = vld [vmem:[#allocation11 + $0x190] sm:$0xff]
    %v5860 = vld [vmem:[#allocation11 + $0x198] sm:$0xff]
    %v5861 = vld [vmem:[#allocation11 + $0x1a0] sm:$0xff]
    %v5862 = vld [vmem:[#allocation11 + $0x1a8] sm:$0xff]
    %v5863 = vld [vmem:[#allocation11 + $0x1b0] sm:$0xff]
    %v5864 = vld [vmem:[#allocation11 + $0x1b8] sm:$0xff]
    %v5865 = vld [vmem:[#allocation11 + $0x1c0] sm:$0xff]
    %v5866 = vld [vmem:[#allocation11 + $0x1c8] sm:$0xff]
    %v5867 = vld [vmem:[#allocation11 + $0x1d0] sm:$0xff]
    %v5868 = vld [vmem:[#allocation11 + $0x1d8] sm:$0xff]
    %v5869 = vld [vmem:[#allocation11 + $0x1e0] sm:$0xff]
    %v5870 = vld [vmem:[#allocation11 + $0x1e8] sm:$0xff]
    %v5871 = vld [vmem:[#allocation11 + $0x1f0] sm:$0xff]
    %v5872 = vld [vmem:[#allocation11 + $0x1f8] sm:$0xff]
    %v5873 = vld [vmem:[#allocation11 + $0x200] sm:$0xff]
    %v5874 = vld [vmem:[#allocation11 + $0x208] sm:$0xff]
    %v5875 = vld [vmem:[#allocation11 + $0x210] sm:$0xff]
    %v5876 = vld [vmem:[#allocation11 + $0x218] sm:$0xff]
    %v5877 = vld [vmem:[#allocation11 + $0x220] sm:$0xff]
    %v5878 = vld [vmem:[#allocation11 + $0x228] sm:$0xff]
    %v5879 = vld [vmem:[#allocation11 + $0x230] sm:$0xff]
    %v5880 = vld [vmem:[#allocation11 + $0x238] sm:$0xff]
    %v5881 = vld [vmem:[#allocation11 + $0x240] sm:$0xff]
    %v5882 = vld [vmem:[#allocation11 + $0x248] sm:$0xff]
    %v5883 = vld [vmem:[#allocation11 + $0x250] sm:$0xff]
    %v5884 = vld [vmem:[#allocation11 + $0x258] sm:$0xff]
    %v5885 = vld [vmem:[#allocation11 + $0x260] sm:$0xff]
    %v5886 = vld [vmem:[#allocation11 + $0x268] sm:$0xff]
    %v5887 = vld [vmem:[#allocation11 + $0x270] sm:$0xff]
    %v5888 = vld [vmem:[#allocation11 + $0x278] sm:$0xff]
    %v5889 = vld [vmem:[#allocation11 + $0x280] sm:$0xff]
    %v5890 = vld [vmem:[#allocation11 + $0x288] sm:$0xff]
    %v5891 = vld [vmem:[#allocation11 + $0x290] sm:$0xff]
    %v5892 = vld [vmem:[#allocation11 + $0x298] sm:$0xff]
    %v5893 = vld [vmem:[#allocation11 + $0x2a0] sm:$0xff]
    %v5894 = vld [vmem:[#allocation11 + $0x2a8] sm:$0xff]
    %v5895 = vld [vmem:[#allocation11 + $0x2b0] sm:$0xff]
    %v5896 = vld [vmem:[#allocation11 + $0x2b8] sm:$0xff]
    %v5897 = vld [vmem:[#allocation11 + $0x2c0] sm:$0xff]
    %v5898 = vld [vmem:[#allocation11 + $0x2c8] sm:$0xff]
    %v5899 = vld [vmem:[#allocation11 + $0x2d0] sm:$0xff]
    %v5900 = vld [vmem:[#allocation11 + $0x2d8] sm:$0xff]
    %v5901 = vld [vmem:[#allocation11 + $0x2e0] sm:$0xff]
    %v5902 = vld [vmem:[#allocation11 + $0x2e8] sm:$0xff]
    %v5903 = vld [vmem:[#allocation11 + $0x2f0] sm:$0xff]
    %v5904 = vld [vmem:[#allocation11 + $0x2f8] sm:$0xff]
    %v5905 = vld [vmem:[#allocation11 + $0x300] sm:$0xff]
    %v5906 = vld [vmem:[#allocation11 + $0x308] sm:$0xff]
    %v5907 = vld [vmem:[#allocation11 + $0x310] sm:$0xff]
    %v5908 = vld [vmem:[#allocation11 + $0x318] sm:$0xff]
    %v5909 = vld [vmem:[#allocation11 + $0x320] sm:$0xff]
    %v5910 = vld [vmem:[#allocation11 + $0x328] sm:$0xff]
    %v5911 = vld [vmem:[#allocation11 + $0x330] sm:$0xff]
    %v5912 = vld [vmem:[#allocation11 + $0x338] sm:$0xff]
    %v5913 = vld [vmem:[#allocation11 + $0x340] sm:$0xff]
    %v5914 = vld [vmem:[#allocation11 + $0x348] sm:$0xff]
    %v5915 = vld [vmem:[#allocation11 + $0x350] sm:$0xff]
    %v5916 = vld [vmem:[#allocation11 + $0x358] sm:$0xff]
    %v5917 = vld [vmem:[#allocation11 + $0x360] sm:$0xff]
    %v5918 = vld [vmem:[#allocation11 + $0x368] sm:$0xff]
    %v5919 = vld [vmem:[#allocation11 + $0x370] sm:$0xff]
    %v5920 = vld [vmem:[#allocation11 + $0x378] sm:$0xff]
    %v5921 = vld [vmem:[#allocation11 + $0x380] sm:$0xff]
    %v5922 = vld [vmem:[#allocation11 + $0x388] sm:$0xff]
    %v5923 = vld [vmem:[#allocation11 + $0x390] sm:$0xff]
    %v5924 = vld [vmem:[#allocation11 + $0x398] sm:$0xff]
    %v5925 = vld [vmem:[#allocation11 + $0x3a0] sm:$0xff]
    %v5926 = vld [vmem:[#allocation11 + $0x3a8] sm:$0xff]
    %v5927 = vld [vmem:[#allocation11 + $0x3b0] sm:$0xff]
    %v5928 = vld [vmem:[#allocation11 + $0x3b8] sm:$0xff]
    %v5929 = vld [vmem:[#allocation11 + $0x3c0] sm:$0xff]
    %v5930 = vld [vmem:[#allocation11 + $0x3c8] sm:$0xff]
    %v5931 = vld [vmem:[#allocation11 + $0x3d0] sm:$0xff]
    %v5932 = vld [vmem:[#allocation11 + $0x3d8] sm:$0xff]
    %v5933 = vld [vmem:[#allocation11 + $0x3e0] sm:$0xff]
    %v5934 = vld [vmem:[#allocation11 + $0x3e8] sm:$0xff]
    %v5935 = vld [vmem:[#allocation11 + $0x3f0] sm:$0xff]
    %v5936 = vld [vmem:[#allocation11 + $0x3f8] sm:$0xff]
    %v5937 = vld [vmem:[%s12] sm:$0x3]
    %v5939 = vperm.slane %v5937, 0
    %v5940 = vperm.slane %v5937, 1
    %v6071 = vunpack.c.l.b16 %v5809
    %v6072 = vunpack.c.h.b16 %v5809
    %v6073 = vunpack.c.l.b16 %v5810
    %v6074 = vunpack.c.h.b16 %v5810
    %v6075 = vunpack.c.l.b16 %v5811
    %v6076 = vunpack.c.h.b16 %v5811
    %v6077 = vunpack.c.l.b16 %v5812
    %v6078 = vunpack.c.h.b16 %v5812
    %v6079 = vunpack.c.l.b16 %v5813
    %v6080 = vunpack.c.h.b16 %v5813
    %v6081 = vunpack.c.l.b16 %v5814
    %v6082 = vunpack.c.h.b16 %v5814
    %v6083 = vunpack.c.l.b16 %v5815
    %v6084 = vunpack.c.h.b16 %v5815
    %v6085 = vunpack.c.l.b16 %v5816
    %v6086 = vunpack.c.h.b16 %v5816
    %v6087 = vunpack.c.l.b16 %v5817
    %v6088 = vunpack.c.h.b16 %v5817
    %v6089 = vunpack.c.l.b16 %v5818
    %v6090 = vunpack.c.h.b16 %v5818
    %v6091 = vunpack.c.l.b16 %v5819
    %v6092 = vunpack.c.h.b16 %v5819
    %v6093 = vunpack.c.l.b16 %v5820
    %v6094 = vunpack.c.h.b16 %v5820
    %v6095 = vunpack.c.l.b16 %v5821
    %v6096 = vunpack.c.h.b16 %v5821
    %v6097 = vunpack.c.l.b16 %v5822
    %v6098 = vunpack.c.h.b16 %v5822
    %v6099 = vunpack.c.l.b16 %v5823
    %v6100 = vunpack.c.h.b16 %v5823
    %v6101 = vunpack.c.l.b16 %v5824
    %v6102 = vunpack.c.h.b16 %v5824
    %v6103 = vunpack.c.l.b16 %v5825
    %v6104 = vunpack.c.h.b16 %v5825
    %v6105 = vunpack.c.l.b16 %v5826
    %v6106 = vunpack.c.h.b16 %v5826
    %v6107 = vunpack.c.l.b16 %v5827
    %v6108 = vunpack.c.h.b16 %v5827
    %v6109 = vunpack.c.l.b16 %v5828
    %v6110 = vunpack.c.h.b16 %v5828
    %v6111 = vunpack.c.l.b16 %v5829
    %v6112 = vunpack.c.h.b16 %v5829
    %v6113 = vunpack.c.l.b16 %v5830
    %v6114 = vunpack.c.h.b16 %v5830
    %v6115 = vunpack.c.l.b16 %v5831
    %v6116 = vunpack.c.h.b16 %v5831
    %v6117 = vunpack.c.l.b16 %v5832
    %v6118 = vunpack.c.h.b16 %v5832
    %v6119 = vunpack.c.l.b16 %v5833
    %v6120 = vunpack.c.h.b16 %v5833
    %v6121 = vunpack.c.l.b16 %v5834
    %v6122 = vunpack.c.h.b16 %v5834
    %v6123 = vunpack.c.l.b16 %v5835
    %v6124 = vunpack.c.h.b16 %v5835
    %v6125 = vunpack.c.l.b16 %v5836
    %v6126 = vunpack.c.h.b16 %v5836
    %v6127 = vunpack.c.l.b16 %v5837
    %v6128 = vunpack.c.h.b16 %v5837
    %v6129 = vunpack.c.l.b16 %v5838
    %v6130 = vunpack.c.h.b16 %v5838
    %v6131 = vunpack.c.l.b16 %v5839
    %v6132 = vunpack.c.h.b16 %v5839
    %v6133 = vunpack.c.l.b16 %v5840
    %v6134 = vunpack.c.h.b16 %v5840
    %v6135 = vunpack.c.l.b16 %v5841
    %v6136 = vunpack.c.h.b16 %v5841
    %v6137 = vunpack.c.l.b16 %v5842
    %v6138 = vunpack.c.h.b16 %v5842
    %v6139 = vunpack.c.l.b16 %v5843
    %v6140 = vunpack.c.h.b16 %v5843
    %v6141 = vunpack.c.l.b16 %v5844
    %v6142 = vunpack.c.h.b16 %v5844
    %v6143 = vunpack.c.l.b16 %v5845
    %v6144 = vunpack.c.h.b16 %v5845
    %v6145 = vunpack.c.l.b16 %v5846
    %v6146 = vunpack.c.h.b16 %v5846
    %v6147 = vunpack.c.l.b16 %v5847
    %v6148 = vunpack.c.h.b16 %v5847
    %v6149 = vunpack.c.l.b16 %v5848
    %v6150 = vunpack.c.h.b16 %v5848
    %v6151 = vunpack.c.l.b16 %v5849
    %v6152 = vunpack.c.h.b16 %v5849
    %v6153 = vunpack.c.l.b16 %v5850
    %v6154 = vunpack.c.h.b16 %v5850
    %v6155 = vunpack.c.l.b16 %v5851
    %v6156 = vunpack.c.h.b16 %v5851
    %v6157 = vunpack.c.l.b16 %v5852
    %v6158 = vunpack.c.h.b16 %v5852
    %v6159 = vunpack.c.l.b16 %v5853
    %v6160 = vunpack.c.h.b16 %v5853
    %v6161 = vunpack.c.l.b16 %v5854
    %v6162 = vunpack.c.h.b16 %v5854
    %v6163 = vunpack.c.l.b16 %v5855
    %v6164 = vunpack.c.h.b16 %v5855
    %v6165 = vunpack.c.l.b16 %v5856
    %v6166 = vunpack.c.h.b16 %v5856
    %v6167 = vunpack.c.l.b16 %v5857
    %v6168 = vunpack.c.h.b16 %v5857
    %v6169 = vunpack.c.l.b16 %v5858
    %v6170 = vunpack.c.h.b16 %v5858
    %v6171 = vunpack.c.l.b16 %v5859
    %v6172 = vunpack.c.h.b16 %v5859
    %v6173 = vunpack.c.l.b16 %v5860
    %v6174 = vunpack.c.h.b16 %v5860
    %v6175 = vunpack.c.l.b16 %v5861
    %v6176 = vunpack.c.h.b16 %v5861
    %v6177 = vunpack.c.l.b16 %v5862
    %v6178 = vunpack.c.h.b16 %v5862
    %v6179 = vunpack.c.l.b16 %v5863
    %v6180 = vunpack.c.h.b16 %v5863
    %v6181 = vunpack.c.l.b16 %v5864
    %v6182 = vunpack.c.h.b16 %v5864
    %v6183 = vunpack.c.l.b16 %v5865
    %v6184 = vunpack.c.h.b16 %v5865
    %v6185 = vunpack.c.l.b16 %v5866
    %v6186 = vunpack.c.h.b16 %v5866
    %v6187 = vunpack.c.l.b16 %v5867
    %v6188 = vunpack.c.h.b16 %v5867
    %v6189 = vunpack.c.l.b16 %v5868
    %v6190 = vunpack.c.h.b16 %v5868
    %v6191 = vunpack.c.l.b16 %v5869
    %v6192 = vunpack.c.h.b16 %v5869
    %v6193 = vunpack.c.l.b16 %v5870
    %v6194 = vunpack.c.h.b16 %v5870
    %v6195 = vunpack.c.l.b16 %v5871
    %v6196 = vunpack.c.h.b16 %v5871
    %v6197 = vunpack.c.l.b16 %v5872
    %v6198 = vunpack.c.h.b16 %v5872
    %v6199 = vunpack.c.l.b16 %v5873
    %v6200 = vunpack.c.h.b16 %v5873
    %v6201 = vunpack.c.l.b16 %v5874
    %v6202 = vunpack.c.h.b16 %v5874
    %v6203 = vunpack.c.l.b16 %v5875
    %v6204 = vunpack.c.h.b16 %v5875
    %v6205 = vunpack.c.l.b16 %v5876
    %v6206 = vunpack.c.h.b16 %v5876
    %v6207 = vunpack.c.l.b16 %v5877
    %v6208 = vunpack.c.h.b16 %v5877
    %v6209 = vunpack.c.l.b16 %v5878
    %v6210 = vunpack.c.h.b16 %v5878
    %v6211 = vunpack.c.l.b16 %v5879
    %v6212 = vunpack.c.h.b16 %v5879
    %v6213 = vunpack.c.l.b16 %v5880
    %v6214 = vunpack.c.h.b16 %v5880
    %v6215 = vunpack.c.l.b16 %v5881
    %v6216 = vunpack.c.h.b16 %v5881
    %v6217 = vunpack.c.l.b16 %v5882
    %v6218 = vunpack.c.h.b16 %v5882
    %v6219 = vunpack.c.l.b16 %v5883
    %v6220 = vunpack.c.h.b16 %v5883
    %v6221 = vunpack.c.l.b16 %v5884
    %v6222 = vunpack.c.h.b16 %v5884
    %v6223 = vunpack.c.l.b16 %v5885
    %v6224 = vunpack.c.h.b16 %v5885
    %v6225 = vunpack.c.l.b16 %v5886
    %v6226 = vunpack.c.h.b16 %v5886
    %v6227 = vunpack.c.l.b16 %v5887
    %v6228 = vunpack.c.h.b16 %v5887
    %v6229 = vunpack.c.l.b16 %v5888
    %v6230 = vunpack.c.h.b16 %v5888
    %v6231 = vunpack.c.l.b16 %v5889
    %v6232 = vunpack.c.h.b16 %v5889
    %v6233 = vunpack.c.l.b16 %v5890
    %v6234 = vunpack.c.h.b16 %v5890
    %v6235 = vunpack.c.l.b16 %v5891
    %v6236 = vunpack.c.h.b16 %v5891
    %v6237 = vunpack.c.l.b16 %v5892
    %v6238 = vunpack.c.h.b16 %v5892
    %v6239 = vunpack.c.l.b16 %v5893
    %v6240 = vunpack.c.h.b16 %v5893
    %v6241 = vunpack.c.l.b16 %v5894
    %v6242 = vunpack.c.h.b16 %v5894
    %v6243 = vunpack.c.l.b16 %v5895
    %v6244 = vunpack.c.h.b16 %v5895
    %v6245 = vunpack.c.l.b16 %v5896
    %v6246 = vunpack.c.h.b16 %v5896
    %v6247 = vunpack.c.l.b16 %v5897
    %v6248 = vunpack.c.h.b16 %v5897
    %v6249 = vunpack.c.l.b16 %v5898
    %v6250 = vunpack.c.h.b16 %v5898
    %v6251 = vunpack.c.l.b16 %v5899
    %v6252 = vunpack.c.h.b16 %v5899
    %v6253 = vunpack.c.l.b16 %v5900
    %v6254 = vunpack.c.h.b16 %v5900
    %v6255 = vunpack.c.l.b16 %v5901
    %v6256 = vunpack.c.h.b16 %v5901
    %v6257 = vunpack.c.l.b16 %v5902
    %v6258 = vunpack.c.h.b16 %v5902
    %v6259 = vunpack.c.l.b16 %v5903
    %v6260 = vunpack.c.h.b16 %v5903
    %v6261 = vunpack.c.l.b16 %v5904
    %v6262 = vunpack.c.h.b16 %v5904
    %v6263 = vunpack.c.l.b16 %v5905
    %v6264 = vunpack.c.h.b16 %v5905
    %v6265 = vunpack.c.l.b16 %v5906
    %v6266 = vunpack.c.h.b16 %v5906
    %v6267 = vunpack.c.l.b16 %v5907
    %v6268 = vunpack.c.h.b16 %v5907
    %v6269 = vunpack.c.l.b16 %v5908
    %v6270 = vunpack.c.h.b16 %v5908
    %v6271 = vunpack.c.l.b16 %v5909
    %v6272 = vunpack.c.h.b16 %v5909
    %v6273 = vunpack.c.l.b16 %v5910
    %v6274 = vunpack.c.h.b16 %v5910
    %v6275 = vunpack.c.l.b16 %v5911
    %v6276 = vunpack.c.h.b16 %v5911
    %v6277 = vunpack.c.l.b16 %v5912
    %v6278 = vunpack.c.h.b16 %v5912
    %v6279 = vunpack.c.l.b16 %v5913
    %v6280 = vunpack.c.h.b16 %v5913
    %v6281 = vunpack.c.l.b16 %v5914
    %v6282 = vunpack.c.h.b16 %v5914
    %v6283 = vunpack.c.l.b16 %v5915
    %v6284 = vunpack.c.h.b16 %v5915
    %v6285 = vunpack.c.l.b16 %v5916
    %v6286 = vunpack.c.h.b16 %v5916
    %v6287 = vunpack.c.l.b16 %v5917
    %v6288 = vunpack.c.h.b16 %v5917
    %v6289 = vunpack.c.l.b16 %v5918
    %v6290 = vunpack.c.h.b16 %v5918
    %v6291 = vunpack.c.l.b16 %v5919
    %v6292 = vunpack.c.h.b16 %v5919
    %v6293 = vunpack.c.l.b16 %v5920
    %v6294 = vunpack.c.h.b16 %v5920
    %v6295 = vunpack.c.l.b16 %v5921
    %v6296 = vunpack.c.h.b16 %v5921
    %v6297 = vunpack.c.l.b16 %v5922
    %v6298 = vunpack.c.h.b16 %v5922
    %v6299 = vunpack.c.l.b16 %v5923
    %v6300 = vunpack.c.h.b16 %v5923
    %v6301 = vunpack.c.l.b16 %v5924
    %v6302 = vunpack.c.h.b16 %v5924
    %v6303 = vunpack.c.l.b16 %v5925
    %v6304 = vunpack.c.h.b16 %v5925
    %v6305 = vunpack.c.l.b16 %v5926
    %v6306 = vunpack.c.h.b16 %v5926
    %v6307 = vunpack.c.l.b16 %v5927
    %v6308 = vunpack.c.h.b16 %v5927
    %v6309 = vunpack.c.l.b16 %v5928
    %v6310 = vunpack.c.h.b16 %v5928
    %v6311 = vunpack.c.l.b16 %v5929
    %v6312 = vunpack.c.h.b16 %v5929
    %v6313 = vunpack.c.l.b16 %v5930
    %v6314 = vunpack.c.h.b16 %v5930
    %v6315 = vunpack.c.l.b16 %v5931
    %v6316 = vunpack.c.h.b16 %v5931
    %v6317 = vunpack.c.l.b16 %v5932
    %v6318 = vunpack.c.h.b16 %v5932
    %v6319 = vunpack.c.l.b16 %v5933
    %v6320 = vunpack.c.h.b16 %v5933
    %v6321 = vunpack.c.l.b16 %v5934
    %v6322 = vunpack.c.h.b16 %v5934
    %v6323 = vunpack.c.l.b16 %v5935
    %v6324 = vunpack.c.h.b16 %v5935
    %v6325 = vunpack.c.l.b16 %v5936
    %v6326 = vunpack.c.h.b16 %v5936
    %v6327 = vpack.c.b16 %v6073, %v6071
    %v6328 = vpack.c.b16 %v6074, %v6072
    %v6329 = vpack.c.b16 %v6077, %v6075
    %v6330 = vpack.c.b16 %v6078, %v6076
    %v6331 = vpack.c.b16 %v6081, %v6079
    %v6332 = vpack.c.b16 %v6082, %v6080
    %v6333 = vpack.c.b16 %v6085, %v6083
    %v6334 = vpack.c.b16 %v6086, %v6084
    %v6335 = vpack.c.b16 %v6089, %v6087
    %v6336 = vpack.c.b16 %v6090, %v6088
    %v6337 = vpack.c.b16 %v6093, %v6091
    %v6338 = vpack.c.b16 %v6094, %v6092
    %v6339 = vpack.c.b16 %v6097, %v6095
    %v6340 = vpack.c.b16 %v6098, %v6096
    %v6341 = vpack.c.b16 %v6101, %v6099
    %v6342 = vpack.c.b16 %v6102, %v6100
    %v6343 = vpack.c.b16 %v6105, %v6103
    %v6344 = vpack.c.b16 %v6106, %v6104
    %v6345 = vpack.c.b16 %v6109, %v6107
    %v6346 = vpack.c.b16 %v6110, %v6108
    %v6347 = vpack.c.b16 %v6113, %v6111
    %v6348 = vpack.c.b16 %v6114, %v6112
    %v6349 = vpack.c.b16 %v6117, %v6115
    %v6350 = vpack.c.b16 %v6118, %v6116
    %v6351 = vpack.c.b16 %v6121, %v6119
    %v6352 = vpack.c.b16 %v6122, %v6120
    %v6353 = vpack.c.b16 %v6125, %v6123
    %v6354 = vpack.c.b16 %v6126, %v6124
    %v6355 = vpack.c.b16 %v6129, %v6127
    %v6356 = vpack.c.b16 %v6130, %v6128
    %v6357 = vpack.c.b16 %v6133, %v6131
    %v6358 = vpack.c.b16 %v6134, %v6132
    %v6359 = vpack.c.b16 %v6137, %v6135
    %v6360 = vpack.c.b16 %v6138, %v6136
    %v6361 = vpack.c.b16 %v6141, %v6139
    %v6362 = vpack.c.b16 %v6142, %v6140
    %v6363 = vpack.c.b16 %v6145, %v6143
    %v6364 = vpack.c.b16 %v6146, %v6144
    %v6365 = vpack.c.b16 %v6149, %v6147
    %v6366 = vpack.c.b16 %v6150, %v6148
    %v6367 = vpack.c.b16 %v6153, %v6151
    %v6368 = vpack.c.b16 %v6154, %v6152
    %v6369 = vpack.c.b16 %v6157, %v6155
    %v6370 = vpack.c.b16 %v6158, %v6156
    %v6371 = vpack.c.b16 %v6161, %v6159
    %v6372 = vpack.c.b16 %v6162, %v6160
    %v6373 = vpack.c.b16 %v6165, %v6163
    %v6374 = vpack.c.b16 %v6166, %v6164
    %v6375 = vpack.c.b16 %v6169, %v6167
    %v6376 = vpack.c.b16 %v6170, %v6168
    %v6377 = vpack.c.b16 %v6173, %v6171
    %v6378 = vpack.c.b16 %v6174, %v6172
    %v6379 = vpack.c.b16 %v6177, %v6175
    %v6380 = vpack.c.b16 %v6178, %v6176
    %v6381 = vpack.c.b16 %v6181, %v6179
    %v6382 = vpack.c.b16 %v6182, %v6180
    %v6383 = vpack.c.b16 %v6185, %v6183
    %v6384 = vpack.c.b16 %v6186, %v6184
    %v6385 = vpack.c.b16 %v6189, %v6187
    %v6386 = vpack.c.b16 %v6190, %v6188
    %v6387 = vpack.c.b16 %v6193, %v6191
    %v6388 = vpack.c.b16 %v6194, %v6192
    %v6389 = vpack.c.b16 %v6197, %v6195
    %v6390 = vpack.c.b16 %v6198, %v6196
    %v6391 = vpack.c.b16 %v6201, %v6199
    %v6392 = vpack.c.b16 %v6202, %v6200
    %v6393 = vpack.c.b16 %v6205, %v6203
    %v6394 = vpack.c.b16 %v6206, %v6204
    %v6395 = vpack.c.b16 %v6209, %v6207
    %v6396 = vpack.c.b16 %v6210, %v6208
    %v6397 = vpack.c.b16 %v6213, %v6211
    %v6398 = vpack.c.b16 %v6214, %v6212
    %v6399 = vpack.c.b16 %v6217, %v6215
    %v6400 = vpack.c.b16 %v6218, %v6216
    %v6401 = vpack.c.b16 %v6221, %v6219
    %v6402 = vpack.c.b16 %v6222, %v6220
    %v6403 = vpack.c.b16 %v6225, %v6223
    %v6404 = vpack.c.b16 %v6226, %v6224
    %v6405 = vpack.c.b16 %v6229, %v6227
    %v6406 = vpack.c.b16 %v6230, %v6228
    %v6407 = vpack.c.b16 %v6233, %v6231
    %v6408 = vpack.c.b16 %v6234, %v6232
    %v6409 = vpack.c.b16 %v6237, %v6235
    %v6410 = vpack.c.b16 %v6238, %v6236
    %v6411 = vpack.c.b16 %v6241, %v6239
    %v6412 = vpack.c.b16 %v6242, %v6240
    %v6413 = vpack.c.b16 %v6245, %v6243
    %v6414 = vpack.c.b16 %v6246, %v6244
    %v6415 = vpack.c.b16 %v6249, %v6247
    %v6416 = vpack.c.b16 %v6250, %v6248
    %v6417 = vpack.c.b16 %v6253, %v6251
    %v6418 = vpack.c.b16 %v6254, %v6252
    %v6419 = vpack.c.b16 %v6257, %v6255
    %v6420 = vpack.c.b16 %v6258, %v6256
    %v6421 = vpack.c.b16 %v6261, %v6259
    %v6422 = vpack.c.b16 %v6262, %v6260
    %v6423 = vpack.c.b16 %v6265, %v6263
    %v6424 = vpack.c.b16 %v6266, %v6264
    %v6425 = vpack.c.b16 %v6269, %v6267
    %v6426 = vpack.c.b16 %v6270, %v6268
    %v6427 = vpack.c.b16 %v6273, %v6271
    %v6428 = vpack.c.b16 %v6274, %v6272
    %v6429 = vpack.c.b16 %v6277, %v6275
    %v6430 = vpack.c.b16 %v6278, %v6276
    %v6431 = vpack.c.b16 %v6281, %v6279
    %v6432 = vpack.c.b16 %v6282, %v6280
    %v6433 = vpack.c.b16 %v6285, %v6283
    %v6434 = vpack.c.b16 %v6286, %v6284
    %v6435 = vpack.c.b16 %v6289, %v6287
    %v6436 = vpack.c.b16 %v6290, %v6288
    %v6437 = vpack.c.b16 %v6293, %v6291
    %v6438 = vpack.c.b16 %v6294, %v6292
    %v6439 = vpack.c.b16 %v6297, %v6295
    %v6440 = vpack.c.b16 %v6298, %v6296
    %v6441 = vpack.c.b16 %v6301, %v6299
    %v6442 = vpack.c.b16 %v6302, %v6300
    %v6443 = vpack.c.b16 %v6305, %v6303
    %v6444 = vpack.c.b16 %v6306, %v6304
    %v6445 = vpack.c.b16 %v6309, %v6307
    %v6446 = vpack.c.b16 %v6310, %v6308
    %v6447 = vpack.c.b16 %v6313, %v6311
    %v6448 = vpack.c.b16 %v6314, %v6312
    %v6449 = vpack.c.b16 %v6317, %v6315
    %v6450 = vpack.c.b16 %v6318, %v6316
    %v6451 = vpack.c.b16 %v6321, %v6319
    %v6452 = vpack.c.b16 %v6322, %v6320
    %v6453 = vpack.c.b16 %v6325, %v6323
    %v6454 = vpack.c.b16 %v6326, %v6324
    %6583 = vmatpush.bf16.msra.mxu0 %v6341
    %6584 = vmatpush.bf16.msra.mxu0 %v6339
    %6585 = vmatpush.bf16.msra.mxu0 %v6337
    %6586 = vmatpush.bf16.msra.mxu0 %v6335
    %6587 = vmatpush.bf16.msra.mxu0 %v6333
    %6588 = vmatpush.bf16.msra.mxu0 %v6331
    %6589 = vmatpush.bf16.msra.mxu0 %v6329
    %6590 = vmatpush.bf16.msra.mxu0 %v6327
    %6591 = vmatmul.bf16.gmra.mxu0 %v5801
    %v6592 = vpop.f32.mrf.mxu0
    %v6593 = vadd.f32 %v5939, %v6592
    %v6594 = vpop.f32.mrf.mxu0
    %v6595 = vadd.f32 %v5939, %v6594
    %6596 = vdwg.mxu0
    %6597 = vmatpush.bf16.msra.mxu0 %v6357
    %6598 = vmatpush.bf16.msra.mxu0 %v6355
    %6599 = vmatpush.bf16.msra.mxu0 %v6353
    %6600 = vmatpush.bf16.msra.mxu0 %v6351
    %6601 = vmatpush.bf16.msra.mxu0 %v6349
    %6602 = vmatpush.bf16.msra.mxu0 %v6347
    %6603 = vmatpush.bf16.msra.mxu0 %v6345
    %6604 = vmatpush.bf16.msra.mxu0 %v6343
    %6605 = vmatmul.bf16.gmra.mxu0 %v5802
    %v6606 = vpop.f32.mrf.mxu0
    %v6607 = vadd.f32 %v6593, %v6606
    %v6608 = vpop.f32.mrf.mxu0
    %v6609 = vadd.f32 %v6595, %v6608
    %6610 = vdwg.mxu0
    %6611 = vmatpush.bf16.msra.mxu0 %v6373
    %6612 = vmatpush.bf16.msra.mxu0 %v6371
    %6613 = vmatpush.bf16.msra.mxu0 %v6369
    %6614 = vmatpush.bf16.msra.mxu0 %v6367
    %6615 = vmatpush.bf16.msra.mxu0 %v6365
    %6616 = vmatpush.bf16.msra.mxu0 %v6363
    %6617 = vmatpush.bf16.msra.mxu0 %v6361
    %6618 = vmatpush.bf16.msra.mxu0 %v6359
    %6619 = vmatmul.bf16.gmra.mxu0 %v5803
    %v6620 = vpop.f32.mrf.mxu0
    %v6621 = vadd.f32 %v6607, %v6620
    %v6622 = vpop.f32.mrf.mxu0
    %v6623 = vadd.f32 %v6609, %v6622
    %6624 = vdwg.mxu0
    %6625 = vmatpush.bf16.msra.mxu0 %v6389
    %6626 = vmatpush.bf16.msra.mxu0 %v6387
    %6627 = vmatpush.bf16.msra.mxu0 %v6385
    %6628 = vmatpush.bf16.msra.mxu0 %v6383
    %6629 = vmatpush.bf16.msra.mxu0 %v6381
    %6630 = vmatpush.bf16.msra.mxu0 %v6379
    %6631 = vmatpush.bf16.msra.mxu0 %v6377
    %6632 = vmatpush.bf16.msra.mxu0 %v6375
    %6633 = vmatmul.bf16.gmra.mxu0 %v5804
    %v6634 = vpop.f32.mrf.mxu0
    %v6635 = vadd.f32 %v6621, %v6634
    %v6636 = vpop.f32.mrf.mxu0
    %v6637 = vadd.f32 %v6623, %v6636
    %6638 = vdwg.mxu0
    %6639 = vmatpush.bf16.msra.mxu0 %v6405
    %6640 = vmatpush.bf16.msra.mxu0 %v6403
    %6641 = vmatpush.bf16.msra.mxu0 %v6401
    %6642 = vmatpush.bf16.msra.mxu0 %v6399
    %6643 = vmatpush.bf16.msra.mxu0 %v6397
    %6644 = vmatpush.bf16.msra.mxu0 %v6395
    %6645 = vmatpush.bf16.msra.mxu0 %v6393
    %6646 = vmatpush.bf16.msra.mxu0 %v6391
    %6647 = vmatmul.bf16.gmra.mxu0 %v5805
    %v6648 = vpop.f32.mrf.mxu0
    %v6649 = vadd.f32 %v6635, %v6648
    %v6650 = vpop.f32.mrf.mxu0
    %v6651 = vadd.f32 %v6637, %v6650
    %6652 = vdwg.mxu0
    %6653 = vmatpush.bf16.msra.mxu0 %v6421
    %6654 = vmatpush.bf16.msra.mxu0 %v6419
    %6655 = vmatpush.bf16.msra.mxu0 %v6417
    %6656 = vmatpush.bf16.msra.mxu0 %v6415
    %6657 = vmatpush.bf16.msra.mxu0 %v6413
    %6658 = vmatpush.bf16.msra.mxu0 %v6411
    %6659 = vmatpush.bf16.msra.mxu0 %v6409
    %6660 = vmatpush.bf16.msra.mxu0 %v6407
    %6661 = vmatmul.bf16.gmra.mxu0 %v5806
    %v6662 = vpop.f32.mrf.mxu0
    %v6663 = vadd.f32 %v6649, %v6662
    %v6664 = vpop.f32.mrf.mxu0
    %v6665 = vadd.f32 %v6651, %v6664
    %6666 = vdwg.mxu0
    %6667 = vmatpush.bf16.msra.mxu0 %v6437
    %6668 = vmatpush.bf16.msra.mxu0 %v6435
    %6669 = vmatpush.bf16.msra.mxu0 %v6433
    %6670 = vmatpush.bf16.msra.mxu0 %v6431
    %6671 = vmatpush.bf16.msra.mxu0 %v6429
    %6672 = vmatpush.bf16.msra.mxu0 %v6427
    %6673 = vmatpush.bf16.msra.mxu0 %v6425
    %6674 = vmatpush.bf16.msra.mxu0 %v6423
    %6675 = vmatmul.bf16.gmra.mxu0 %v5807
    %v6676 = vpop.f32.mrf.mxu0
    %v6677 = vadd.f32 %v6663, %v6676
    %v6678 = vpop.f32.mrf.mxu0
    %v6679 = vadd.f32 %v6665, %v6678
    %6680 = vdwg.mxu0
    %6681 = vmatpush.bf16.msra.mxu0 %v6453
    %6682 = vmatpush.bf16.msra.mxu0 %v6451
    %6683 = vmatpush.bf16.msra.mxu0 %v6449
    %6684 = vmatpush.bf16.msra.mxu0 %v6447
    %6685 = vmatpush.bf16.msra.mxu0 %v6445
    %6686 = vmatpush.bf16.msra.mxu0 %v6443
    %6687 = vmatpush.bf16.msra.mxu0 %v6441
    %6688 = vmatpush.bf16.msra.mxu0 %v6439
    %6689 = vmatmul.bf16.gmra.mxu0 %v5808
    %v6690 = vpop.f32.mrf.mxu0
    %v6691 = vadd.f32 %v6677, %v6690
    %v6692 = vpop.f32.mrf.mxu0
    %v6693 = vadd.f32 %v6679, %v6692
    %6694 = vdwg.mxu0
    %6695 = vmatpush.bf16.msra.mxu0 %v6342
    %6696 = vmatpush.bf16.msra.mxu0 %v6340
    %6697 = vmatpush.bf16.msra.mxu0 %v6338
    %6698 = vmatpush.bf16.msra.mxu0 %v6336
    %6699 = vmatpush.bf16.msra.mxu0 %v6334
    %6700 = vmatpush.bf16.msra.mxu0 %v6332
    %6701 = vmatpush.bf16.msra.mxu0 %v6330
    %6702 = vmatpush.bf16.msra.mxu0 %v6328
    %6703 = vmatmul.bf16.gmra.mxu0 %v5801
    %v6704 = vpop.f32.mrf.mxu0
    %v6705 = vadd.f32 %v5940, %v6704
    %v6706 = vpop.f32.mrf.mxu0
    %v6707 = vadd.f32 %v5940, %v6706
    %6708 = vdwg.mxu0
    %6709 = vmatpush.bf16.msra.mxu0 %v6358
    %6710 = vmatpush.bf16.msra.mxu0 %v6356
    %6711 = vmatpush.bf16.msra.mxu0 %v6354
    %6712 = vmatpush.bf16.msra.mxu0 %v6352
    %6713 = vmatpush.bf16.msra.mxu0 %v6350
    %6714 = vmatpush.bf16.msra.mxu0 %v6348
    %6715 = vmatpush.bf16.msra.mxu0 %v6346
    %6716 = vmatpush.bf16.msra.mxu0 %v6344
    %6717 = vmatmul.bf16.gmra.mxu0 %v5802
    %v6718 = vpop.f32.mrf.mxu0
    %v6719 = vadd.f32 %v6705, %v6718
    %v6720 = vpop.f32.mrf.mxu0
    %v6721 = vadd.f32 %v6707, %v6720
    %6722 = vdwg.mxu0
    %6723 = vmatpush.bf16.msra.mxu0 %v6374
    %6724 = vmatpush.bf16.msra.mxu0 %v6372
    %6725 = vmatpush.bf16.msra.mxu0 %v6370
    %6726 = vmatpush.bf16.msra.mxu0 %v6368
    %6727 = vmatpush.bf16.msra.mxu0 %v6366
    %6728 = vmatpush.bf16.msra.mxu0 %v6364
    %6729 = vmatpush.bf16.msra.mxu0 %v6362
    %6730 = vmatpush.bf16.msra.mxu0 %v6360
    %6731 = vmatmul.bf16.gmra.mxu0 %v5803
    %v6732 = vpop.f32.mrf.mxu0
    %v6733 = vadd.f32 %v6719, %v6732
    %v6734 = vpop.f32.mrf.mxu0
    %v6735 = vadd.f32 %v6721, %v6734
    %6736 = vdwg.mxu0
    %6737 = vmatpush.bf16.msra.mxu0 %v6390
    %6738 = vmatpush.bf16.msra.mxu0 %v6388
    %6739 = vmatpush.bf16.msra.mxu0 %v6386
    %6740 = vmatpush.bf16.msra.mxu0 %v6384
    %6741 = vmatpush.bf16.msra.mxu0 %v6382
    %6742 = vmatpush.bf16.msra.mxu0 %v6380
    %6743 = vmatpush.bf16.msra.mxu0 %v6378
    %6744 = vmatpush.bf16.msra.mxu0 %v6376
    %6745 = vmatmul.bf16.gmra.mxu0 %v5804
    %v6746 = vpop.f32.mrf.mxu0
    %v6747 = vadd.f32 %v6733, %v6746
    %v6748 = vpop.f32.mrf.mxu0
    %v6749 = vadd.f32 %v6735, %v6748
    %6750 = vdwg.mxu0
    %6751 = vmatpush.bf16.msra.mxu0 %v6406
    %6752 = vmatpush.bf16.msra.mxu0 %v6404
    %6753 = vmatpush.bf16.msra.mxu0 %v6402
    %6754 = vmatpush.bf16.msra.mxu0 %v6400
    %6755 = vmatpush.bf16.msra.mxu0 %v6398
    %6756 = vmatpush.bf16.msra.mxu0 %v6396
    %6757 = vmatpush.bf16.msra.mxu0 %v6394
    %6758 = vmatpush.bf16.msra.mxu0 %v6392
    %6759 = vmatmul.bf16.gmra.mxu0 %v5805
    %v6760 = vpop.f32.mrf.mxu0
    %v6761 = vadd.f32 %v6747, %v6760
    %v6762 = vpop.f32.mrf.mxu0
    %v6763 = vadd.f32 %v6749, %v6762
    %6764 = vdwg.mxu0
    %6765 = vmatpush.bf16.msra.mxu0 %v6422
    %6766 = vmatpush.bf16.msra.mxu0 %v6420
    %6767 = vmatpush.bf16.msra.mxu0 %v6418
    %6768 = vmatpush.bf16.msra.mxu0 %v6416
    %6769 = vmatpush.bf16.msra.mxu0 %v6414
    %6770 = vmatpush.bf16.msra.mxu0 %v6412
    %6771 = vmatpush.bf16.msra.mxu0 %v6410
    %6772 = vmatpush.bf16.msra.mxu0 %v6408
    %6773 = vmatmul.bf16.gmra.mxu0 %v5806
    %v6774 = vpop.f32.mrf.mxu0
    %v6775 = vadd.f32 %v6761, %v6774
    %v6776 = vpop.f32.mrf.mxu0
    %v6777 = vadd.f32 %v6763, %v6776
    %6778 = vdwg.mxu0
    %6779 = vmatpush.bf16.msra.mxu0 %v6438
    %6780 = vmatpush.bf16.msra.mxu0 %v6436
    %6781 = vmatpush.bf16.msra.mxu0 %v6434
    %6782 = vmatpush.bf16.msra.mxu0 %v6432
    %6783 = vmatpush.bf16.msra.mxu0 %v6430
    %6784 = vmatpush.bf16.msra.mxu0 %v6428
    %6785 = vmatpush.bf16.msra.mxu0 %v6426
    %6786 = vmatpush.bf16.msra.mxu0 %v6424
    %6787 = vmatmul.bf16.gmra.mxu0 %v5807
    %v6788 = vpop.f32.mrf.mxu0
    %v6789 = vadd.f32 %v6775, %v6788
    %v6790 = vpop.f32.mrf.mxu0
    %v6791 = vadd.f32 %v6777, %v6790
    %6792 = vdwg.mxu0
    %6793 = vmatpush.bf16.msra.mxu0 %v6454
    %6794 = vmatpush.bf16.msra.mxu0 %v6452
    %6795 = vmatpush.bf16.msra.mxu0 %v6450
    %6796 = vmatpush.bf16.msra.mxu0 %v6448
    %6797 = vmatpush.bf16.msra.mxu0 %v6446
    %6798 = vmatpush.bf16.msra.mxu0 %v6444
    %6799 = vmatpush.bf16.msra.mxu0 %v6442
    %6800 = vmatpush.bf16.msra.mxu0 %v6440
    %6801 = vmatmul.bf16.gmra.mxu0 %v5808
    %v6802 = vpop.f32.mrf.mxu0
    %v6803 = vadd.f32 %v6789, %v6802
    %v6804 = vpop.f32.mrf.mxu0
    %v6805 = vadd.f32 %v6791, %v6804
    %6806 = vdwg.mxu0
    %v6807 = vmax.f32 %v6691, 0.0
    %v6808 = vmax.f32 %v6803, 0.0
    %v6809 = vmax.f32 %v6693, 0.0
    %v6810 = vmax.f32 %v6805, 0.0
    %6811 = vst [vmem:[#allocation13] sm:$0xff] %v6807
    %6812 = vst [vmem:[#allocation13 + $0x8] sm:$0xff] %v6808
    %6813 = vst [vmem:[#allocation13 + $0x10] sm:$0xff] %v6809
    %6814 = vst [vmem:[#allocation13 + $0x18] sm:$0xff] %v6810
    // Predicated region
    $region78: #{_forward_impl.1} parent=1 // pred_check
      _
    $region79: #{_forward_impl.1} parent=1 // pred_check_branch
      %6816 = sbr.rel (0) target = $region81
    $region80: #{_forward_impl.1} parent=1 // pred_region
      %6818 = vsyncadd [#allocation4], 0
      %s6819 = sshll.u32 [#allocation13], 4
      %s6820 = int_to_ptr.vmem [resolvable:$true] %s6819
      %s6821 = sshll.u32 %s13, 4
      %s6822 = int_to_ptr.hbm [resolvable:$true] %s6821
      %6827 = dma.vmem_to_hbm [thread:$0]  %s6820, 512, %s6822, [#allocation4], 256, 256, 16
    $region81: #{_forward_impl.1} parent=1 // pred_fallthru
      _
    // Predicated region
    $region82: #{_forward_impl.1} parent=1 // pred_check
      _
    $region83: #{_forward_impl.1} parent=1 // pred_check_branch
      %6829 = sbr.rel (0) target = $region85
    $region84: #{_forward_impl.1} parent=1 // pred_region
      %6831 = vsyncadd [#allocation15], 0
      %s6832 = sshll.u32 [#allocation14], 4
      %s6833 = int_to_ptr.vmem [resolvable:$true] %s6832
      %s6834 = sshll.u32 %s14, 4
      %s6835 = int_to_ptr.hbm [resolvable:$true] %s6834
      %6840 = dma.vmem_to_hbm [thread:$0]  %s6833, 256, %s6835, [#allocation15], 128, 128, 8
    $region85: #{_forward_impl.1} parent=1 // pred_fallthru
      _
    // Predicated region
    $region86: #{_forward_impl.1} parent=1 // pred_check
      _
    $region87: #{_forward_impl.1} parent=1 // pred_check_branch
      %6842 = sbr.rel (0) target = $region89
    $region88: #{_forward_impl.1} parent=1 // pred_region
      %6844 = dma.done [#allocation4], 512
    $region89: #{_forward_impl.1} parent=1 // pred_fallthru
      _
    // Predicated region
    $region90: #{_forward_impl.1} parent=1 // pred_check
      _
    $region91: #{_forward_impl.1} parent=1 // pred_check_branch
      %6846 = sbr.rel (0) target = $region93
    $region92: #{_forward_impl.1} parent=1 // pred_region
      %6848 = dma.done [#allocation15], 256
    $region93: #{_forward_impl.1} parent=1 // pred_fallthru
      _
    %6849 = vsyncpa [#allocation3], 1
    %6850 = vsyncpa [#allocation6], 1
    %6851 = vsyncpa [#allocation9], 1
    %6852 = vsyncpa [#allocation12], 1
    %6853 = vsyncpa [#allocation4], 1
    %6854 = vsyncpa [#allocation15], 1

</llo_original>
